<compile_context>
chip_gen: v7x
topology: tpu7x:2x2x1
jax: 0.10.0
libtpu: 0.0.40
codegen_flags: <defaults>
</compile_context>

<pallas_src>
import functools
import math

import jax
import jax.numpy as jnp
from jax.experimental import pallas as pl
from jax.experimental.pallas import tpu as pltpu


# --------------------------------------------------------------------------
# Helpers
# --------------------------------------------------------------------------
def _round_up(x, m):
    return ((x + m - 1) // m) * m


def _vmem_limit(block_bytes):
    # 2x for double buffering + 4 MiB headroom for compiler scratch/semaphores,
    # clamped to [8 MiB, 48 MiB] so the limit stays below v7x's 64 MiB physical
    # VMEM while remaining harmless on v5e/v6e (128 MiB).
    need = 2 * int(block_bytes) + (4 << 20)
    return int(min(48 << 20, max(8 << 20, need)))


def _pick_tile(M, tm_cap=256, min_steps=4):
    """Row tile with >= min_steps grid steps (pipelining + megacore sharding on
    v7x) and minimal padded-row waste (TM multiple of 8, Mp = round_up(M, TM))."""
    steps = max(min_steps, -(-M // tm_cap))
    TM = _round_up(-(-M // steps), 8)
    TM = min(TM, _round_up(M, 8))
    Mp = _round_up(M, TM)
    return TM, Mp


# --------------------------------------------------------------------------
# Kernel: (optional) LayerNorm -> matmul -> (+bias)
#   used for: patch embedding (no LN), fused QKV (LN1), final LN + classifier
# --------------------------------------------------------------------------
def _ln_linear_kernel(x_ref, g_ref, b_ref, w_ref, bias_ref, o_ref, *, eps, apply_ln):
    x = x_ref[...].astype(jnp.float32)
    if apply_ln:
        mu = jnp.mean(x, axis=-1, keepdims=True)
        var = jnp.mean((x - mu) ** 2, axis=-1, keepdims=True)
        x = (x - mu) * jax.lax.rsqrt(var + eps)
        x = x * g_ref[...] + b_ref[...]
    acc = jnp.dot(x.astype(jnp.bfloat16), w_ref[...],
                  preferred_element_type=jnp.float32)
    acc = acc + bias_ref[...]
    o_ref[...] = acc.astype(o_ref.dtype)


def ln_linear(x, gamma, beta, w, bias, *, eps=1e-12, apply_ln=True,
              out_dtype=jnp.float32, tm=256):
    """x: (M, K) f32, w: (K, N) bf16, bias: (N,) f32 -> (M, N) out_dtype."""
    M, K = x.shape
    N = w.shape[1]
    TM, Mp = _pick_tile(M, tm)
    if Mp != M:
        x = jnp.pad(x, ((0, Mp - M), (0, 0)))

    out_bytes = jnp.dtype(out_dtype).itemsize
    block_bytes = 4 * TM * K + 2 * K * N + out_bytes * TM * N + 4 * (2 * K + N)
    cost = pl.CostEstimate(
        flops=int(2 * Mp * K * N),
        transcendentals=0,
        bytes_accessed=int(4 * Mp * K + out_bytes * Mp * N + 2 * K * N),
    )
    out = pl.pallas_call(
        functools.partial(_ln_linear_kernel, eps=eps, apply_ln=apply_ln),
        out_shape=jax.ShapeDtypeStruct((Mp, N), out_dtype),
        grid=(Mp // TM,),
        in_specs=[
            pl.BlockSpec((TM, K), lambda i: (i, 0)),
            pl.BlockSpec((1, K), lambda i: (0, 0)),
            pl.BlockSpec((1, K), lambda i: (0, 0)),
            pl.BlockSpec((K, N), lambda i: (0, 0)),
            pl.BlockSpec((1, N), lambda i: (0, 0)),
        ],
        out_specs=pl.BlockSpec((TM, N), lambda i: (i, 0)),
        compiler_params=pltpu.CompilerParams(
            dimension_semantics=("parallel",),
            vmem_limit_bytes=_vmem_limit(block_bytes),
        ),
        cost_estimate=cost,
    )(x, gamma.reshape(1, K), beta.reshape(1, K), w, bias.reshape(1, N))
    return out[:M] if Mp != M else out


# --------------------------------------------------------------------------
# Kernel: matmul -> (+bias) -> (+residual)    (attention output projection)
#   residual input is aliased to the output (in-place residual stream update).
# --------------------------------------------------------------------------
def _linear_residual_kernel(x_ref, w_ref, bias_ref, res_ref, o_ref):
    acc = jnp.dot(x_ref[...].astype(jnp.bfloat16), w_ref[...],
                  preferred_element_type=jnp.float32)
    acc = acc + bias_ref[...] + res_ref[...].astype(jnp.float32)
    o_ref[...] = acc.astype(o_ref.dtype)


def linear_residual(x, w, bias, residual, *, tm=256):
    """out = residual + x @ w + bias.  x: (M, K) bf16/f32, residual: (M, N) f32."""
    M, K = x.shape
    N = w.shape[1]
    TM, Mp = _pick_tile(M, tm)
    if Mp != M:
        pad = ((0, Mp - M), (0, 0))
        x = jnp.pad(x, pad)
        residual = jnp.pad(residual, pad)

    x_bytes = x.dtype.itemsize
    block_bytes = x_bytes * TM * K + 2 * K * N + 4 * TM * N * 2 + 4 * N
    cost = pl.CostEstimate(
        flops=int(2 * Mp * K * N),
        transcendentals=0,
        bytes_accessed=int(x_bytes * Mp * K + 2 * K * N + 4 * Mp * N * 2),
    )
    out = pl.pallas_call(
        _linear_residual_kernel,
        out_shape=jax.ShapeDtypeStruct((Mp, N), jnp.float32),
        grid=(Mp // TM,),
        in_specs=[
            pl.BlockSpec((TM, K), lambda i: (i, 0)),
            pl.BlockSpec((K, N), lambda i: (0, 0)),
            pl.BlockSpec((1, N), lambda i: (0, 0)),
            pl.BlockSpec((TM, N), lambda i: (i, 0)),
        ],
        out_specs=pl.BlockSpec((TM, N), lambda i: (i, 0)),
        input_output_aliases={3: 0},     # residual buffer is reused for the output
        compiler_params=pltpu.CompilerParams(
            dimension_semantics=("parallel",),
            vmem_limit_bytes=_vmem_limit(block_bytes),
        ),
        cost_estimate=cost,
    )(x, w, bias.reshape(1, N), residual)
    return out[:M] if Mp != M else out


# --------------------------------------------------------------------------
# Kernel: fused LN2 -> fc1 -> GELU -> fc2 -> (+residual)
#   the (TM, I) intermediate activation stays entirely in VMEM/vregs.
# --------------------------------------------------------------------------
def _ln_mlp_kernel(x_ref, g_ref, b_ref, w1_ref, b1_ref, w2_ref, b2_ref, o_ref,
                   *, eps):
    x = x_ref[...].astype(jnp.float32)            # also serves as the residual
    mu = jnp.mean(x, axis=-1, keepdims=True)
    var = jnp.mean((x - mu) ** 2, axis=-1, keepdims=True)
    xn = (x - mu) * jax.lax.rsqrt(var + eps)
    xn = xn * g_ref[...] + b_ref[...]
    h1 = jnp.dot(xn.astype(jnp.bfloat16), w1_ref[...],
                 preferred_element_type=jnp.float32) + b1_ref[...]
    # tanh-approx GELU: transcendental routes to the EUP slot instead of a long
    # f32 erf polynomial on the VALU (HF uses exact erf; deviation ~1e-3).
    h1 = jax.nn.gelu(h1, approximate=True)
    h2 = jnp.dot(h1.astype(jnp.bfloat16), w2_ref[...],
                 preferred_element_type=jnp.float32) + b2_ref[...]
    o_ref[...] = (x + h2).astype(o_ref.dtype)


def ln_mlp(x, gamma, beta, w1, b1, w2, b2, *, eps=1e-12, tm=256):
    """x: (M, D). Returns x + fc2(gelu(fc1(LN(x))))."""
    M, D = x.shape
    I = w1.shape[1]
    TM, Mp = _pick_tile(M, tm)
    if Mp != M:
        x = jnp.pad(x, ((0, Mp - M), (0, 0)))

    block_bytes = (4 * TM * D * 2 + 2 * D * I * 2 + 4 * TM * I
                   + 4 * (2 * D + I + D))
    cost = pl.CostEstimate(
        flops=int(4 * Mp * D * I),
        transcendentals=int(Mp * I),
        bytes_accessed=int(4 * Mp * D * 2 + 2 * D * I * 2),
    )
    out = pl.pallas_call(
        functools.partial(_ln_mlp_kernel, eps=eps),
        out_shape=jax.ShapeDtypeStruct((Mp, D), jnp.float32),
        grid=(Mp // TM,),
        in_specs=[
            pl.BlockSpec((TM, D), lambda i: (i, 0)),
            pl.BlockSpec((1, D), lambda i: (0, 0)),
            pl.BlockSpec((1, D), lambda i: (0, 0)),
            pl.BlockSpec((D, I), lambda i: (0, 0)),
            pl.BlockSpec((1, I), lambda i: (0, 0)),
            pl.BlockSpec((I, D), lambda i: (0, 0)),
            pl.BlockSpec((1, D), lambda i: (0, 0)),
        ],
        out_specs=pl.BlockSpec((TM, D), lambda i: (i, 0)),
        compiler_params=pltpu.CompilerParams(
            dimension_semantics=("parallel",),
            vmem_limit_bytes=_vmem_limit(block_bytes),
        ),
        cost_estimate=cost,
    )(x, gamma.reshape(1, D), beta.reshape(1, D),
      w1, b1.reshape(1, I), w2, b2.reshape(1, D))
    return out[:M] if Mp != M else out


# --------------------------------------------------------------------------
# Kernel: attention, one grid step per (batch, head).
#   QKV columns are packed per head as [q_h | k_h | v_h] blocks of width dhp
#   (head dim zero-padded to a multiple of 128), so every slice, the QK^T
#   contraction dim and the context store are lane-dense. The zero-padded
#   lanes contribute nothing (zero weights/bias, zero o_w rows).
# --------------------------------------------------------------------------
def _attention_kernel(qkv_ref, o_ref, *, dhp, scale):
    q = qkv_ref[0, :, 0:dhp].astype(jnp.bfloat16)
    k = qkv_ref[0, :, dhp:2 * dhp].astype(jnp.bfloat16)
    v = qkv_ref[0, :, 2 * dhp:3 * dhp].astype(jnp.bfloat16)
    # scores: contract over dhp without an explicit transpose of k
    s = jax.lax.dot_general(q, k, (((1,), (1,)), ((), ())),
                            preferred_element_type=jnp.float32) * scale
    m = jnp.max(s, axis=-1, keepdims=True)
    p = jnp.exp(s - m)
    p = p / jnp.sum(p, axis=-1, keepdims=True)      # exact softmax
    ctx = jnp.dot(p.astype(jnp.bfloat16), v, preferred_element_type=jnp.float32)
    o_ref[0] = ctx.astype(o_ref.dtype)              # lane-aligned per-head store


def attention(qkv, nh, dhp, scale):
    """qkv: (B, S, nh*3*dhp) bf16, head-blocked -> context (B, S, nh*dhp) bf16."""
    B, S, _ = qkv.shape
    block_bytes = 2 * S * 3 * dhp + 2 * S * dhp + 4 * S * S
    cost = pl.CostEstimate(
        flops=int(4 * B * nh * S * S * dhp),
        transcendentals=int(B * nh * S * S),
        bytes_accessed=int(2 * B * S * nh * 4 * dhp),
    )
    return pl.pallas_call(
        functools.partial(_attention_kernel, dhp=dhp, scale=scale),
        out_shape=jax.ShapeDtypeStruct((B, S, nh * dhp), jnp.bfloat16),
        grid=(B, nh),
        in_specs=[pl.BlockSpec((1, S, 3 * dhp), lambda b, h: (b, 0, h))],
        out_specs=pl.BlockSpec((1, S, dhp), lambda b, h: (b, 0, h)),
        compiler_params=pltpu.CompilerParams(
            dimension_semantics=("parallel", "parallel"),
            vmem_limit_bytes=_vmem_limit(block_bytes),
        ),
        cost_estimate=cost,
    )(qkv)


# --------------------------------------------------------------------------
# Weight packing: per-head, lane-padded fused QKV and row-padded o-proj
# --------------------------------------------------------------------------
def _pack_qkv(qw, kw, vw, qb, kb, vb, nh, dh, dhp):
    """(D,D) q/k/v weights -> (D, nh*3*dhp) with per-head [q|k|v] column blocks."""
    D = qw.shape[0]

    def pad_w(w):
        w = w.reshape(D, nh, dh)
        return jnp.pad(w, ((0, 0), (0, 0), (0, dhp - dh)))

    def pad_b(b):
        b = b.reshape(nh, dh)
        return jnp.pad(b, ((0, 0), (0, dhp - dh)))

    w = jnp.stack([pad_w(qw), pad_w(kw), pad_w(vw)], axis=2)   # (D, nh, 3, dhp)
    b = jnp.stack([pad_b(qb), pad_b(kb), pad_b(vb)], axis=1)   # (nh, 3, dhp)
    return w.reshape(D, nh * 3 * dhp), b.reshape(nh * 3 * dhp)


def _pad_o_rows(ow, nh, dh, dhp):
    """(D, D) o-proj weight -> (nh*dhp, D) with zero rows for padded head dims."""
    D = ow.shape[1]
    ow = ow.reshape(nh, dh, D)
    ow = jnp.pad(ow, ((0, 0), (0, dhp - dh), (0, 0)))
    return ow.reshape(nh * dhp, D)


# --------------------------------------------------------------------------
# Parameter init (deterministic, synthetic weights; matmul weights in bf16)
# --------------------------------------------------------------------------
def init_params(key, cfg):
    D = cfg["hidden_size"]
    I = cfg["intermediate_size"]
    C = cfg["num_channels"]
    p = cfg["patch_size"]
    N = (cfg["image_size"] // p) ** 2
    L = cfg["num_layers"]
    NL = cfg["num_labels"]
    nh = cfg["num_heads"]
    dh = D // nh
    dhp = _round_up(dh, 128)
    pdim = C * p * p

    keys = jax.random.split(key, 8 + L)

    def w(k, shape):
        return (0.02 * jax.random.normal(k, shape, jnp.float32)).astype(jnp.bfloat16)

    params = {
        "patch_w": w(keys[0], (pdim, D)),
        "patch_b": jnp.zeros((D,), jnp.float32),
        "cls": (0.02 * jax.random.normal(keys[1], (1, 1, D))).astype(jnp.float32),
        "pos": (0.02 * jax.random.normal(keys[2], (1, N + 1, D))).astype(jnp.float32),
        "lnf_g": jnp.ones((D,), jnp.float32),
        "lnf_b": jnp.zeros((D,), jnp.float32),
        "head_w": w(keys[3], (D, NL)),
        "head_b": jnp.zeros((NL,), jnp.float32),
        "layers": [],
    }
    for l in range(L):
        lk = jax.random.split(keys[8 + l], 6)
        qw, kw, vw = w(lk[0], (D, D)), w(lk[1], (D, D)), w(lk[2], (D, D))
        zb = jnp.zeros((D,), jnp.float32)
        qkv_w, qkv_b = _pack_qkv(qw, kw, vw, zb, zb, zb, nh, dh, dhp)
        o_w = _pad_o_rows(w(lk[3], (D, D)), nh, dh, dhp)
        params["layers"].append({
            "ln1_g": jnp.ones((D,), jnp.float32), "ln1_b": jnp.zeros((D,), jnp.float32),
            "qkv_w": qkv_w,                                   # (D, nh*3*dhp) head-blocked
            "qkv_b": qkv_b,                                   # (nh*3*dhp,)
            "o_w": o_w, "o_b": jnp.zeros((D,), jnp.float32),  # (nh*dhp, D)
            "ln2_g": jnp.ones((D,), jnp.float32), "ln2_b": jnp.zeros((D,), jnp.float32),
            "fc1_w": w(lk[4], (D, I)), "fc1_b": jnp.zeros((I,), jnp.float32),
            "fc2_w": w(lk[5], (I, D)), "fc2_b": jnp.zeros((D,), jnp.float32),
        })
    return params


# --------------------------------------------------------------------------
# ViT forward (matches ViTForImageClassification semantics)
# --------------------------------------------------------------------------
def vit_forward(params, x, cfg, output_hidden_states=False):
    B, C, H, W = x.shape
    p = cfg["patch_size"]
    D = cfg["hidden_size"]
    nh = cfg["num_heads"]
    dh = D // nh
    dhp = _round_up(dh, 128)
    Hp, Wp = H // p, W // p
    Np = Hp * Wp
    S = Np + 1
    eps = 1e-12                     # ViTConfig.layer_norm_eps default
    scale = 1.0 / math.sqrt(dh)

    # --- patch embedding: Conv2d(C, D, kernel=p, stride=p) as patchify + matmul ---
    patches = (
        x.reshape(B, C, Hp, p, Wp, p)
        .transpose(0, 2, 4, 1, 3, 5)          # flatten order (C, ph, pw) == Conv2d weight order
        .reshape(B * Np, C * p * p)
    )
    ones_k = jnp.ones((C * p * p,), jnp.float32)
    zeros_k = jnp.zeros((C * p * p,), jnp.float32)
    emb = ln_linear(patches, ones_k, zeros_k, params["patch_w"], params["patch_b"],
                    apply_ln=False).reshape(B, Np, D)

    # --- CLS token + position embeddings (dropout is identity at inference) ---
    cls = jnp.broadcast_to(params["cls"], (B, 1, D))
    h = jnp.concatenate([cls, emb], axis=1) + params["pos"]      # (B, S, D) f32

    hidden_states = [h] if output_hidden_states else None

    for layer in params["layers"]:
        hf = h.reshape(B * S, D)

        # --- self-attention: fused LN1+QKV (bf16 out), per-(batch,head) attention,
        #     fused o-proj + residual (in-place on the residual stream) ---
        qkv = ln_linear(hf, layer["ln1_g"], layer["ln1_b"],
                        layer["qkv_w"], layer["qkv_b"], eps=eps,
                        out_dtype=jnp.bfloat16)                  # (B*S, nh*3*dhp) bf16
        ctx = attention(qkv.reshape(B, S, nh * 3 * dhp), nh, dhp, scale)  # (B,S,nh*dhp) bf16
        hf = linear_residual(ctx.reshape(B * S, nh * dhp),
                             layer["o_w"], layer["o_b"], hf)

        # --- MLP block: fused LN2 + fc1 + GELU + fc2 + residual (I-dim stays in VMEM) ---
        hf = ln_mlp(hf, layer["ln2_g"], layer["ln2_b"],
                    layer["fc1_w"], layer["fc1_b"],
                    layer["fc2_w"], layer["fc2_b"], eps=eps)

        h = hf.reshape(B, S, D)
        if output_hidden_states:
            hidden_states.append(h)

    # --- final LayerNorm + classifier, fused, applied only to the CLS token ---
    logits = ln_linear(h[:, 0, :], params["lnf_g"], params["lnf_b"],
                       params["head_w"], params["head_b"], eps=eps)

    if output_hidden_states:
        return logits, tuple(hidden_states)
    return logits


# --------------------------------------------------------------------------
# Main
# --------------------------------------------------------------------------
if __name__ == "__main__":
    # Small config consistent with the module's structure
    # (full model: hidden=768, layers=6, heads=8, inter=1536, image=224, patch=16, ch=3, labels=100)
    cfg = dict(
        hidden_size=128,
        num_layers=2,
        num_heads=4,
        intermediate_size=256,
        image_size=32,
        patch_size=8,
        num_channels=3,
        num_labels=10,
    )

    key = jax.random.PRNGKey(0)
    pkey, xkey = jax.random.split(key)
    params = init_params(pkey, cfg)

    x = jax.random.normal(
        xkey, (2, cfg["num_channels"], cfg["image_size"], cfg["image_size"]), jnp.float32
    )

    fwd = jax.jit(lambda prm, inp: vit_forward(prm, inp, cfg, output_hidden_states=False))
    logits = fwd(params, x)
    jax.block_until_ready(logits)
    assert logits.shape == (2, cfg["num_labels"]), logits.shape
    assert bool(jnp.all(jnp.isfinite(logits)))
    print("KERNEL_OK")
</pallas_src>

<mosaic_0001>
module attributes {stable_mosaic.version = 11 : i64} {
  func.func @_ln_linear_kernel(%arg0: i32, %arg1: memref<8x192xf32, #tpu.memory_space<vmem>>, %arg2: memref<1x192xf32, #tpu.memory_space<vmem>>, %arg3: memref<1x192xf32, #tpu.memory_space<vmem>>, %arg4: memref<192x128xbf16, #tpu.memory_space<vmem>>, %arg5: memref<1x128xf32, #tpu.memory_space<vmem>>, %arg6: memref<8x128xf32, #tpu.memory_space<vmem>>) attributes {dimension_semantics = [#tpu.dimension_semantics<parallel>], iteration_bounds = array<i64: 4>, scalar_prefetch = 0 : i64, scratch_operands = 0 : i64, tpu.core_type = #tpu.core_type<tc>, window_params = [{transform_indices = @transform_0, window_bounds = array<i64: 8, 192>}, {pipeline_mode = #tpu.pipeline_mode<synchronous>, transform_indices = @transform_1, window_bounds = array<i64: 1, 192>}, {pipeline_mode = #tpu.pipeline_mode<synchronous>, transform_indices = @transform_2, window_bounds = array<i64: 1, 192>}, {pipeline_mode = #tpu.pipeline_mode<synchronous>, transform_indices = @transform_3, window_bounds = array<i64: 192, 128>}, {pipeline_mode = #tpu.pipeline_mode<synchronous>, transform_indices = @transform_4, window_bounds = array<i64: 1, 128>}, {transform_indices = @transform_5, window_bounds = array<i64: 8, 128>}]} {
    %c0 = arith.constant 0 : index
    %c0_0 = arith.constant 0 : index
    %0 = vector.load %arg1[%c0, %c0_0] : memref<8x192xf32, #tpu.memory_space<vmem>>, vector<8x192xf32>
    %1 = arith.truncf %0 : vector<8x192xf32> to vector<8x192xbf16>
    %c0_1 = arith.constant 0 : index
    %c0_2 = arith.constant 0 : index
    %2 = vector.load %arg4[%c0_1, %c0_2] : memref<192x128xbf16, #tpu.memory_space<vmem>>, vector<192x128xbf16>
    %cst = arith.constant dense<0.000000e+00> : vector<8x128xf32>
    %3 = tpu.matmul %1, %2, %cst {dimension_numbers = #tpu.dot_dimension_numbers<[1], [0], [0], [1], [0, 0, 1, 1], [], []>} : vector<8x192xbf16>, vector<192x128xbf16>, vector<8x128xf32> -> vector<8x128xf32>
    %c0_3 = arith.constant 0 : index
    %c0_4 = arith.constant 0 : index
    %4 = vector.load %arg5[%c0_3, %c0_4] : memref<1x128xf32, #tpu.memory_space<vmem>>, vector<1x128xf32>
    %5 = vector.broadcast %4 : vector<1x128xf32> to vector<8x128xf32>
    %6 = arith.addf %3, %5 : vector<8x128xf32>
    %c0_5 = arith.constant 0 : index
    %c0_6 = arith.constant 0 : index
    %7 = vector.load %arg6[%c0_5, %c0_6] : memref<8x128xf32, #tpu.memory_space<vmem>>, vector<8x128xf32>
    tpu.vector_store %arg6[%c0_5, %c0_6], %6 {strides = array<i32>} : memref<8x128xf32, #tpu.memory_space<vmem>>, vector<8x128xf32>,
    return
  }
  func.func @transform_0(%arg0: i32) -> (i32, i32) {
    %c0_i32 = arith.constant 0 : i32
    %c0_i32_0 = arith.constant 0 : i32
    return %arg0, %c0_i32 : i32, i32
  }
  func.func @transform_1(%arg0: i32) -> (i32, i32) {
    %c0_i32 = arith.constant 0 : i32
    %c0_i32_0 = arith.constant 0 : i32
    %c0_i32_1 = arith.constant 0 : i32
    return %c0_i32, %c0_i32_0 : i32, i32
  }
  func.func @transform_2(%arg0: i32) -> (i32, i32) {
    %c0_i32 = arith.constant 0 : i32
    %c0_i32_0 = arith.constant 0 : i32
    %c0_i32_1 = arith.constant 0 : i32
    return %c0_i32, %c0_i32_0 : i32, i32
  }
  func.func @transform_3(%arg0: i32) -> (i32, i32) {
    %c0_i32 = arith.constant 0 : i32
    %c0_i32_0 = arith.constant 0 : i32
    %c0_i32_1 = arith.constant 0 : i32
    return %c0_i32, %c0_i32_0 : i32, i32
  }
  func.func @transform_4(%arg0: i32) -> (i32, i32) {
    %c0_i32 = arith.constant 0 : i32
    %c0_i32_0 = arith.constant 0 : i32
    %c0_i32_1 = arith.constant 0 : i32
    return %c0_i32, %c0_i32_0 : i32, i32
  }
  func.func @transform_5(%arg0: i32) -> (i32, i32) {
    %c0_i32 = arith.constant 0 : i32
    %c0_i32_0 = arith.constant 0 : i32
    return %arg0, %c0_i32 : i32, i32
  }
}

module attributes {stable_mosaic.version = 11 : i64} {
  func.func @_ln_linear_kernel(%arg0: i32, %arg1: memref<16x128xf32, #tpu.memory_space<vmem>>, %arg2: memref<1x128xf32, #tpu.memory_space<vmem>>, %arg3: memref<1x128xf32, #tpu.memory_space<vmem>>, %arg4: memref<128x1536xbf16, #tpu.memory_space<vmem>>, %arg5: memref<1x1536xf32, #tpu.memory_space<vmem>>, %arg6: memref<16x1536xbf16, #tpu.memory_space<vmem>>) attributes {dimension_semantics = [#tpu.dimension_semantics<parallel>], iteration_bounds = array<i64: 3>, scalar_prefetch = 0 : i64, scratch_operands = 0 : i64, tpu.core_type = #tpu.core_type<tc>, window_params = [{transform_indices = @transform_0, window_bounds = array<i64: 16, 128>}, {pipeline_mode = #tpu.pipeline_mode<synchronous>, transform_indices = @transform_1, window_bounds = array<i64: 1, 128>}, {pipeline_mode = #tpu.pipeline_mode<synchronous>, transform_indices = @transform_2, window_bounds = array<i64: 1, 128>}, {pipeline_mode = #tpu.pipeline_mode<synchronous>, transform_indices = @transform_3, window_bounds = array<i64: 128, 1536>}, {pipeline_mode = #tpu.pipeline_mode<synchronous>, transform_indices = @transform_4, window_bounds = array<i64: 1, 1536>}, {transform_indices = @transform_5, window_bounds = array<i64: 16, 1536>}]} {
    %c0 = arith.constant 0 : index
    %c0_0 = arith.constant 0 : index
    %0 = vector.load %arg1[%c0, %c0_0] : memref<16x128xf32, #tpu.memory_space<vmem>>, vector<16x128xf32>
    %cst = arith.constant dense<0.000000e+00> : vector<16xf32>
    %1 = vector.multi_reduction <add>, %0, %cst [1] : vector<16x128xf32> to vector<16xf32>
    %2 = vector.shape_cast %1 : vector<16xf32> to vector<16x1xf32>
    %cst_1 = arith.constant 1.280000e+02 : f32
    %3 = vector.broadcast %cst_1 : f32 to vector<16x1xf32>
    %4 = arith.divf %2, %3 : vector<16x1xf32>
    %5 = vector.broadcast %4 : vector<16x1xf32> to vector<16x128xf32>
    %6 = arith.subf %0, %5 : vector<16x128xf32>
    %7 = arith.mulf %6, %6 : vector<16x128xf32>
    %cst_2 = arith.constant dense<0.000000e+00> : vector<16xf32>
    %8 = vector.multi_reduction <add>, %7, %cst_2 [1] : vector<16x128xf32> to vector<16xf32>
    %9 = vector.shape_cast %8 : vector<16xf32> to vector<16x1xf32>
    %cst_3 = arith.constant 1.280000e+02 : f32
    %10 = vector.broadcast %cst_3 : f32 to vector<16x1xf32>
    %11 = arith.divf %9, %10 : vector<16x1xf32>
    %12 = vector.broadcast %4 : vector<16x1xf32> to vector<16x128xf32>
    %13 = arith.subf %0, %12 : vector<16x128xf32>
    %cst_4 = arith.constant 9.99999996E-13 : f32
    %14 = vector.broadcast %cst_4 : f32 to vector<16x1xf32>
    %15 = arith.addf %11, %14 : vector<16x1xf32>
    %16 = math.rsqrt %15 : vector<16x1xf32>
    %17 = vector.broadcast %16 : vector<16x1xf32> to vector<16x128xf32>
    %18 = arith.mulf %13, %17 : vector<16x128xf32>
    %c0_5 = arith.constant 0 : index
    %c0_6 = arith.constant 0 : index
    %19 = vector.load %arg2[%c0_5, %c0_6] : memref<1x128xf32, #tpu.memory_space<vmem>>, vector<1x128xf32>
    %20 = vector.broadcast %19 : vector<1x128xf32> to vector<16x128xf32>
    %21 = arith.mulf %18, %20 : vector<16x128xf32>
    %c0_7 = arith.constant 0 : index
    %c0_8 = arith.constant 0 : index
    %22 = vector.load %arg3[%c0_7, %c0_8] : memref<1x128xf32, #tpu.memory_space<vmem>>, vector<1x128xf32>
    %23 = vector.broadcast %22 : vector<1x128xf32> to vector<16x128xf32>
    %24 = arith.addf %21, %23 : vector<16x128xf32>
    %25 = arith.truncf %24 : vector<16x128xf32> to vector<16x128xbf16>
    %c0_9 = arith.constant 0 : index
    %c0_10 = arith.constant 0 : index
    %26 = vector.load %arg4[%c0_9, %c0_10] : memref<128x1536xbf16, #tpu.memory_space<vmem>>, vector<128x1536xbf16>
    %cst_11 = arith.constant dense<0.000000e+00> : vector<16x1536xf32>
    %27 = tpu.matmul %25, %26, %cst_11 {dimension_numbers = #tpu.dot_dimension_numbers<[1], [0], [0], [1], [0, 0, 1, 1], [], []>} : vector<16x128xbf16>, vector<128x1536xbf16>, vector<16x1536xf32> -> vector<16x1536xf32>
    %c0_12 = arith.constant 0 : index
    %c0_13 = arith.constant 0 : index
    %28 = vector.load %arg5[%c0_12, %c0_13] : memref<1x1536xf32, #tpu.memory_space<vmem>>, vector<1x1536xf32>
    %29 = vector.broadcast %28 : vector<1x1536xf32> to vector<16x1536xf32>
    %30 = arith.addf %27, %29 : vector<16x1536xf32>
    %31 = arith.truncf %30 : vector<16x1536xf32> to vector<16x1536xbf16>
    %c0_14 = arith.constant 0 : index
    %c0_15 = arith.constant 0 : index
    %32 = vector.load %arg6[%c0_14, %c0_15] : memref<16x1536xbf16, #tpu.memory_space<vmem>>, vector<16x1536xbf16>
    tpu.vector_store %arg6[%c0_14, %c0_15], %31 {strides = array<i32>} : memref<16x1536xbf16, #tpu.memory_space<vmem>>, vector<16x1536xbf16>,
    return
  }
  func.func @transform_0(%arg0: i32) -> (i32, i32) {
    %c0_i32 = arith.constant 0 : i32
    %c0_i32_0 = arith.constant 0 : i32
    return %arg0, %c0_i32 : i32, i32
  }
  func.func @transform_1(%arg0: i32) -> (i32, i32) {
    %c0_i32 = arith.constant 0 : i32
    %c0_i32_0 = arith.constant 0 : i32
    %c0_i32_1 = arith.constant 0 : i32
    return %c0_i32, %c0_i32_0 : i32, i32
  }
  func.func @transform_2(%arg0: i32) -> (i32, i32) {
    %c0_i32 = arith.constant 0 : i32
    %c0_i32_0 = arith.constant 0 : i32
    %c0_i32_1 = arith.constant 0 : i32
    return %c0_i32, %c0_i32_0 : i32, i32
  }
  func.func @transform_3(%arg0: i32) -> (i32, i32) {
    %c0_i32 = arith.constant 0 : i32
    %c0_i32_0 = arith.constant 0 : i32
    %c0_i32_1 = arith.constant 0 : i32
    return %c0_i32, %c0_i32_0 : i32, i32
  }
  func.func @transform_4(%arg0: i32) -> (i32, i32) {
    %c0_i32 = arith.constant 0 : i32
    %c0_i32_0 = arith.constant 0 : i32
    %c0_i32_1 = arith.constant 0 : i32
    return %c0_i32, %c0_i32_0 : i32, i32
  }
  func.func @transform_5(%arg0: i32) -> (i32, i32) {
    %c0_i32 = arith.constant 0 : i32
    %c0_i32_0 = arith.constant 0 : i32
    return %arg0, %c0_i32 : i32, i32
  }
}

module attributes {stable_mosaic.version = 11 : i64} {
  func.func @_attention_kernel(%arg0: i32, %arg1: i32, %arg2: memref<1x17x384xbf16, #tpu.memory_space<vmem>>, %arg3: memref<1x17x128xbf16, #tpu.memory_space<vmem>>) attributes {dimension_semantics = [#tpu.dimension_semantics<parallel>, #tpu.dimension_semantics<parallel>], iteration_bounds = array<i64: 2, 4>, scalar_prefetch = 0 : i64, scratch_operands = 0 : i64, tpu.core_type = #tpu.core_type<tc>, window_params = [{transform_indices = @transform_0, window_bounds = array<i64: 1, 17, 384>}, {transform_indices = @transform_1, window_bounds = array<i64: 1, 17, 128>}]} {
    %c0 = arith.constant 0 : index
    %c0_0 = arith.constant 0 : index
    %c0_1 = arith.constant 0 : index
    %0 = vector.load %arg2[%c0, %c0_0, %c0_1] : memref<1x17x384xbf16, #tpu.memory_space<vmem>>, vector<1x17x128xbf16>
    %1 = vector.shape_cast %0 : vector<1x17x128xbf16> to vector<17x128xbf16>
    %c0_2 = arith.constant 0 : index
    %c0_3 = arith.constant 0 : index
    %c128 = arith.constant 128 : index
    %2 = vector.load %arg2[%c0_2, %c0_3, %c128] : memref<1x17x384xbf16, #tpu.memory_space<vmem>>, vector<1x17x128xbf16>
    %3 = vector.shape_cast %2 : vector<1x17x128xbf16> to vector<17x128xbf16>
    %c0_4 = arith.constant 0 : index
    %c0_5 = arith.constant 0 : index
    %c256 = arith.constant 256 : index
    %4 = vector.load %arg2[%c0_4, %c0_5, %c256] : memref<1x17x384xbf16, #tpu.memory_space<vmem>>, vector<1x17x128xbf16>
    %5 = vector.shape_cast %4 : vector<1x17x128xbf16> to vector<17x128xbf16>
    %cst = arith.constant dense<0.000000e+00> : vector<17x17xf32>
    %6 = tpu.matmul %1, %3, %cst {dimension_numbers = #tpu.dot_dimension_numbers<[1], [1], [0], [0], [0, 0, 1, 0], [], []>} : vector<17x128xbf16>, vector<17x128xbf16>, vector<17x17xf32> -> vector<17x17xf32>
    %cst_6 = arith.constant 0.176776692 : f32
    %7 = vector.broadcast %cst_6 : f32 to vector<17x17xf32>
    %8 = arith.mulf %6, %7 : vector<17x17xf32>
    %cst_7 = arith.constant dense<0xFF800000> : vector<17xf32>
    %9 = vector.multi_reduction <maximumf>, %8, %cst_7 [1] : vector<17x17xf32> to vector<17xf32>
    %10 = vector.shape_cast %9 : vector<17xf32> to vector<17x1xf32>
    %11 = vector.broadcast %10 : vector<17x1xf32> to vector<17x17xf32>
    %12 = arith.subf %8, %11 : vector<17x17xf32>
    %13 = math.exp %12 : vector<17x17xf32>
    %cst_8 = arith.constant dense<0.000000e+00> : vector<17xf32>
    %14 = vector.multi_reduction <add>, %13, %cst_8 [1] : vector<17x17xf32> to vector<17xf32>
    %15 = vector.shape_cast %14 : vector<17xf32> to vector<17x1xf32>
    %16 = vector.broadcast %15 : vector<17x1xf32> to vector<17x17xf32>
    %17 = arith.divf %13, %16 : vector<17x17xf32>
    %18 = arith.truncf %17 : vector<17x17xf32> to vector<17x17xbf16>
    %cst_9 = arith.constant dense<0.000000e+00> : vector<17x128xf32>
    %19 = tpu.matmul %18, %5, %cst_9 {dimension_numbers = #tpu.dot_dimension_numbers<[1], [0], [0], [1], [0, 0, 1, 1], [], []>} : vector<17x17xbf16>, vector<17x128xbf16>, vector<17x128xf32> -> vector<17x128xf32>
    %20 = arith.truncf %19 : vector<17x128xf32> to vector<17x128xbf16>
    %c0_10 = arith.constant 0 : index
    %c0_11 = arith.constant 0 : index
    %c0_12 = arith.constant 0 : index
    %21 = vector.load %arg3[%c0_10, %c0_11, %c0_12] : memref<1x17x128xbf16, #tpu.memory_space<vmem>>, vector<1x17x128xbf16>
    %22 = vector.shape_cast %21 : vector<1x17x128xbf16> to vector<17x128xbf16>
    %23 = vector.shape_cast %20 : vector<17x128xbf16> to vector<1x17x128xbf16>
    tpu.vector_store %arg3[%c0_10, %c0_11, %c0_12], %23 {strides = array<i32>} : memref<1x17x128xbf16, #tpu.memory_space<vmem>>, vector<1x17x128xbf16>,
    return
  }
  func.func @transform_0(%arg0: i32, %arg1: i32) -> (i32, i32, i32) {
    %c0_i32 = arith.constant 0 : i32
    %c0_i32_0 = arith.constant 0 : i32
    return %arg0, %c0_i32, %arg1 : i32, i32, i32
  }
  func.func @transform_1(%arg0: i32, %arg1: i32) -> (i32, i32, i32) {
    %c0_i32 = arith.constant 0 : i32
    %c0_i32_0 = arith.constant 0 : i32
    return %arg0, %c0_i32, %arg1 : i32, i32, i32
  }
}

module attributes {stable_mosaic.version = 11 : i64} {
  func.func @_linear_residual_kernel(%arg0: i32, %arg1: memref<16x512xbf16, #tpu.memory_space<vmem>>, %arg2: memref<512x128xbf16, #tpu.memory_space<vmem>>, %arg3: memref<1x128xf32, #tpu.memory_space<vmem>>, %arg4: memref<16x128xf32, #tpu.memory_space<vmem>>, %arg5: memref<16x128xf32, #tpu.memory_space<vmem>>) attributes {dimension_semantics = [#tpu.dimension_semantics<parallel>], iteration_bounds = array<i64: 3>, scalar_prefetch = 0 : i64, scratch_operands = 0 : i64, tpu.core_type = #tpu.core_type<tc>, window_params = [{transform_indices = @transform_0, window_bounds = array<i64: 16, 512>}, {pipeline_mode = #tpu.pipeline_mode<synchronous>, transform_indices = @transform_1, window_bounds = array<i64: 512, 128>}, {pipeline_mode = #tpu.pipeline_mode<synchronous>, transform_indices = @transform_2, window_bounds = array<i64: 1, 128>}, {transform_indices = @transform_3, window_bounds = array<i64: 16, 128>}, {transform_indices = @transform_4, window_bounds = array<i64: 16, 128>}]} {
    %c0 = arith.constant 0 : index
    %c0_0 = arith.constant 0 : index
    %0 = vector.load %arg1[%c0, %c0_0] : memref<16x512xbf16, #tpu.memory_space<vmem>>, vector<16x512xbf16>
    %c0_1 = arith.constant 0 : index
    %c0_2 = arith.constant 0 : index
    %1 = vector.load %arg2[%c0_1, %c0_2] : memref<512x128xbf16, #tpu.memory_space<vmem>>, vector<512x128xbf16>
    %cst = arith.constant dense<0.000000e+00> : vector<16x128xf32>
    %2 = tpu.matmul %0, %1, %cst {dimension_numbers = #tpu.dot_dimension_numbers<[1], [0], [0], [1], [0, 0, 1, 1], [], []>} : vector<16x512xbf16>, vector<512x128xbf16>, vector<16x128xf32> -> vector<16x128xf32>
    %c0_3 = arith.constant 0 : index
    %c0_4 = arith.constant 0 : index
    %3 = vector.load %arg3[%c0_3, %c0_4] : memref<1x128xf32, #tpu.memory_space<vmem>>, vector<1x128xf32>
    %4 = vector.broadcast %3 : vector<1x128xf32> to vector<16x128xf32>
    %5 = arith.addf %2, %4 : vector<16x128xf32>
    %c0_5 = arith.constant 0 : index
    %c0_6 = arith.constant 0 : index
    %6 = vector.load %arg4[%c0_5, %c0_6] : memref<16x128xf32, #tpu.memory_space<vmem>>, vector<16x128xf32>
    %7 = arith.addf %5, %6 : vector<16x128xf32>
    %c0_7 = arith.constant 0 : index
    %c0_8 = arith.constant 0 : index
    %8 = vector.load %arg5[%c0_7, %c0_8] : memref<16x128xf32, #tpu.memory_space<vmem>>, vector<16x128xf32>
    tpu.vector_store %arg5[%c0_7, %c0_8], %7 {strides = array<i32>} : memref<16x128xf32, #tpu.memory_space<vmem>>, vector<16x128xf32>,
    return
  }
  func.func @transform_0(%arg0: i32) -> (i32, i32) {
    %c0_i32 = arith.constant 0 : i32
    %c0_i32_0 = arith.constant 0 : i32
    return %arg0, %c0_i32 : i32, i32
  }
  func.func @transform_1(%arg0: i32) -> (i32, i32) {
    %c0_i32 = arith.constant 0 : i32
    %c0_i32_0 = arith.constant 0 : i32
    %c0_i32_1 = arith.constant 0 : i32
    return %c0_i32, %c0_i32_0 : i32, i32
  }
  func.func @transform_2(%arg0: i32) -> (i32, i32) {
    %c0_i32 = arith.constant 0 : i32
    %c0_i32_0 = arith.constant 0 : i32
    %c0_i32_1 = arith.constant 0 : i32
    return %c0_i32, %c0_i32_0 : i32, i32
  }
  func.func @transform_3(%arg0: i32) -> (i32, i32) {
    %c0_i32 = arith.constant 0 : i32
    %c0_i32_0 = arith.constant 0 : i32
    return %arg0, %c0_i32 : i32, i32
  }
  func.func @transform_4(%arg0: i32) -> (i32, i32) {
    %c0_i32 = arith.constant 0 : i32
    %c0_i32_0 = arith.constant 0 : i32
    return %arg0, %c0_i32 : i32, i32
  }
}

module attributes {stable_mosaic.version = 11 : i64} {
  func.func @_ln_mlp_kernel(%arg0: i32, %arg1: memref<16x128xf32, #tpu.memory_space<vmem>>, %arg2: memref<1x128xf32, #tpu.memory_space<vmem>>, %arg3: memref<1x128xf32, #tpu.memory_space<vmem>>, %arg4: memref<128x256xbf16, #tpu.memory_space<vmem>>, %arg5: memref<1x256xf32, #tpu.memory_space<vmem>>, %arg6: memref<256x128xbf16, #tpu.memory_space<vmem>>, %arg7: memref<1x128xf32, #tpu.memory_space<vmem>>, %arg8: memref<16x128xf32, #tpu.memory_space<vmem>>) attributes {dimension_semantics = [#tpu.dimension_semantics<parallel>], iteration_bounds = array<i64: 3>, scalar_prefetch = 0 : i64, scratch_operands = 0 : i64, tpu.core_type = #tpu.core_type<tc>, window_params = [{transform_indices = @transform_0, window_bounds = array<i64: 16, 128>}, {pipeline_mode = #tpu.pipeline_mode<synchronous>, transform_indices = @transform_1, window_bounds = array<i64: 1, 128>}, {pipeline_mode = #tpu.pipeline_mode<synchronous>, transform_indices = @transform_2, window_bounds = array<i64: 1, 128>}, {pipeline_mode = #tpu.pipeline_mode<synchronous>, transform_indices = @transform_3, window_bounds = array<i64: 128, 256>}, {pipeline_mode = #tpu.pipeline_mode<synchronous>, transform_indices = @transform_4, window_bounds = array<i64: 1, 256>}, {pipeline_mode = #tpu.pipeline_mode<synchronous>, transform_indices = @transform_5, window_bounds = array<i64: 256, 128>}, {pipeline_mode = #tpu.pipeline_mode<synchronous>, transform_indices = @transform_6, window_bounds = array<i64: 1, 128>}, {transform_indices = @transform_7, window_bounds = array<i64: 16, 128>}]} {
    %c0 = arith.constant 0 : index
    %c0_0 = arith.constant 0 : index
    %0 = vector.load %arg1[%c0, %c0_0] : memref<16x128xf32, #tpu.memory_space<vmem>>, vector<16x128xf32>
    %cst = arith.constant dense<0.000000e+00> : vector<16xf32>
    %1 = vector.multi_reduction <add>, %0, %cst [1] : vector<16x128xf32> to vector<16xf32>
    %2 = vector.shape_cast %1 : vector<16xf32> to vector<16x1xf32>
    %cst_1 = arith.constant 1.280000e+02 : f32
    %3 = vector.broadcast %cst_1 : f32 to vector<16x1xf32>
    %4 = arith.divf %2, %3 : vector<16x1xf32>
    %5 = vector.broadcast %4 : vector<16x1xf32> to vector<16x128xf32>
    %6 = arith.subf %0, %5 : vector<16x128xf32>
    %7 = arith.mulf %6, %6 : vector<16x128xf32>
    %cst_2 = arith.constant dense<0.000000e+00> : vector<16xf32>
    %8 = vector.multi_reduction <add>, %7, %cst_2 [1] : vector<16x128xf32> to vector<16xf32>
    %9 = vector.shape_cast %8 : vector<16xf32> to vector<16x1xf32>
    %cst_3 = arith.constant 1.280000e+02 : f32
    %10 = vector.broadcast %cst_3 : f32 to vector<16x1xf32>
    %11 = arith.divf %9, %10 : vector<16x1xf32>
    %12 = vector.broadcast %4 : vector<16x1xf32> to vector<16x128xf32>
    %13 = arith.subf %0, %12 : vector<16x128xf32>
    %cst_4 = arith.constant 9.99999996E-13 : f32
    %14 = vector.broadcast %cst_4 : f32 to vector<16x1xf32>
    %15 = arith.addf %11, %14 : vector<16x1xf32>
    %16 = math.rsqrt %15 : vector<16x1xf32>
    %17 = vector.broadcast %16 : vector<16x1xf32> to vector<16x128xf32>
    %18 = arith.mulf %13, %17 : vector<16x128xf32>
    %c0_5 = arith.constant 0 : index
    %c0_6 = arith.constant 0 : index
    %19 = vector.load %arg2[%c0_5, %c0_6] : memref<1x128xf32, #tpu.memory_space<vmem>>, vector<1x128xf32>
    %20 = vector.broadcast %19 : vector<1x128xf32> to vector<16x128xf32>
    %21 = arith.mulf %18, %20 : vector<16x128xf32>
    %c0_7 = arith.constant 0 : index
    %c0_8 = arith.constant 0 : index
    %22 = vector.load %arg3[%c0_7, %c0_8] : memref<1x128xf32, #tpu.memory_space<vmem>>, vector<1x128xf32>
    %23 = vector.broadcast %22 : vector<1x128xf32> to vector<16x128xf32>
    %24 = arith.addf %21, %23 : vector<16x128xf32>
    %25 = arith.truncf %24 : vector<16x128xf32> to vector<16x128xbf16>
    %c0_9 = arith.constant 0 : index
    %c0_10 = arith.constant 0 : index
    %26 = vector.load %arg4[%c0_9, %c0_10] : memref<128x256xbf16, #tpu.memory_space<vmem>>, vector<128x256xbf16>
    %cst_11 = arith.constant dense<0.000000e+00> : vector<16x256xf32>
    %27 = tpu.matmul %25, %26, %cst_11 {dimension_numbers = #tpu.dot_dimension_numbers<[1], [0], [0], [1], [0, 0, 1, 1], [], []>} : vector<16x128xbf16>, vector<128x256xbf16>, vector<16x256xf32> -> vector<16x256xf32>
    %c0_12 = arith.constant 0 : index
    %c0_13 = arith.constant 0 : index
    %28 = vector.load %arg5[%c0_12, %c0_13] : memref<1x256xf32, #tpu.memory_space<vmem>>, vector<1x256xf32>
    %29 = vector.broadcast %28 : vector<1x256xf32> to vector<16x256xf32>
    %30 = arith.addf %27, %29 : vector<16x256xf32>
    %31 = arith.mulf %30, %30 : vector<16x256xf32>
    %32 = arith.mulf %30, %31 : vector<16x256xf32>
    %cst_14 = arith.constant 4.471500e-02 : f32
    %33 = vector.broadcast %cst_14 : f32 to vector<16x256xf32>
    %34 = arith.mulf %33, %32 : vector<16x256xf32>
    %35 = arith.addf %30, %34 : vector<16x256xf32>
    %cst_15 = arith.constant 0.797884583 : f32
    %36 = vector.broadcast %cst_15 : f32 to vector<16x256xf32>
    %37 = arith.mulf %36, %35 : vector<16x256xf32>
    %38 = math.tanh %37 : vector<16x256xf32>
    %cst_16 = arith.constant 1.000000e+00 : f32
    %39 = vector.broadcast %cst_16 : f32 to vector<16x256xf32>
    %40 = arith.addf %39, %38 : vector<16x256xf32>
    %cst_17 = arith.constant 5.000000e-01 : f32
    %41 = vector.broadcast %cst_17 : f32 to vector<16x256xf32>
    %42 = arith.mulf %41, %40 : vector<16x256xf32>
    %43 = arith.mulf %30, %42 : vector<16x256xf32>
    %44 = arith.truncf %43 : vector<16x256xf32> to vector<16x256xbf16>
    %c0_18 = arith.constant 0 : index
    %c0_19 = arith.constant 0 : index
    %45 = vector.load %arg6[%c0_18, %c0_19] : memref<256x128xbf16, #tpu.memory_space<vmem>>, vector<256x128xbf16>
    %cst_20 = arith.constant dense<0.000000e+00> : vector<16x128xf32>
    %46 = tpu.matmul %44, %45, %cst_20 {dimension_numbers = #tpu.dot_dimension_numbers<[1], [0], [0], [1], [0, 0, 1, 1], [], []>} : vector<16x256xbf16>, vector<256x128xbf16>, vector<16x128xf32> -> vector<16x128xf32>
    %c0_21 = arith.constant 0 : index
    %c0_22 = arith.constant 0 : index
    %47 = vector.load %arg7[%c0_21, %c0_22] : memref<1x128xf32, #tpu.memory_space<vmem>>, vector<1x128xf32>
    %48 = vector.broadcast %47 : vector<1x128xf32> to vector<16x128xf32>
    %49 = arith.addf %46, %48 : vector<16x128xf32>
    %50 = arith.addf %0, %49 : vector<16x128xf32>
    %c0_23 = arith.constant 0 : index
    %c0_24 = arith.constant 0 : index
    %51 = vector.load %arg8[%c0_23, %c0_24] : memref<16x128xf32, #tpu.memory_space<vmem>>, vector<16x128xf32>
    tpu.vector_store %arg8[%c0_23, %c0_24], %50 {strides = array<i32>} : memref<16x128xf32, #tpu.memory_space<vmem>>, vector<16x128xf32>,
    return
  }
  func.func @transform_0(%arg0: i32) -> (i32, i32) {
    %c0_i32 = arith.constant 0 : i32
    %c0_i32_0 = arith.constant 0 : i32
    return %arg0, %c0_i32 : i32, i32
  }
  func.func @transform_1(%arg0: i32) -> (i32, i32) {
    %c0_i32 = arith.constant 0 : i32
    %c0_i32_0 = arith.constant 0 : i32
    %c0_i32_1 = arith.constant 0 : i32
    return %c0_i32, %c0_i32_0 : i32, i32
  }
  func.func @transform_2(%arg0: i32) -> (i32, i32) {
    %c0_i32 = arith.constant 0 : i32
    %c0_i32_0 = arith.constant 0 : i32
    %c0_i32_1 = arith.constant 0 : i32
    return %c0_i32, %c0_i32_0 : i32, i32
  }
  func.func @transform_3(%arg0: i32) -> (i32, i32) {
    %c0_i32 = arith.constant 0 : i32
    %c0_i32_0 = arith.constant 0 : i32
    %c0_i32_1 = arith.constant 0 : i32
    return %c0_i32, %c0_i32_0 : i32, i32
  }
  func.func @transform_4(%arg0: i32) -> (i32, i32) {
    %c0_i32 = arith.constant 0 : i32
    %c0_i32_0 = arith.constant 0 : i32
    %c0_i32_1 = arith.constant 0 : i32
    return %c0_i32, %c0_i32_0 : i32, i32
  }
  func.func @transform_5(%arg0: i32) -> (i32, i32) {
    %c0_i32 = arith.constant 0 : i32
    %c0_i32_0 = arith.constant 0 : i32
    %c0_i32_1 = arith.constant 0 : i32
    return %c0_i32, %c0_i32_0 : i32, i32
  }
  func.func @transform_6(%arg0: i32) -> (i32, i32) {
    %c0_i32 = arith.constant 0 : i32
    %c0_i32_0 = arith.constant 0 : i32
    %c0_i32_1 = arith.constant 0 : i32
    return %c0_i32, %c0_i32_0 : i32, i32
  }
  func.func @transform_7(%arg0: i32) -> (i32, i32) {
    %c0_i32 = arith.constant 0 : i32
    %c0_i32_0 = arith.constant 0 : i32
    return %arg0, %c0_i32 : i32, i32
  }
}

module attributes {stable_mosaic.version = 11 : i64} {
  func.func @_ln_linear_kernel(%arg0: i32, %arg1: memref<8x128xf32, #tpu.memory_space<vmem>>, %arg2: memref<1x128xf32, #tpu.memory_space<vmem>>, %arg3: memref<1x128xf32, #tpu.memory_space<vmem>>, %arg4: memref<128x10xbf16, #tpu.memory_space<vmem>>, %arg5: memref<1x10xf32, #tpu.memory_space<vmem>>, %arg6: memref<8x10xf32, #tpu.memory_space<vmem>>) attributes {dimension_semantics = [#tpu.dimension_semantics<parallel>], iteration_bounds = array<i64: 1>, scalar_prefetch = 0 : i64, scratch_operands = 0 : i64, tpu.core_type = #tpu.core_type<tc>, window_params = [{transform_indices = @transform_0, window_bounds = array<i64: 8, 128>}, {pipeline_mode = #tpu.pipeline_mode<synchronous>, transform_indices = @transform_1, window_bounds = array<i64: 1, 128>}, {pipeline_mode = #tpu.pipeline_mode<synchronous>, transform_indices = @transform_2, window_bounds = array<i64: 1, 128>}, {pipeline_mode = #tpu.pipeline_mode<synchronous>, transform_indices = @transform_3, window_bounds = array<i64: 128, 10>}, {pipeline_mode = #tpu.pipeline_mode<synchronous>, transform_indices = @transform_4, window_bounds = array<i64: 1, 10>}, {transform_indices = @transform_5, window_bounds = array<i64: 8, 10>}]} {
    %c0 = arith.constant 0 : index
    %c0_0 = arith.constant 0 : index
    %0 = vector.load %arg1[%c0, %c0_0] : memref<8x128xf32, #tpu.memory_space<vmem>>, vector<8x128xf32>
    %cst = arith.constant dense<0.000000e+00> : vector<8xf32>
    %1 = vector.multi_reduction <add>, %0, %cst [1] : vector<8x128xf32> to vector<8xf32>
    %2 = vector.shape_cast %1 : vector<8xf32> to vector<8x1xf32>
    %cst_1 = arith.constant 1.280000e+02 : f32
    %3 = vector.broadcast %cst_1 : f32 to vector<8x1xf32>
    %4 = arith.divf %2, %3 : vector<8x1xf32>
    %5 = vector.broadcast %4 : vector<8x1xf32> to vector<8x128xf32>
    %6 = arith.subf %0, %5 : vector<8x128xf32>
    %7 = arith.mulf %6, %6 : vector<8x128xf32>
    %cst_2 = arith.constant dense<0.000000e+00> : vector<8xf32>
    %8 = vector.multi_reduction <add>, %7, %cst_2 [1] : vector<8x128xf32> to vector<8xf32>
    %9 = vector.shape_cast %8 : vector<8xf32> to vector<8x1xf32>
    %cst_3 = arith.constant 1.280000e+02 : f32
    %10 = vector.broadcast %cst_3 : f32 to vector<8x1xf32>
    %11 = arith.divf %9, %10 : vector<8x1xf32>
    %12 = vector.broadcast %4 : vector<8x1xf32> to vector<8x128xf32>
    %13 = arith.subf %0, %12 : vector<8x128xf32>
    %cst_4 = arith.constant 9.99999996E-13 : f32
    %14 = vector.broadcast %cst_4 : f32 to vector<8x1xf32>
    %15 = arith.addf %11, %14 : vector<8x1xf32>
    %16 = math.rsqrt %15 : vector<8x1xf32>
    %17 = vector.broadcast %16 : vector<8x1xf32> to vector<8x128xf32>
    %18 = arith.mulf %13, %17 : vector<8x128xf32>
    %c0_5 = arith.constant 0 : index
    %c0_6 = arith.constant 0 : index
    %19 = vector.load %arg2[%c0_5, %c0_6] : memref<1x128xf32, #tpu.memory_space<vmem>>, vector<1x128xf32>
    %20 = vector.broadcast %19 : vector<1x128xf32> to vector<8x128xf32>
    %21 = arith.mulf %18, %20 : vector<8x128xf32>
    %c0_7 = arith.constant 0 : index
    %c0_8 = arith.constant 0 : index
    %22 = vector.load %arg3[%c0_7, %c0_8] : memref<1x128xf32, #tpu.memory_space<vmem>>, vector<1x128xf32>
    %23 = vector.broadcast %22 : vector<1x128xf32> to vector<8x128xf32>
    %24 = arith.addf %21, %23 : vector<8x128xf32>
    %25 = arith.truncf %24 : vector<8x128xf32> to vector<8x128xbf16>
    %c0_9 = arith.constant 0 : index
    %c0_10 = arith.constant 0 : index
    %26 = vector.load %arg4[%c0_9, %c0_10] : memref<128x10xbf16, #tpu.memory_space<vmem>>, vector<128x10xbf16>
    %cst_11 = arith.constant dense<0.000000e+00> : vector<8x10xf32>
    %27 = tpu.matmul %25, %26, %cst_11 {dimension_numbers = #tpu.dot_dimension_numbers<[1], [0], [0], [1], [0, 0, 1, 1], [], []>} : vector<8x128xbf16>, vector<128x10xbf16>, vector<8x10xf32> -> vector<8x10xf32>
    %c0_12 = arith.constant 0 : index
    %c0_13 = arith.constant 0 : index
    %28 = vector.load %arg5[%c0_12, %c0_13] : memref<1x10xf32, #tpu.memory_space<vmem>>, vector<1x10xf32>
    %29 = vector.broadcast %28 : vector<1x10xf32> to vector<8x10xf32>
    %30 = arith.addf %27, %29 : vector<8x10xf32>
    %c0_14 = arith.constant 0 : index
    %c0_15 = arith.constant 0 : index
    %31 = vector.load %arg6[%c0_14, %c0_15] : memref<8x10xf32, #tpu.memory_space<vmem>>, vector<8x10xf32>
    tpu.vector_store %arg6[%c0_14, %c0_15], %30 {strides = array<i32>} : memref<8x10xf32, #tpu.memory_space<vmem>>, vector<8x10xf32>,
    return
  }
  func.func @transform_0(%arg0: i32) -> (i32, i32) {
    %c0_i32 = arith.constant 0 : i32
    %c0_i32_0 = arith.constant 0 : i32
    return %arg0, %c0_i32 : i32, i32
  }
  func.func @transform_1(%arg0: i32) -> (i32, i32) {
    %c0_i32 = arith.constant 0 : i32
    %c0_i32_0 = arith.constant 0 : i32
    %c0_i32_1 = arith.constant 0 : i32
    return %c0_i32, %c0_i32_0 : i32, i32
  }
  func.func @transform_2(%arg0: i32) -> (i32, i32) {
    %c0_i32 = arith.constant 0 : i32
    %c0_i32_0 = arith.constant 0 : i32
    %c0_i32_1 = arith.constant 0 : i32
    return %c0_i32, %c0_i32_0 : i32, i32
  }
  func.func @transform_3(%arg0: i32) -> (i32, i32) {
    %c0_i32 = arith.constant 0 : i32
    %c0_i32_0 = arith.constant 0 : i32
    %c0_i32_1 = arith.constant 0 : i32
    return %c0_i32, %c0_i32_0 : i32, i32
  }
  func.func @transform_4(%arg0: i32) -> (i32, i32) {
    %c0_i32 = arith.constant 0 : i32
    %c0_i32_0 = arith.constant 0 : i32
    %c0_i32_1 = arith.constant 0 : i32
    return %c0_i32, %c0_i32_0 : i32, i32
  }
  func.func @transform_5(%arg0: i32) -> (i32, i32) {
    %c0_i32 = arith.constant 0 : i32
    %c0_i32_0 = arith.constant 0 : i32
    return %arg0, %c0_i32 : i32, i32
  }
}

</mosaic_0001>

<llo_original>
// kernel: _lambda_.10
$region0: #{_lambda_.10}
  #allocation0 [shape = 'u32[]', space=smem, size = 0x4, offset = 0x4, fixed_abs, tag = 'smem constant byte address 0x4 - core index']
  #allocation1 [shape = 'u32[144,128]{1,0:T(1,128)}', space=vmem, size = 0x12000, scoped, tag = 'internal scratch']
  %s0 = inlined_call_operand.vmem [shape: f32[32,192], index: 0, kind: input, shape index: {}]
  %s1 = inlined_call_operand.vmem [shape: f32[1,192], index: 1, kind: input, shape index: {}]
  %s2 = inlined_call_operand.vmem [shape: f32[1,192], index: 2, kind: input, shape index: {}]
  %s3 = inlined_call_operand.vmem [shape: bf16[192,128], index: 3, kind: input, shape index: {}]
  %s4 = inlined_call_operand.vmem [shape: f32[1,128], index: 4, kind: input, shape index: {}]
  %s5 = inlined_call_operand.vmem [shape: f32[32,128], index: 5, kind: output, shape index: {}]
  %s6 = sld [smem:[#allocation0]]
  $region53: #{_lambda_.10} parent=0
    _
  %s8 = ssub.s32 1, %s6
  %s9 = scalar_select 0, %s8, %s6
  loop: start=0, step=1, limit=6
  $region2: #{_lambda_.10} parent=0 // loop_pre_header
    _
  $region3: #{_lambda_.10} parent=0 // loop_header
    %s11 = sphi 0, %s15
    %p12 = scmp.ge.s32.totalorder %s11, 6
    %s21 = sphi 0, %s23
    %s24 = sphi 0, %s21
    %s25 = sphi 0, %s24
    %s41 = sphi 0, %s25
    %s45 = sphi 0, %s45
    %s47 = sphi 0, %s45
    %s48 = sphi 0, %s47
    %s62 = sphi 0, %s48
    %s66 = sphi 0, %s66
    %s68 = sphi 0, %s66
    %s69 = sphi 0, %s68
    %s83 = sphi 0, %s69
    %s87 = sphi 0, %s87
    %s89 = sphi 0, %s87
    %s90 = sphi 0, %s89
    %s104 = sphi 0, %s90
    %s108 = sphi 0, %s108
    %s110 = sphi 0, %s108
    %s111 = sphi 0, %s110
    %s125 = sphi 0, %s111
    %s131 = sphi 0, %s133
    %s134 = sphi 0, %s131
    %s135 = sphi 0, %s134
    %s151 = sphi 0, %s135
  $region4: #{_lambda_.10} parent=0 // loop_header_branch
    %14 = sbr.rel (%p12) target = $region8
  $region5: #{_lambda_.10} parent=0 // loop_body
    %s16 = ssub.s32 %s11, 1
    %s17 = ssub.s32 %s11, 2
    %s18 = sadd.s32 %s11, 1
    %s19 = ssub.s32 %s11, %s18
    %p20 = scmp.eq.s32.totalorder %s19, 0
    %s22 = sadd.s32 %s21, 1
    %s23 = scalar_select %p20, %s21, %s22
    %p26 = pneg %p20
    %p27 = scmp.eq.s32.totalorder %s11, 3
    %p28 = por %p26, %p27
    %p29 = scmp.ne.s32.totalorder %s21, %s24
    %p30 = scmp.eq.s32.totalorder %s11, 0
    %p31 = por %p29, %p30
    %p32 = scmp.ne.s32.totalorder %s21, %s24
    %p33 = scmp.eq.s32.totalorder %s16, 3
    %p34 = por %p32, %p33
    %p35 = scmp.ne.s32.totalorder %s24, %s25
    %p36 = scmp.eq.s32.totalorder %s16, 0
    %p37 = por %p35, %p36
    %p38 = scmp.ne.s32.totalorder %s24, %s25
    %p39 = scmp.eq.s32.totalorder %s17, 3
    %p40 = por %p38, %p39
    %p42 = scmp.ne.s32.totalorder %s25, %s41
    %p43 = scmp.eq.s32.totalorder %s17, 0
    %p44 = por %p42, %p43
    %s46 = sadd.s32 %s45, 1
    %p49 = scmp.eq.s32.totalorder %s11, 3
    %p50 = scmp.ne.s32.totalorder %s45, %s47
    %p51 = scmp.eq.s32.totalorder %s11, 0
    %p52 = por %p50, %p51
    %p53 = scmp.ne.s32.totalorder %s45, %s47
    %p54 = scmp.eq.s32.totalorder %s16, 3
    %p55 = por %p53, %p54
    %p56 = scmp.ne.s32.totalorder %s47, %s48
    %p57 = scmp.eq.s32.totalorder %s16, 0
    %p58 = por %p56, %p57
    %p59 = scmp.ne.s32.totalorder %s47, %s48
    %p60 = scmp.eq.s32.totalorder %s17, 3
    %p61 = por %p59, %p60
    %p63 = scmp.ne.s32.totalorder %s48, %s62
    %p64 = scmp.eq.s32.totalorder %s17, 0
    %p65 = por %p63, %p64
    %s67 = sadd.s32 %s66, 1
    %p70 = scmp.eq.s32.totalorder %s11, 3
    %p71 = scmp.ne.s32.totalorder %s66, %s68
    %p72 = scmp.eq.s32.totalorder %s11, 0
    %p73 = por %p71, %p72
    %p74 = scmp.ne.s32.totalorder %s66, %s68
    %p75 = scmp.eq.s32.totalorder %s16, 3
    %p76 = por %p74, %p75
    %p77 = scmp.ne.s32.totalorder %s68, %s69
    %p78 = scmp.eq.s32.totalorder %s16, 0
    %p79 = por %p77, %p78
    %p80 = scmp.ne.s32.totalorder %s68, %s69
    %p81 = scmp.eq.s32.totalorder %s17, 3
    %p82 = por %p80, %p81
    %p84 = scmp.ne.s32.totalorder %s69, %s83
    %p85 = scmp.eq.s32.totalorder %s17, 0
    %p86 = por %p84, %p85
    %s88 = sadd.s32 %s87, 1
    %p91 = scmp.eq.s32.totalorder %s11, 3
    %p92 = scmp.ne.s32.totalorder %s87, %s89
    %p93 = scmp.eq.s32.totalorder %s11, 0
    %p94 = por %p92, %p93
    %p95 = scmp.ne.s32.totalorder %s87, %s89
    %p96 = scmp.eq.s32.totalorder %s16, 3
    %p97 = por %p95, %p96
    %p98 = scmp.ne.s32.totalorder %s89, %s90
    %p99 = scmp.eq.s32.totalorder %s16, 0
    %p100 = por %p98, %p99
    %p101 = scmp.ne.s32.totalorder %s89, %s90
    %p102 = scmp.eq.s32.totalorder %s17, 3
    %p103 = por %p101, %p102
    %p105 = scmp.ne.s32.totalorder %s90, %s104
    %p106 = scmp.eq.s32.totalorder %s17, 0
    %p107 = por %p105, %p106
    %s109 = sadd.s32 %s108, 1
    %p112 = scmp.eq.s32.totalorder %s11, 3
    %p113 = scmp.ne.s32.totalorder %s108, %s110
    %p114 = scmp.eq.s32.totalorder %s11, 0
    %p115 = por %p113, %p114
    %p116 = scmp.ne.s32.totalorder %s108, %s110
    %p117 = scmp.eq.s32.totalorder %s16, 3
    %p118 = por %p116, %p117
    %p119 = scmp.ne.s32.totalorder %s110, %s111
    %p120 = scmp.eq.s32.totalorder %s16, 0
    %p121 = por %p119, %p120
    %p122 = scmp.ne.s32.totalorder %s110, %s111
    %p123 = scmp.eq.s32.totalorder %s17, 3
    %p124 = por %p122, %p123
    %p126 = scmp.ne.s32.totalorder %s111, %s125
    %p127 = scmp.eq.s32.totalorder %s17, 0
    %p128 = por %p126, %p127
    %s129 = ssub.s32 %s11, %s18
    %p130 = scmp.eq.s32.totalorder %s129, 0
    %s132 = sadd.s32 %s131, 1
    %s133 = scalar_select %p130, %s131, %s132
    %p136 = pneg %p130
    %p137 = scmp.eq.s32.totalorder %s11, 3
    %p138 = por %p136, %p137
    %p139 = scmp.ne.s32.totalorder %s131, %s134
    %p140 = scmp.eq.s32.totalorder %s11, 0
    %p141 = por %p139, %p140
    %p142 = scmp.ne.s32.totalorder %s131, %s134
    %p143 = scmp.eq.s32.totalorder %s16, 3
    %p144 = por %p142, %p143
    %p145 = scmp.ne.s32.totalorder %s134, %s135
    %p146 = scmp.eq.s32.totalorder %s16, 0
    %p147 = por %p145, %p146
    %p148 = scmp.ne.s32.totalorder %s134, %s135
    %p149 = scmp.eq.s32.totalorder %s17, 3
    %p150 = por %p148, %p149
    %p152 = scmp.ne.s32.totalorder %s135, %s151
    %p153 = scmp.eq.s32.totalorder %s17, 0
    %p154 = por %p152, %p153
    %p155 = scmp.le.s32.totalorder 1, %s11
    %p156 = scmp.lt.s32.totalorder %s11, 5
    %p157 = pnand %p155, %p156
    %p158 = pneg %p157
    // Predicated region
    $region9: #{_lambda_.10} parent=5 // pred_check
      _
    $region10: #{_lambda_.10} parent=5 // pred_check_branch
      %160 = sbr.rel (%p157) target = $region12
    $region11: #{_lambda_.10} parent=5 // pred_region
      %s161 = ssub.s32 %s11, 1
      // Predicated region
      $region13: #{_lambda_.10} parent=11 // pred_check
        %p162 = pneg %p58
      $region14: #{_lambda_.10} parent=11 // pred_check_branch
        %164 = sbr.rel (%p162) target = $region16
      $region15: #{_lambda_.10} parent=11 // pred_region
        _
      $region16: #{_lambda_.10} parent=11 // pred_fallthru
        _
      // Predicated region
      $region17: #{_lambda_.10} parent=11 // pred_check
        %p165 = pneg %p79
      $region18: #{_lambda_.10} parent=11 // pred_check_branch
        %167 = sbr.rel (%p165) target = $region20
      $region19: #{_lambda_.10} parent=11 // pred_region
        _
      $region20: #{_lambda_.10} parent=11 // pred_fallthru
        _
      // Predicated region
      $region21: #{_lambda_.10} parent=11 // pred_check
        %p168 = pneg %p100
      $region22: #{_lambda_.10} parent=11 // pred_check_branch
        %170 = sbr.rel (%p168) target = $region24
      $region23: #{_lambda_.10} parent=11 // pred_region
        _
      $region24: #{_lambda_.10} parent=11 // pred_fallthru
        _
      // Predicated region
      $region25: #{_lambda_.10} parent=11 // pred_check
        %p171 = pneg %p121
      $region26: #{_lambda_.10} parent=11 // pred_check_branch
        %173 = sbr.rel (%p171) target = $region28
      $region27: #{_lambda_.10} parent=11 // pred_region
        _
      $region28: #{_lambda_.10} parent=11 // pred_fallthru
        _
    $region12: #{_lambda_.10} parent=5 // pred_fallthru
      _
    %p174 = scmp.lt.s32.totalorder %s11, 4
    // Predicated region
    $region29: #{_lambda_.10} parent=5 // pred_check
      %p175 = pneg %p174
    $region30: #{_lambda_.10} parent=5 // pred_check_branch
      %177 = sbr.rel (%p175) target = $region32
    $region31: #{_lambda_.10} parent=5 // pred_region
      // Predicated region
      $region33: #{_lambda_.10} parent=31 // pred_check
        %p178 = pneg %p31
      $region34: #{_lambda_.10} parent=31 // pred_check_branch
        %180 = sbr.rel (%p178) target = $region36
      $region35: #{_lambda_.10} parent=31 // pred_region
        %p181 = scmp.lt.s32.totalorder %s11, 3
        %s182 = scalar_select %p181, %s11, 3
        %s183 = smul.addr %s182, 2
        %s184 = smul.addr %s183, 8
        %s185 = scalar_lea.vmem %s0, %s184
      $region36: #{_lambda_.10} parent=31 // pred_fallthru
        _
    $region32: #{_lambda_.10} parent=5 // pred_fallthru
      _
    %p186 = scmp.le.s32.totalorder 1, %s11
    %p187 = scmp.lt.s32.totalorder %s11, 5
    %p188 = pnand %p186, %p187
    %p189 = pneg %p188
    // Predicated region
    $region37: #{_lambda_.10} parent=5 // pred_check
      _
    $region38: #{_lambda_.10} parent=5 // pred_check_branch
      %191 = sbr.rel (%p188) target = $region40
    $region39: #{_lambda_.10} parent=5 // pred_region
      %s192 = ssub.s32 %s11, 1
      %p193 = scmp.lt.s32.totalorder %s16, 3
      %s194 = scalar_select %p193, %s16, 3
      %s195 = smul.addr %s194, 2
      %s196 = smul.addr %s195, 8
      %s197 = scalar_lea.vmem %s0, %s196
      %p198 = pneg %p37
      %p199 = pneg %p34
      %p200 = pneg %p58
      %p201 = pneg %p55
      %p202 = pneg %p79
      %p203 = pneg %p76
      %p204 = pneg %p100
      %p205 = pneg %p97
      %p206 = pneg %p121
      %p207 = pneg %p118
      %p208 = pneg %p147
      %p209 = pneg %p144
      %p210 = scmp.lt.s32.totalorder %s16, 3
      %s211 = scalar_select %p210, %s16, 3
      %s212 = smul.addr %s211, 8
      %s213 = scalar_lea.vmem %s5, %s212
      %p214 = scmp.lt.s32.totalorder %s16, 3
      %s215 = scalar_select %p214, %s16, 3
      %s216 = smul.addr %s215, 2
      %s217 = smul.addr %s216, 8
      %s218 = scalar_lea.vmem %s0, %s217
      %p219 = scmp.lt.s32.totalorder %s16, 3
      %s220 = scalar_select %p219, %s16, 3
      %s221 = smul.addr %s220, 8
      %s222 = scalar_lea.vmem %s5, %s221
      %v224 = vld [vmem:[%s218] sm:$0xff]
      %v225 = vld [vmem:[%s218 + $0x8] sm:$0xff]
      %v226 = vpack.c.bf16 %v224, %v224
      %v227 = vpack.c.bf16 %v225, %v225
      %v228 = vld [vmem:[%s3] sm:$0xf]
      %v229 = vld [vmem:[%s3 + $0x4] sm:$0xf]
      %v230 = vld [vmem:[%s3 + $0x8] sm:$0xf]
      %v231 = vld [vmem:[%s3 + $0xc] sm:$0xf]
      %v232 = vld [vmem:[%s3 + $0x10] sm:$0xf]
      %v233 = vld [vmem:[%s3 + $0x14] sm:$0xf]
      %v234 = vld [vmem:[%s3 + $0x18] sm:$0xf]
      %v235 = vld [vmem:[%s3 + $0x1c] sm:$0xf]
      %v236 = vld [vmem:[%s3 + $0x20] sm:$0xf]
      %v237 = vld [vmem:[%s3 + $0x24] sm:$0xf]
      %v238 = vld [vmem:[%s3 + $0x28] sm:$0xf]
      %v239 = vld [vmem:[%s3 + $0x2c] sm:$0xf]
      %v240 = vld [vmem:[%s3 + $0x30] sm:$0xf]
      %v241 = vld [vmem:[%s3 + $0x34] sm:$0xf]
      %v242 = vld [vmem:[%s3 + $0x38] sm:$0xf]
      %v243 = vld [vmem:[%s3 + $0x3c] sm:$0xf]
      %v244 = vld [vmem:[%s3 + $0x40] sm:$0xf]
      %v245 = vld [vmem:[%s3 + $0x44] sm:$0xf]
      %v246 = vld [vmem:[%s3 + $0x48] sm:$0xf]
      %v247 = vld [vmem:[%s3 + $0x4c] sm:$0xf]
      %v248 = vld [vmem:[%s3 + $0x50] sm:$0xf]
      %v249 = vld [vmem:[%s3 + $0x54] sm:$0xf]
      %v250 = vld [vmem:[%s3 + $0x58] sm:$0xf]
      %v251 = vld [vmem:[%s3 + $0x5c] sm:$0xf]
      %v252 = vld [vmem:[%s4] sm:$0x1]
      %v254 = vlaneseq
      %v255 = vshrl.u32 %v254, 7
      %v256 = vsub.s32 0, %v255
      %v257 = vrot.slane %v252, %v256
      %v283 = vunpack.c.l.b16 %v228
      %v284 = vunpack.c.l.b16 %v229
      %v285 = vunpack.c.l.b16 %v230
      %v286 = vunpack.c.l.b16 %v231
      %v287 = vunpack.c.l.b16 %v232
      %v288 = vunpack.c.l.b16 %v233
      %v289 = vunpack.c.l.b16 %v234
      %v290 = vunpack.c.l.b16 %v235
      %v291 = vunpack.c.l.b16 %v236
      %v292 = vunpack.c.l.b16 %v237
      %v293 = vunpack.c.l.b16 %v238
      %v294 = vunpack.c.l.b16 %v239
      %v295 = vunpack.c.l.b16 %v240
      %v296 = vunpack.c.l.b16 %v241
      %v297 = vunpack.c.l.b16 %v242
      %v298 = vunpack.c.l.b16 %v243
      %v299 = vunpack.c.l.b16 %v244
      %v300 = vunpack.c.l.b16 %v245
      %v301 = vunpack.c.l.b16 %v246
      %v302 = vunpack.c.l.b16 %v247
      %v303 = vunpack.c.l.b16 %v248
      %v304 = vunpack.c.l.b16 %v249
      %v305 = vunpack.c.l.b16 %v250
      %v306 = vunpack.c.l.b16 %v251
      %v307 = vpack.c.b16 %v284, %v283
      %v308 = vpack.c.b16 %v286, %v285
      %v309 = vpack.c.b16 %v288, %v287
      %v310 = vpack.c.b16 %v290, %v289
      %v311 = vpack.c.b16 %v292, %v291
      %v312 = vpack.c.b16 %v294, %v293
      %v313 = vpack.c.b16 %v296, %v295
      %v314 = vpack.c.b16 %v298, %v297
      %v315 = vpack.c.b16 %v300, %v299
      %v316 = vpack.c.b16 %v302, %v301
      %v317 = vpack.c.b16 %v304, %v303
      %v318 = vpack.c.b16 %v306, %v305
      %vm331 = vcmask 523264
      %v333 = vsel %vm331, %v227, 0
      %335 = vmatprep.subr.bf16.mxu0 0
      %336 = vmatpush1.bf16.msra.mxu0 %v307
      %337 = vmatprep.subr.bf16.mxu0 0
      %338 = vmatpush1.bf16.msra.mxu0 %v308
      %339 = vmatprep.subr.bf16.mxu0 0
      %340 = vmatpush1.bf16.msra.mxu0 %v309
      %341 = vmatprep.subr.bf16.mxu0 0
      %342 = vmatpush1.bf16.msra.mxu0 %v310
      %343 = vmatprep.subr.bf16.mxu0 0
      %344 = vmatpush1.bf16.msra.mxu0 %v311
      %345 = vmatprep.subr.bf16.mxu0 0
      %346 = vmatpush1.bf16.msra.mxu0 %v312
      %347 = vmatprep.subr.bf16.mxu0 0
      %348 = vmatpush1.bf16.msra.mxu0 %v313
      %349 = vmatprep.subr.bf16.mxu0 0
      %350 = vmatpush1.bf16.msra.mxu0 %v314
      %351 = vmatprep.subr.bf16.mxu0 0
      %352 = vmatpush1.bf16.msra.mxu0 %v315
      %353 = vmatprep.subr.bf16.mxu0 0
      %354 = vmatpush1.bf16.msra.mxu0 %v316
      %355 = vmatprep.subr.bf16.mxu0 0
      %356 = vmatpush1.bf16.msra.mxu0 %v317
      %357 = vmatprep.subr.bf16.mxu0 0
      %358 = vmatpush1.bf16.msra.mxu0 %v318
      %359 = vmatprep.subr.bf16.mxu0 0
      %360 = vmatpush1.bf16.msra.mxu0 0
      %361 = vmatprep.subr.bf16.mxu0 0
      %362 = vmatpush1.bf16.msra.mxu0 0
      %363 = vmatprep.subr.bf16.mxu0 0
      %364 = vmatpush1.bf16.msra.mxu0 0
      %365 = vmatprep.subr.bf16.mxu0 0
      %366 = vmatpush1.bf16.msra.mxu0 0
      %367 = vmatprep.mubr.bf16.mxu0 %v333
      %368 = vmatmul.mubr.bf16.gmra.mrb[0].mxu0 %v226
      %v369 = vpop.f32.mrb[0].mxu0
      %v370 = vadd.f32 %v257, %v369
      %v371 = vpop.f32.mrb[0].mxu0
      %v372 = vpop.f32.mrb[0].mxu0
      %v373 = vpop.f32.mrb[0].mxu0
      %374 = vdwg.mxu0
      %375 = vst [vmem:[%s222] sm:$0xff] %v370
      %p376 = scmp.lt.s32.totalorder %s16, 3
      %s377 = scalar_select %p376, %s16, 3
      %s378 = smul.addr %s377, 8
      %s379 = scalar_lea.vmem %s5, %s378
      // Predicated region
      $region41: #{_lambda_.10} parent=39 // pred_check
        %p380 = pneg %p144
      $region42: #{_lambda_.10} parent=39 // pred_check_branch
        %382 = sbr.rel (%p380) target = $region44
      $region43: #{_lambda_.10} parent=39 // pred_region
        _
      $region44: #{_lambda_.10} parent=39 // pred_fallthru
        _
    $region40: #{_lambda_.10} parent=5 // pred_fallthru
      _
    %p383 = scmp.le.s32.totalorder 2, %s11
    // Predicated region
    $region45: #{_lambda_.10} parent=5 // pred_check
      %p384 = pneg %p383
    $region46: #{_lambda_.10} parent=5 // pred_check_branch
      %386 = sbr.rel (%p384) target = $region48
    $region47: #{_lambda_.10} parent=5 // pred_region
      %s387 = ssub.s32 %s11, 2
      // Predicated region
      $region49: #{_lambda_.10} parent=47 // pred_check
        %p388 = pneg %p150
      $region50: #{_lambda_.10} parent=47 // pred_check_branch
        %390 = sbr.rel (%p388) target = $region52
      $region51: #{_lambda_.10} parent=47 // pred_region
        %p391 = scmp.lt.s32.totalorder %s17, 3
        %s392 = scalar_select %p391, %s17, 3
        %s393 = smul.addr %s392, 8
        %s394 = scalar_lea.vmem %s5, %s393
      $region52: #{_lambda_.10} parent=47 // pred_fallthru
        _
    $region48: #{_lambda_.10} parent=5 // pred_fallthru
      _
  $region6: #{_lambda_.10} parent=0 // loop_footer
    %s15 = sadd.s32 1, %s11
  $region7: #{_lambda_.10} parent=0 // loop_footer_branch
    %10 = sbr.rel target = $region3
  $region8: #{_lambda_.10} parent=0 // loop_exit
    _

// kernel: _lambda_.11
$region0: #{_lambda_.11}
  #allocation0 [shape = 'u32[]', space=smem, size = 0x4, offset = 0x4, fixed_abs, tag = 'smem constant byte address 0x4 - core index']
  #allocation1 [shape = 'u32[144,128]{1,0:T(1,128)}', space=vmem, size = 0x12000, scoped, tag = 'internal scratch']
  %s0 = inlined_call_operand.vmem [shape: f32[48,128], index: 0, kind: input, shape index: {}]
  %s1 = inlined_call_operand.vmem [shape: f32[1,128], index: 1, kind: input, shape index: {}]
  %s2 = inlined_call_operand.vmem [shape: f32[1,128], index: 2, kind: input, shape index: {}]
  %s3 = inlined_call_operand.vmem [shape: bf16[128,1536], index: 3, kind: input, shape index: {}]
  %s4 = inlined_call_operand.vmem [shape: f32[1,1536], index: 4, kind: input, shape index: {}]
  %s5 = inlined_call_operand.vmem [shape: bf16[48,1536], index: 5, kind: output, shape index: {}]
  %s6 = sld [smem:[#allocation0]]
  $region53: #{_lambda_.11} parent=0
    _
  %s8 = ssub.s32 1, %s6
  %s9 = scalar_select 0, %s8, %s6
  loop: start=0, step=1, limit=5
  $region2: #{_lambda_.11} parent=0 // loop_pre_header
    _
  $region3: #{_lambda_.11} parent=0 // loop_header
    %s11 = sphi 0, %s15
    %p12 = scmp.ge.s32.totalorder %s11, 5
    %s21 = sphi 0, %s23
    %s24 = sphi 0, %s21
    %s25 = sphi 0, %s24
    %s41 = sphi 0, %s25
    %s45 = sphi 0, %s45
    %s47 = sphi 0, %s45
    %s48 = sphi 0, %s47
    %s62 = sphi 0, %s48
    %s66 = sphi 0, %s66
    %s68 = sphi 0, %s66
    %s69 = sphi 0, %s68
    %s83 = sphi 0, %s69
    %s87 = sphi 0, %s87
    %s89 = sphi 0, %s87
    %s90 = sphi 0, %s89
    %s104 = sphi 0, %s90
    %s108 = sphi 0, %s108
    %s110 = sphi 0, %s108
    %s111 = sphi 0, %s110
    %s125 = sphi 0, %s111
    %s131 = sphi 0, %s133
    %s134 = sphi 0, %s131
    %s135 = sphi 0, %s134
    %s151 = sphi 0, %s135
  $region4: #{_lambda_.11} parent=0 // loop_header_branch
    %14 = sbr.rel (%p12) target = $region8
  $region5: #{_lambda_.11} parent=0 // loop_body
    %s16 = ssub.s32 %s11, 1
    %s17 = ssub.s32 %s11, 2
    %s18 = sadd.s32 %s11, 1
    %s19 = ssub.s32 %s11, %s18
    %p20 = scmp.eq.s32.totalorder %s19, 0
    %s22 = sadd.s32 %s21, 1
    %s23 = scalar_select %p20, %s21, %s22
    %p26 = pneg %p20
    %p27 = scmp.eq.s32.totalorder %s11, 2
    %p28 = por %p26, %p27
    %p29 = scmp.ne.s32.totalorder %s21, %s24
    %p30 = scmp.eq.s32.totalorder %s11, 0
    %p31 = por %p29, %p30
    %p32 = scmp.ne.s32.totalorder %s21, %s24
    %p33 = scmp.eq.s32.totalorder %s16, 2
    %p34 = por %p32, %p33
    %p35 = scmp.ne.s32.totalorder %s24, %s25
    %p36 = scmp.eq.s32.totalorder %s16, 0
    %p37 = por %p35, %p36
    %p38 = scmp.ne.s32.totalorder %s24, %s25
    %p39 = scmp.eq.s32.totalorder %s17, 2
    %p40 = por %p38, %p39
    %p42 = scmp.ne.s32.totalorder %s25, %s41
    %p43 = scmp.eq.s32.totalorder %s17, 0
    %p44 = por %p42, %p43
    %s46 = sadd.s32 %s45, 1
    %p49 = scmp.eq.s32.totalorder %s11, 2
    %p50 = scmp.ne.s32.totalorder %s45, %s47
    %p51 = scmp.eq.s32.totalorder %s11, 0
    %p52 = por %p50, %p51
    %p53 = scmp.ne.s32.totalorder %s45, %s47
    %p54 = scmp.eq.s32.totalorder %s16, 2
    %p55 = por %p53, %p54
    %p56 = scmp.ne.s32.totalorder %s47, %s48
    %p57 = scmp.eq.s32.totalorder %s16, 0
    %p58 = por %p56, %p57
    %p59 = scmp.ne.s32.totalorder %s47, %s48
    %p60 = scmp.eq.s32.totalorder %s17, 2
    %p61 = por %p59, %p60
    %p63 = scmp.ne.s32.totalorder %s48, %s62
    %p64 = scmp.eq.s32.totalorder %s17, 0
    %p65 = por %p63, %p64
    %s67 = sadd.s32 %s66, 1
    %p70 = scmp.eq.s32.totalorder %s11, 2
    %p71 = scmp.ne.s32.totalorder %s66, %s68
    %p72 = scmp.eq.s32.totalorder %s11, 0
    %p73 = por %p71, %p72
    %p74 = scmp.ne.s32.totalorder %s66, %s68
    %p75 = scmp.eq.s32.totalorder %s16, 2
    %p76 = por %p74, %p75
    %p77 = scmp.ne.s32.totalorder %s68, %s69
    %p78 = scmp.eq.s32.totalorder %s16, 0
    %p79 = por %p77, %p78
    %p80 = scmp.ne.s32.totalorder %s68, %s69
    %p81 = scmp.eq.s32.totalorder %s17, 2
    %p82 = por %p80, %p81
    %p84 = scmp.ne.s32.totalorder %s69, %s83
    %p85 = scmp.eq.s32.totalorder %s17, 0
    %p86 = por %p84, %p85
    %s88 = sadd.s32 %s87, 1
    %p91 = scmp.eq.s32.totalorder %s11, 2
    %p92 = scmp.ne.s32.totalorder %s87, %s89
    %p93 = scmp.eq.s32.totalorder %s11, 0
    %p94 = por %p92, %p93
    %p95 = scmp.ne.s32.totalorder %s87, %s89
    %p96 = scmp.eq.s32.totalorder %s16, 2
    %p97 = por %p95, %p96
    %p98 = scmp.ne.s32.totalorder %s89, %s90
    %p99 = scmp.eq.s32.totalorder %s16, 0
    %p100 = por %p98, %p99
    %p101 = scmp.ne.s32.totalorder %s89, %s90
    %p102 = scmp.eq.s32.totalorder %s17, 2
    %p103 = por %p101, %p102
    %p105 = scmp.ne.s32.totalorder %s90, %s104
    %p106 = scmp.eq.s32.totalorder %s17, 0
    %p107 = por %p105, %p106
    %s109 = sadd.s32 %s108, 1
    %p112 = scmp.eq.s32.totalorder %s11, 2
    %p113 = scmp.ne.s32.totalorder %s108, %s110
    %p114 = scmp.eq.s32.totalorder %s11, 0
    %p115 = por %p113, %p114
    %p116 = scmp.ne.s32.totalorder %s108, %s110
    %p117 = scmp.eq.s32.totalorder %s16, 2
    %p118 = por %p116, %p117
    %p119 = scmp.ne.s32.totalorder %s110, %s111
    %p120 = scmp.eq.s32.totalorder %s16, 0
    %p121 = por %p119, %p120
    %p122 = scmp.ne.s32.totalorder %s110, %s111
    %p123 = scmp.eq.s32.totalorder %s17, 2
    %p124 = por %p122, %p123
    %p126 = scmp.ne.s32.totalorder %s111, %s125
    %p127 = scmp.eq.s32.totalorder %s17, 0
    %p128 = por %p126, %p127
    %s129 = ssub.s32 %s11, %s18
    %p130 = scmp.eq.s32.totalorder %s129, 0
    %s132 = sadd.s32 %s131, 1
    %s133 = scalar_select %p130, %s131, %s132
    %p136 = pneg %p130
    %p137 = scmp.eq.s32.totalorder %s11, 2
    %p138 = por %p136, %p137
    %p139 = scmp.ne.s32.totalorder %s131, %s134
    %p140 = scmp.eq.s32.totalorder %s11, 0
    %p141 = por %p139, %p140
    %p142 = scmp.ne.s32.totalorder %s131, %s134
    %p143 = scmp.eq.s32.totalorder %s16, 2
    %p144 = por %p142, %p143
    %p145 = scmp.ne.s32.totalorder %s134, %s135
    %p146 = scmp.eq.s32.totalorder %s16, 0
    %p147 = por %p145, %p146
    %p148 = scmp.ne.s32.totalorder %s134, %s135
    %p149 = scmp.eq.s32.totalorder %s17, 2
    %p150 = por %p148, %p149
    %p152 = scmp.ne.s32.totalorder %s135, %s151
    %p153 = scmp.eq.s32.totalorder %s17, 0
    %p154 = por %p152, %p153
    %p155 = scmp.le.s32.totalorder 1, %s11
    %p156 = scmp.lt.s32.totalorder %s11, 4
    %p157 = pnand %p155, %p156
    %p158 = pneg %p157
    // Predicated region
    $region9: #{_lambda_.11} parent=5 // pred_check
      _
    $region10: #{_lambda_.11} parent=5 // pred_check_branch
      %160 = sbr.rel (%p157) target = $region12
    $region11: #{_lambda_.11} parent=5 // pred_region
      %s161 = ssub.s32 %s11, 1
      // Predicated region
      $region13: #{_lambda_.11} parent=11 // pred_check
        %p162 = pneg %p58
      $region14: #{_lambda_.11} parent=11 // pred_check_branch
        %164 = sbr.rel (%p162) target = $region16
      $region15: #{_lambda_.11} parent=11 // pred_region
        _
      $region16: #{_lambda_.11} parent=11 // pred_fallthru
        _
      // Predicated region
      $region17: #{_lambda_.11} parent=11 // pred_check
        %p165 = pneg %p79
      $region18: #{_lambda_.11} parent=11 // pred_check_branch
        %167 = sbr.rel (%p165) target = $region20
      $region19: #{_lambda_.11} parent=11 // pred_region
        _
      $region20: #{_lambda_.11} parent=11 // pred_fallthru
        _
      // Predicated region
      $region21: #{_lambda_.11} parent=11 // pred_check
        %p168 = pneg %p100
      $region22: #{_lambda_.11} parent=11 // pred_check_branch
        %170 = sbr.rel (%p168) target = $region24
      $region23: #{_lambda_.11} parent=11 // pred_region
        _
      $region24: #{_lambda_.11} parent=11 // pred_fallthru
        _
      // Predicated region
      $region25: #{_lambda_.11} parent=11 // pred_check
        %p171 = pneg %p121
      $region26: #{_lambda_.11} parent=11 // pred_check_branch
        %173 = sbr.rel (%p171) target = $region28
      $region27: #{_lambda_.11} parent=11 // pred_region
        _
      $region28: #{_lambda_.11} parent=11 // pred_fallthru
        _
    $region12: #{_lambda_.11} parent=5 // pred_fallthru
      _
    %p174 = scmp.lt.s32.totalorder %s11, 3
    // Predicated region
    $region29: #{_lambda_.11} parent=5 // pred_check
      %p175 = pneg %p174
    $region30: #{_lambda_.11} parent=5 // pred_check_branch
      %177 = sbr.rel (%p175) target = $region32
    $region31: #{_lambda_.11} parent=5 // pred_region
      // Predicated region
      $region33: #{_lambda_.11} parent=31 // pred_check
        %p178 = pneg %p31
      $region34: #{_lambda_.11} parent=31 // pred_check_branch
        %180 = sbr.rel (%p178) target = $region36
      $region35: #{_lambda_.11} parent=31 // pred_region
        %s181 = smul.u32 2, %s11
        %p182 = scmp.lt.s32.totalorder %s181, 5
        %s183 = scalar_select %p182, %s181, 5
        %s184 = smul.addr %s183, 8
        %s185 = scalar_lea.vmem %s0, %s184
        %s186 = smul.u32 2, %s11
      $region36: #{_lambda_.11} parent=31 // pred_fallthru
        _
    $region32: #{_lambda_.11} parent=5 // pred_fallthru
      _
    %p187 = scmp.le.s32.totalorder 1, %s11
    %p188 = scmp.lt.s32.totalorder %s11, 4
    %p189 = pnand %p187, %p188
    %p190 = pneg %p189
    // Predicated region
    $region37: #{_lambda_.11} parent=5 // pred_check
      _
    $region38: #{_lambda_.11} parent=5 // pred_check_branch
      %192 = sbr.rel (%p189) target = $region40
    $region39: #{_lambda_.11} parent=5 // pred_region
      %s193 = ssub.s32 %s11, 1
      %s194 = smul.u32 2, %s16
      %p195 = scmp.lt.s32.totalorder %s194, 5
      %s196 = scalar_select %p195, %s194, 5
      %s197 = smul.addr %s196, 8
      %s198 = scalar_lea.vmem %s0, %s197
      %p199 = pneg %p37
      %p200 = pneg %p34
      %p201 = pneg %p58
      %p202 = pneg %p55
      %p203 = pneg %p79
      %p204 = pneg %p76
      %p205 = pneg %p100
      %p206 = pneg %p97
      %p207 = pneg %p121
      %p208 = pneg %p118
      %p209 = pneg %p147
      %p210 = pneg %p144
      %s211 = smul.u32 2, %s16
      %p212 = scmp.lt.s32.totalorder %s211, 5
      %s213 = scalar_select %p212, %s211, 5
      %s214 = smul.addr %s213, 12
      %s215 = smul.addr %s214, 4
      %s216 = scalar_lea.vmem %s5, %s215
      %s217 = smul.u32 2, %s16
      %p218 = scmp.lt.s32.totalorder %s217, 5
      %s219 = scalar_select %p218, %s217, 5
      %s220 = smul.addr %s219, 8
      %s221 = scalar_lea.vmem %s0, %s220
      %s222 = smul.u32 2, %s16
      %s223 = smul.u32 2, %s16
      %p224 = scmp.lt.s32.totalorder %s223, 5
      %s225 = scalar_select %p224, %s223, 5
      %s226 = smul.addr %s225, 12
      %s227 = smul.addr %s226, 4
      %s228 = scalar_lea.vmem %s5, %s227
      %s229 = smul.u32 2, %s16
      %v231 = vld [vmem:[%s221] sm:$0xff]
      %v232 = vld [vmem:[%s221 + $0x8] sm:$0xff]
      %233 = vadd.xlane.f32.xlu0 %v231
      %v234 = vpop.xlane.xlu0 %233
      %235 = vadd.xlane.f32.xlu0 %v232
      %v236 = vpop.xlane.xlu0 %235
      %v237 = vrcp.pop 128.0
      %v238 = vmul.f32 %v234, %v237
      %v239 = vmul.f32 %v236, %v237
      %v240 = vsub.f32 %v231, %v238
      %v241 = vsub.f32 %v232, %v239
      %v242 = vmul.f32 %v240, %v240
      %v243 = vmul.f32 %v241, %v241
      %244 = vadd.xlane.f32.xlu0 %v242
      %v245 = vpop.xlane.xlu0 %244
      %246 = vadd.xlane.f32.xlu0 %v243
      %v247 = vpop.xlane.xlu0 %246
      %v248 = vmul.f32 %v245, %v237
      %v249 = vmul.f32 %v247, %v237
      %v250 = vadd.f32 %v248, 1e-12
      %v251 = vadd.f32 %v249, 1e-12
      %v252 = vrsqrt.pop %v250
      %v253 = vrsqrt.pop %v251
      %v254 = vmul.f32 %v240, %v252
      %v255 = vmul.f32 %v241, %v253
      %v256 = vld [vmem:[%s1] sm:$0x1]
      %v258 = vlaneseq
      %v259 = vshrl.u32 %v258, 7
      %v260 = vsub.s32 0, %v259
      %v261 = vrot.slane %v256, %v260
      %v263 = vmul.f32 %v254, %v261
      %v264 = vmul.f32 %v255, %v261
      %v265 = vld [vmem:[%s2] sm:$0x1]
      %v267 = vlaneseq
      %v268 = vshrl.u32 %v267, 7
      %v269 = vsub.s32 0, %v268
      %v270 = vrot.slane %v265, %v269
      %v272 = vadd.f32 %v263, %v270
      %v273 = vadd.f32 %v264, %v270
      %v274 = vpack.c.bf16 %v273, %v272
      %v275 = vld [vmem:[%s3] sm:$0xff]
      %v276 = vld [vmem:[%s3 + $0x8] sm:$0xff]
      %v277 = vld [vmem:[%s3 + $0x10] sm:$0xff]
      %v278 = vld [vmem:[%s3 + $0x18] sm:$0xff]
      %v279 = vld [vmem:[%s3 + $0x20] sm:$0xff]
      %v280 = vld [vmem:[%s3 + $0x28] sm:$0xff]
      %v281 = vld [vmem:[%s3 + $0x30] sm:$0xff]
      %v282 = vld [vmem:[%s3 + $0x38] sm:$0xff]
      %v283 = vld [vmem:[%s3 + $0x40] sm:$0xff]
      %v284 = vld [vmem:[%s3 + $0x48] sm:$0xff]
      %v285 = vld [vmem:[%s3 + $0x50] sm:$0xff]
      %v286 = vld [vmem:[%s3 + $0x58] sm:$0xff]
      %v287 = vld [vmem:[%s3 + $0x60] sm:$0xff]
      %v288 = vld [vmem:[%s3 + $0x68] sm:$0xff]
      %v289 = vld [vmem:[%s3 + $0x70] sm:$0xff]
      %v290 = vld [vmem:[%s3 + $0x78] sm:$0xff]
      %v291 = vld [vmem:[%s3 + $0x80] sm:$0xff]
      %v292 = vld [vmem:[%s3 + $0x88] sm:$0xff]
      %v293 = vld [vmem:[%s3 + $0x90] sm:$0xff]
      %v294 = vld [vmem:[%s3 + $0x98] sm:$0xff]
      %v295 = vld [vmem:[%s3 + $0xa0] sm:$0xff]
      %v296 = vld [vmem:[%s3 + $0xa8] sm:$0xff]
      %v297 = vld [vmem:[%s3 + $0xb0] sm:$0xff]
      %v298 = vld [vmem:[%s3 + $0xb8] sm:$0xff]
      %v299 = vld [vmem:[%s3 + $0xc0] sm:$0xff]
      %v300 = vld [vmem:[%s3 + $0xc8] sm:$0xff]
      %v301 = vld [vmem:[%s3 + $0xd0] sm:$0xff]
      %v302 = vld [vmem:[%s3 + $0xd8] sm:$0xff]
      %v303 = vld [vmem:[%s3 + $0xe0] sm:$0xff]
      %v304 = vld [vmem:[%s3 + $0xe8] sm:$0xff]
      %v305 = vld [vmem:[%s3 + $0xf0] sm:$0xff]
      %v306 = vld [vmem:[%s3 + $0xf8] sm:$0xff]
      %v307 = vld [vmem:[%s3 + $0x100] sm:$0xff]
      %v308 = vld [vmem:[%s3 + $0x108] sm:$0xff]
      %v309 = vld [vmem:[%s3 + $0x110] sm:$0xff]
      %v310 = vld [vmem:[%s3 + $0x118] sm:$0xff]
      %v311 = vld [vmem:[%s3 + $0x120] sm:$0xff]
      %v312 = vld [vmem:[%s3 + $0x128] sm:$0xff]
      %v313 = vld [vmem:[%s3 + $0x130] sm:$0xff]
      %v314 = vld [vmem:[%s3 + $0x138] sm:$0xff]
      %v315 = vld [vmem:[%s3 + $0x140] sm:$0xff]
      %v316 = vld [vmem:[%s3 + $0x148] sm:$0xff]
      %v317 = vld [vmem:[%s3 + $0x150] sm:$0xff]
      %v318 = vld [vmem:[%s3 + $0x158] sm:$0xff]
      %v319 = vld [vmem:[%s3 + $0x160] sm:$0xff]
      %v320 = vld [vmem:[%s3 + $0x168] sm:$0xff]
      %v321 = vld [vmem:[%s3 + $0x170] sm:$0xff]
      %v322 = vld [vmem:[%s3 + $0x178] sm:$0xff]
      %v323 = vld [vmem:[%s3 + $0x180] sm:$0xff]
      %v324 = vld [vmem:[%s3 + $0x188] sm:$0xff]
      %v325 = vld [vmem:[%s3 + $0x190] sm:$0xff]
      %v326 = vld [vmem:[%s3 + $0x198] sm:$0xff]
      %v327 = vld [vmem:[%s3 + $0x1a0] sm:$0xff]
      %v328 = vld [vmem:[%s3 + $0x1a8] sm:$0xff]
      %v329 = vld [vmem:[%s3 + $0x1b0] sm:$0xff]
      %v330 = vld [vmem:[%s3 + $0x1b8] sm:$0xff]
      %v331 = vld [vmem:[%s3 + $0x1c0] sm:$0xff]
      %v332 = vld [vmem:[%s3 + $0x1c8] sm:$0xff]
      %v333 = vld [vmem:[%s3 + $0x1d0] sm:$0xff]
      %v334 = vld [vmem:[%s3 + $0x1d8] sm:$0xff]
      %v335 = vld [vmem:[%s3 + $0x1e0] sm:$0xff]
      %v336 = vld [vmem:[%s3 + $0x1e8] sm:$0xff]
      %v337 = vld [vmem:[%s3 + $0x1f0] sm:$0xff]
      %v338 = vld [vmem:[%s3 + $0x1f8] sm:$0xff]
      %v339 = vld [vmem:[%s3 + $0x200] sm:$0xff]
      %v340 = vld [vmem:[%s3 + $0x208] sm:$0xff]
      %v341 = vld [vmem:[%s3 + $0x210] sm:$0xff]
      %v342 = vld [vmem:[%s3 + $0x218] sm:$0xff]
      %v343 = vld [vmem:[%s3 + $0x220] sm:$0xff]
      %v344 = vld [vmem:[%s3 + $0x228] sm:$0xff]
      %v345 = vld [vmem:[%s3 + $0x230] sm:$0xff]
      %v346 = vld [vmem:[%s3 + $0x238] sm:$0xff]
      %v347 = vld [vmem:[%s3 + $0x240] sm:$0xff]
      %v348 = vld [vmem:[%s3 + $0x248] sm:$0xff]
      %v349 = vld [vmem:[%s3 + $0x250] sm:$0xff]
      %v350 = vld [vmem:[%s3 + $0x258] sm:$0xff]
      %v351 = vld [vmem:[%s3 + $0x260] sm:$0xff]
      %v352 = vld [vmem:[%s3 + $0x268] sm:$0xff]
      %v353 = vld [vmem:[%s3 + $0x270] sm:$0xff]
      %v354 = vld [vmem:[%s3 + $0x278] sm:$0xff]
      %v355 = vld [vmem:[%s3 + $0x280] sm:$0xff]
      %v356 = vld [vmem:[%s3 + $0x288] sm:$0xff]
      %v357 = vld [vmem:[%s3 + $0x290] sm:$0xff]
      %v358 = vld [vmem:[%s3 + $0x298] sm:$0xff]
      %v359 = vld [vmem:[%s3 + $0x2a0] sm:$0xff]
      %v360 = vld [vmem:[%s3 + $0x2a8] sm:$0xff]
      %v361 = vld [vmem:[%s3 + $0x2b0] sm:$0xff]
      %v362 = vld [vmem:[%s3 + $0x2b8] sm:$0xff]
      %v363 = vld [vmem:[%s3 + $0x2c0] sm:$0xff]
      %v364 = vld [vmem:[%s3 + $0x2c8] sm:$0xff]
      %v365 = vld [vmem:[%s3 + $0x2d0] sm:$0xff]
      %v366 = vld [vmem:[%s3 + $0x2d8] sm:$0xff]
      %v367 = vld [vmem:[%s3 + $0x2e0] sm:$0xff]
      %v368 = vld [vmem:[%s3 + $0x2e8] sm:$0xff]
      %v369 = vld [vmem:[%s3 + $0x2f0] sm:$0xff]
      %v370 = vld [vmem:[%s3 + $0x2f8] sm:$0xff]
      %v371 = vld [vmem:[%s4] sm:$0xff]
      %v372 = vld [vmem:[%s4 + $0x8] sm:$0xf]
      %v375 = vlaneseq
      %v376 = vshrl.u32 %v375, 7
      %v377 = vsub.s32 0, %v376
      %v378 = vrot.slane %v371, %v377
      %v379 = vlaneseq
      %v380 = vshrl.u32 %v379, 7
      %v381 = vsub.s32 1, %v380
      %v382 = vrot.slane %v371, %v381
      %v383 = vlaneseq
      %v384 = vshrl.u32 %v383, 7
      %v385 = vsub.s32 2, %v384
      %v386 = vrot.slane %v371, %v385
      %v387 = vlaneseq
      %v388 = vshrl.u32 %v387, 7
      %v389 = vsub.s32 3, %v388
      %v390 = vrot.slane %v371, %v389
      %v391 = vlaneseq
      %v392 = vshrl.u32 %v391, 7
      %v393 = vsub.s32 4, %v392
      %v394 = vrot.slane %v371, %v393
      %v395 = vlaneseq
      %v396 = vshrl.u32 %v395, 7
      %v397 = vsub.s32 5, %v396
      %v398 = vrot.slane %v371, %v397
      %v399 = vlaneseq
      %v400 = vshrl.u32 %v399, 7
      %v401 = vsub.s32 6, %v400
      %v402 = vrot.slane %v371, %v401
      %v403 = vlaneseq
      %v404 = vshrl.u32 %v403, 7
      %v405 = vsub.s32 7, %v404
      %v406 = vrot.slane %v371, %v405
      %v407 = vlaneseq
      %v408 = vshrl.u32 %v407, 7
      %v409 = vsub.s32 0, %v408
      %v410 = vrot.slane %v372, %v409
      %v411 = vlaneseq
      %v412 = vshrl.u32 %v411, 7
      %v413 = vsub.s32 1, %v412
      %v414 = vrot.slane %v372, %v413
      %v415 = vlaneseq
      %v416 = vshrl.u32 %v415, 7
      %v417 = vsub.s32 2, %v416
      %v418 = vrot.slane %v372, %v417
      %v419 = vlaneseq
      %v420 = vshrl.u32 %v419, 7
      %v421 = vsub.s32 3, %v420
      %v422 = vrot.slane %v372, %v421
      %v531 = vunpack.c.l.b16 %v275
      %v532 = vunpack.c.h.b16 %v275
      %v533 = vunpack.c.l.b16 %v276
      %v534 = vunpack.c.h.b16 %v276
      %v535 = vunpack.c.l.b16 %v277
      %v536 = vunpack.c.h.b16 %v277
      %v537 = vunpack.c.l.b16 %v278
      %v538 = vunpack.c.h.b16 %v278
      %v539 = vunpack.c.l.b16 %v279
      %v540 = vunpack.c.h.b16 %v279
      %v541 = vunpack.c.l.b16 %v280
      %v542 = vunpack.c.h.b16 %v280
      %v543 = vunpack.c.l.b16 %v281
      %v544 = vunpack.c.h.b16 %v281
      %v545 = vunpack.c.l.b16 %v282
      %v546 = vunpack.c.h.b16 %v282
      %v547 = vunpack.c.l.b16 %v283
      %v548 = vunpack.c.h.b16 %v283
      %v549 = vunpack.c.l.b16 %v284
      %v550 = vunpack.c.h.b16 %v284
      %v551 = vunpack.c.l.b16 %v285
      %v552 = vunpack.c.h.b16 %v285
      %v553 = vunpack.c.l.b16 %v286
      %v554 = vunpack.c.h.b16 %v286
      %v555 = vunpack.c.l.b16 %v287
      %v556 = vunpack.c.h.b16 %v287
      %v557 = vunpack.c.l.b16 %v288
      %v558 = vunpack.c.h.b16 %v288
      %v559 = vunpack.c.l.b16 %v289
      %v560 = vunpack.c.h.b16 %v289
      %v561 = vunpack.c.l.b16 %v290
      %v562 = vunpack.c.h.b16 %v290
      %v563 = vunpack.c.l.b16 %v291
      %v564 = vunpack.c.h.b16 %v291
      %v565 = vunpack.c.l.b16 %v292
      %v566 = vunpack.c.h.b16 %v292
      %v567 = vunpack.c.l.b16 %v293
      %v568 = vunpack.c.h.b16 %v293
      %v569 = vunpack.c.l.b16 %v294
      %v570 = vunpack.c.h.b16 %v294
      %v571 = vunpack.c.l.b16 %v295
      %v572 = vunpack.c.h.b16 %v295
      %v573 = vunpack.c.l.b16 %v296
      %v574 = vunpack.c.h.b16 %v296
      %v575 = vunpack.c.l.b16 %v297
      %v576 = vunpack.c.h.b16 %v297
      %v577 = vunpack.c.l.b16 %v298
      %v578 = vunpack.c.h.b16 %v298
      %v579 = vunpack.c.l.b16 %v299
      %v580 = vunpack.c.h.b16 %v299
      %v581 = vunpack.c.l.b16 %v300
      %v582 = vunpack.c.h.b16 %v300
      %v583 = vunpack.c.l.b16 %v301
      %v584 = vunpack.c.h.b16 %v301
      %v585 = vunpack.c.l.b16 %v302
      %v586 = vunpack.c.h.b16 %v302
      %v587 = vunpack.c.l.b16 %v303
      %v588 = vunpack.c.h.b16 %v303
      %v589 = vunpack.c.l.b16 %v304
      %v590 = vunpack.c.h.b16 %v304
      %v591 = vunpack.c.l.b16 %v305
      %v592 = vunpack.c.h.b16 %v305
      %v593 = vunpack.c.l.b16 %v306
      %v594 = vunpack.c.h.b16 %v306
      %v595 = vunpack.c.l.b16 %v307
      %v596 = vunpack.c.h.b16 %v307
      %v597 = vunpack.c.l.b16 %v308
      %v598 = vunpack.c.h.b16 %v308
      %v599 = vunpack.c.l.b16 %v309
      %v600 = vunpack.c.h.b16 %v309
      %v601 = vunpack.c.l.b16 %v310
      %v602 = vunpack.c.h.b16 %v310
      %v603 = vunpack.c.l.b16 %v311
      %v604 = vunpack.c.h.b16 %v311
      %v605 = vunpack.c.l.b16 %v312
      %v606 = vunpack.c.h.b16 %v312
      %v607 = vunpack.c.l.b16 %v313
      %v608 = vunpack.c.h.b16 %v313
      %v609 = vunpack.c.l.b16 %v314
      %v610 = vunpack.c.h.b16 %v314
      %v611 = vunpack.c.l.b16 %v315
      %v612 = vunpack.c.h.b16 %v315
      %v613 = vunpack.c.l.b16 %v316
      %v614 = vunpack.c.h.b16 %v316
      %v615 = vunpack.c.l.b16 %v317
      %v616 = vunpack.c.h.b16 %v317
      %v617 = vunpack.c.l.b16 %v318
      %v618 = vunpack.c.h.b16 %v318
      %v619 = vunpack.c.l.b16 %v319
      %v620 = vunpack.c.h.b16 %v319
      %v621 = vunpack.c.l.b16 %v320
      %v622 = vunpack.c.h.b16 %v320
      %v623 = vunpack.c.l.b16 %v321
      %v624 = vunpack.c.h.b16 %v321
      %v625 = vunpack.c.l.b16 %v322
      %v626 = vunpack.c.h.b16 %v322
      %v627 = vunpack.c.l.b16 %v323
      %v628 = vunpack.c.h.b16 %v323
      %v629 = vunpack.c.l.b16 %v324
      %v630 = vunpack.c.h.b16 %v324
      %v631 = vunpack.c.l.b16 %v325
      %v632 = vunpack.c.h.b16 %v325
      %v633 = vunpack.c.l.b16 %v326
      %v634 = vunpack.c.h.b16 %v326
      %v635 = vunpack.c.l.b16 %v327
      %v636 = vunpack.c.h.b16 %v327
      %v637 = vunpack.c.l.b16 %v328
      %v638 = vunpack.c.h.b16 %v328
      %v639 = vunpack.c.l.b16 %v329
      %v640 = vunpack.c.h.b16 %v329
      %v641 = vunpack.c.l.b16 %v330
      %v642 = vunpack.c.h.b16 %v330
      %v643 = vunpack.c.l.b16 %v331
      %v644 = vunpack.c.h.b16 %v331
      %v645 = vunpack.c.l.b16 %v332
      %v646 = vunpack.c.h.b16 %v332
      %v647 = vunpack.c.l.b16 %v333
      %v648 = vunpack.c.h.b16 %v333
      %v649 = vunpack.c.l.b16 %v334
      %v650 = vunpack.c.h.b16 %v334
      %v651 = vunpack.c.l.b16 %v335
      %v652 = vunpack.c.h.b16 %v335
      %v653 = vunpack.c.l.b16 %v336
      %v654 = vunpack.c.h.b16 %v336
      %v655 = vunpack.c.l.b16 %v337
      %v656 = vunpack.c.h.b16 %v337
      %v657 = vunpack.c.l.b16 %v338
      %v658 = vunpack.c.h.b16 %v338
      %v659 = vunpack.c.l.b16 %v339
      %v660 = vunpack.c.h.b16 %v339
      %v661 = vunpack.c.l.b16 %v340
      %v662 = vunpack.c.h.b16 %v340
      %v663 = vunpack.c.l.b16 %v341
      %v664 = vunpack.c.h.b16 %v341
      %v665 = vunpack.c.l.b16 %v342
      %v666 = vunpack.c.h.b16 %v342
      %v667 = vunpack.c.l.b16 %v343
      %v668 = vunpack.c.h.b16 %v343
      %v669 = vunpack.c.l.b16 %v344
      %v670 = vunpack.c.h.b16 %v344
      %v671 = vunpack.c.l.b16 %v345
      %v672 = vunpack.c.h.b16 %v345
      %v673 = vunpack.c.l.b16 %v346
      %v674 = vunpack.c.h.b16 %v346
      %v675 = vunpack.c.l.b16 %v347
      %v676 = vunpack.c.h.b16 %v347
      %v677 = vunpack.c.l.b16 %v348
      %v678 = vunpack.c.h.b16 %v348
      %v679 = vunpack.c.l.b16 %v349
      %v680 = vunpack.c.h.b16 %v349
      %v681 = vunpack.c.l.b16 %v350
      %v682 = vunpack.c.h.b16 %v350
      %v683 = vunpack.c.l.b16 %v351
      %v684 = vunpack.c.h.b16 %v351
      %v685 = vunpack.c.l.b16 %v352
      %v686 = vunpack.c.h.b16 %v352
      %v687 = vunpack.c.l.b16 %v353
      %v688 = vunpack.c.h.b16 %v353
      %v689 = vunpack.c.l.b16 %v354
      %v690 = vunpack.c.h.b16 %v354
      %v691 = vunpack.c.l.b16 %v355
      %v692 = vunpack.c.h.b16 %v355
      %v693 = vunpack.c.l.b16 %v356
      %v694 = vunpack.c.h.b16 %v356
      %v695 = vunpack.c.l.b16 %v357
      %v696 = vunpack.c.h.b16 %v357
      %v697 = vunpack.c.l.b16 %v358
      %v698 = vunpack.c.h.b16 %v358
      %v699 = vunpack.c.l.b16 %v359
      %v700 = vunpack.c.h.b16 %v359
      %v701 = vunpack.c.l.b16 %v360
      %v702 = vunpack.c.h.b16 %v360
      %v703 = vunpack.c.l.b16 %v361
      %v704 = vunpack.c.h.b16 %v361
      %v705 = vunpack.c.l.b16 %v362
      %v706 = vunpack.c.h.b16 %v362
      %v707 = vunpack.c.l.b16 %v363
      %v708 = vunpack.c.h.b16 %v363
      %v709 = vunpack.c.l.b16 %v364
      %v710 = vunpack.c.h.b16 %v364
      %v711 = vunpack.c.l.b16 %v365
      %v712 = vunpack.c.h.b16 %v365
      %v713 = vunpack.c.l.b16 %v366
      %v714 = vunpack.c.h.b16 %v366
      %v715 = vunpack.c.l.b16 %v367
      %v716 = vunpack.c.h.b16 %v367
      %v717 = vunpack.c.l.b16 %v368
      %v718 = vunpack.c.h.b16 %v368
      %v719 = vunpack.c.l.b16 %v369
      %v720 = vunpack.c.h.b16 %v369
      %v721 = vunpack.c.l.b16 %v370
      %v722 = vunpack.c.h.b16 %v370
      %v723 = vpack.c.b16 %v543, %v531
      %v724 = vpack.c.b16 %v544, %v532
      %v725 = vpack.c.b16 %v545, %v533
      %v726 = vpack.c.b16 %v546, %v534
      %v727 = vpack.c.b16 %v547, %v535
      %v728 = vpack.c.b16 %v548, %v536
      %v729 = vpack.c.b16 %v549, %v537
      %v730 = vpack.c.b16 %v550, %v538
      %v731 = vpack.c.b16 %v551, %v539
      %v732 = vpack.c.b16 %v552, %v540
      %v733 = vpack.c.b16 %v553, %v541
      %v734 = vpack.c.b16 %v554, %v542
      %v735 = vpack.c.b16 %v567, %v555
      %v736 = vpack.c.b16 %v568, %v556
      %v737 = vpack.c.b16 %v569, %v557
      %v738 = vpack.c.b16 %v570, %v558
      %v739 = vpack.c.b16 %v571, %v559
      %v740 = vpack.c.b16 %v572, %v560
      %v741 = vpack.c.b16 %v573, %v561
      %v742 = vpack.c.b16 %v574, %v562
      %v743 = vpack.c.b16 %v575, %v563
      %v744 = vpack.c.b16 %v576, %v564
      %v745 = vpack.c.b16 %v577, %v565
      %v746 = vpack.c.b16 %v578, %v566
      %v747 = vpack.c.b16 %v591, %v579
      %v748 = vpack.c.b16 %v592, %v580
      %v749 = vpack.c.b16 %v593, %v581
      %v750 = vpack.c.b16 %v594, %v582
      %v751 = vpack.c.b16 %v595, %v583
      %v752 = vpack.c.b16 %v596, %v584
      %v753 = vpack.c.b16 %v597, %v585
      %v754 = vpack.c.b16 %v598, %v586
      %v755 = vpack.c.b16 %v599, %v587
      %v756 = vpack.c.b16 %v600, %v588
      %v757 = vpack.c.b16 %v601, %v589
      %v758 = vpack.c.b16 %v602, %v590
      %v759 = vpack.c.b16 %v615, %v603
      %v760 = vpack.c.b16 %v616, %v604
      %v761 = vpack.c.b16 %v617, %v605
      %v762 = vpack.c.b16 %v618, %v606
      %v763 = vpack.c.b16 %v619, %v607
      %v764 = vpack.c.b16 %v620, %v608
      %v765 = vpack.c.b16 %v621, %v609
      %v766 = vpack.c.b16 %v622, %v610
      %v767 = vpack.c.b16 %v623, %v611
      %v768 = vpack.c.b16 %v624, %v612
      %v769 = vpack.c.b16 %v625, %v613
      %v770 = vpack.c.b16 %v626, %v614
      %v771 = vpack.c.b16 %v639, %v627
      %v772 = vpack.c.b16 %v640, %v628
      %v773 = vpack.c.b16 %v641, %v629
      %v774 = vpack.c.b16 %v642, %v630
      %v775 = vpack.c.b16 %v643, %v631
      %v776 = vpack.c.b16 %v644, %v632
      %v777 = vpack.c.b16 %v645, %v633
      %v778 = vpack.c.b16 %v646, %v634
      %v779 = vpack.c.b16 %v647, %v635
      %v780 = vpack.c.b16 %v648, %v636
      %v781 = vpack.c.b16 %v649, %v637
      %v782 = vpack.c.b16 %v650, %v638
      %v783 = vpack.c.b16 %v663, %v651
      %v784 = vpack.c.b16 %v664, %v652
      %v785 = vpack.c.b16 %v665, %v653
      %v786 = vpack.c.b16 %v666, %v654
      %v787 = vpack.c.b16 %v667, %v655
      %v788 = vpack.c.b16 %v668, %v656
      %v789 = vpack.c.b16 %v669, %v657
      %v790 = vpack.c.b16 %v670, %v658
      %v791 = vpack.c.b16 %v671, %v659
      %v792 = vpack.c.b16 %v672, %v660
      %v793 = vpack.c.b16 %v673, %v661
      %v794 = vpack.c.b16 %v674, %v662
      %v795 = vpack.c.b16 %v687, %v675
      %v796 = vpack.c.b16 %v688, %v676
      %v797 = vpack.c.b16 %v689, %v677
      %v798 = vpack.c.b16 %v690, %v678
      %v799 = vpack.c.b16 %v691, %v679
      %v800 = vpack.c.b16 %v692, %v680
      %v801 = vpack.c.b16 %v693, %v681
      %v802 = vpack.c.b16 %v694, %v682
      %v803 = vpack.c.b16 %v695, %v683
      %v804 = vpack.c.b16 %v696, %v684
      %v805 = vpack.c.b16 %v697, %v685
      %v806 = vpack.c.b16 %v698, %v686
      %v807 = vpack.c.b16 %v711, %v699
      %v808 = vpack.c.b16 %v712, %v700
      %v809 = vpack.c.b16 %v713, %v701
      %v810 = vpack.c.b16 %v714, %v702
      %v811 = vpack.c.b16 %v715, %v703
      %v812 = vpack.c.b16 %v716, %v704
      %v813 = vpack.c.b16 %v717, %v705
      %v814 = vpack.c.b16 %v718, %v706
      %v815 = vpack.c.b16 %v719, %v707
      %v816 = vpack.c.b16 %v720, %v708
      %v817 = vpack.c.b16 %v721, %v709
      %v818 = vpack.c.b16 %v722, %v710
      %915 = vmatprep.subr.bf16.mxu0 %v724
      %916 = vmatpush1.bf16.msra.mxu0 %v723
      %917 = vmatprep.subr.bf16.mxu0 %v736
      %918 = vmatpush1.bf16.msra.mxu0 %v735
      %919 = vmatprep.subr.bf16.mxu0 %v748
      %920 = vmatpush1.bf16.msra.mxu0 %v747
      %921 = vmatprep.subr.bf16.mxu0 %v760
      %922 = vmatpush1.bf16.msra.mxu0 %v759
      %923 = vmatprep.subr.bf16.mxu0 %v772
      %924 = vmatpush1.bf16.msra.mxu0 %v771
      %925 = vmatprep.subr.bf16.mxu0 %v784
      %926 = vmatpush1.bf16.msra.mxu0 %v783
      %927 = vmatprep.subr.bf16.mxu0 %v796
      %928 = vmatpush1.bf16.msra.mxu0 %v795
      %929 = vmatprep.subr.bf16.mxu0 %v808
      %930 = vmatpush1.bf16.msra.mxu0 %v807
      %931 = vmatprep.subr.bf16.mxu0 0
      %932 = vmatpush1.bf16.msra.mxu0 0
      %933 = vmatprep.subr.bf16.mxu0 0
      %934 = vmatpush1.bf16.msra.mxu0 0
      %935 = vmatprep.subr.bf16.mxu0 0
      %936 = vmatpush1.bf16.msra.mxu0 0
      %937 = vmatprep.subr.bf16.mxu0 0
      %938 = vmatpush1.bf16.msra.mxu0 0
      %939 = vmatprep.subr.bf16.mxu0 0
      %940 = vmatpush1.bf16.msra.mxu0 0
      %941 = vmatprep.subr.bf16.mxu0 0
      %942 = vmatpush1.bf16.msra.mxu0 0
      %943 = vmatprep.subr.bf16.mxu0 0
      %944 = vmatpush1.bf16.msra.mxu0 0
      %945 = vmatprep.subr.bf16.mxu0 0
      %946 = vmatpush1.bf16.msra.mxu0 0
      %947 = vmatprep.mubr.bf16.mxu0 0
      %948 = vmatmul.mubr.bf16.gmra.mrb[0].mxu0 %v274
      %v949 = vpop.f32.mrb[0].mxu0
      %v950 = vadd.f32 %v378, %v949
      %v951 = vpop.f32.mrb[0].mxu0
      %v952 = vadd.f32 %v382, %v951
      %v953 = vpop.f32.mrb[0].mxu0
      %v954 = vadd.f32 %v378, %v953
      %v955 = vpop.f32.mrb[0].mxu0
      %v956 = vadd.f32 %v382, %v955
      %957 = vdwg.mxu0
      %958 = vmatprep.subr.bf16.mxu0 %v726
      %959 = vmatpush1.bf16.msra.mxu0 %v725
      %960 = vmatprep.subr.bf16.mxu0 %v738
      %961 = vmatpush1.bf16.msra.mxu0 %v737
      %962 = vmatprep.subr.bf16.mxu0 %v750
      %963 = vmatpush1.bf16.msra.mxu0 %v749
      %964 = vmatprep.subr.bf16.mxu0 %v762
      %965 = vmatpush1.bf16.msra.mxu0 %v761
      %966 = vmatprep.subr.bf16.mxu0 %v774
      %967 = vmatpush1.bf16.msra.mxu0 %v773
      %968 = vmatprep.subr.bf16.mxu0 %v786
      %969 = vmatpush1.bf16.msra.mxu0 %v785
      %970 = vmatprep.subr.bf16.mxu0 %v798
      %971 = vmatpush1.bf16.msra.mxu0 %v797
      %972 = vmatprep.subr.bf16.mxu0 %v810
      %973 = vmatpush1.bf16.msra.mxu0 %v809
      %974 = vmatprep.subr.bf16.mxu0 0
      %975 = vmatpush1.bf16.msra.mxu0 0
      %976 = vmatprep.subr.bf16.mxu0 0
      %977 = vmatpush1.bf16.msra.mxu0 0
      %978 = vmatprep.subr.bf16.mxu0 0
      %979 = vmatpush1.bf16.msra.mxu0 0
      %980 = vmatprep.subr.bf16.mxu0 0
      %981 = vmatpush1.bf16.msra.mxu0 0
      %982 = vmatprep.subr.bf16.mxu0 0
      %983 = vmatpush1.bf16.msra.mxu0 0
      %984 = vmatprep.subr.bf16.mxu0 0
      %985 = vmatpush1.bf16.msra.mxu0 0
      %986 = vmatprep.subr.bf16.mxu0 0
      %987 = vmatpush1.bf16.msra.mxu0 0
      %988 = vmatprep.subr.bf16.mxu0 0
      %989 = vmatpush1.bf16.msra.mxu0 0
      %990 = vmatprep.mubr.bf16.mxu0 0
      %991 = vmatmul.mubr.bf16.gmra.mrb[0].mxu0 %v274
      %v992 = vpop.f32.mrb[0].mxu0
      %v993 = vadd.f32 %v386, %v992
      %v994 = vpop.f32.mrb[0].mxu0
      %v995 = vadd.f32 %v390, %v994
      %v996 = vpop.f32.mrb[0].mxu0
      %v997 = vadd.f32 %v386, %v996
      %v998 = vpop.f32.mrb[0].mxu0
      %v999 = vadd.f32 %v390, %v998
      %1000 = vdwg.mxu0
      %1001 = vmatprep.subr.bf16.mxu0 %v728
      %1002 = vmatpush1.bf16.msra.mxu0 %v727
      %1003 = vmatprep.subr.bf16.mxu0 %v740
      %1004 = vmatpush1.bf16.msra.mxu0 %v739
      %1005 = vmatprep.subr.bf16.mxu0 %v752
      %1006 = vmatpush1.bf16.msra.mxu0 %v751
      %1007 = vmatprep.subr.bf16.mxu0 %v764
      %1008 = vmatpush1.bf16.msra.mxu0 %v763
      %1009 = vmatprep.subr.bf16.mxu0 %v776
      %1010 = vmatpush1.bf16.msra.mxu0 %v775
      %1011 = vmatprep.subr.bf16.mxu0 %v788
      %1012 = vmatpush1.bf16.msra.mxu0 %v787
      %1013 = vmatprep.subr.bf16.mxu0 %v800
      %1014 = vmatpush1.bf16.msra.mxu0 %v799
      %1015 = vmatprep.subr.bf16.mxu0 %v812
      %1016 = vmatpush1.bf16.msra.mxu0 %v811
      %1017 = vmatprep.subr.bf16.mxu0 0
      %1018 = vmatpush1.bf16.msra.mxu0 0
      %1019 = vmatprep.subr.bf16.mxu0 0
      %1020 = vmatpush1.bf16.msra.mxu0 0
      %1021 = vmatprep.subr.bf16.mxu0 0
      %1022 = vmatpush1.bf16.msra.mxu0 0
      %1023 = vmatprep.subr.bf16.mxu0 0
      %1024 = vmatpush1.bf16.msra.mxu0 0
      %1025 = vmatprep.subr.bf16.mxu0 0
      %1026 = vmatpush1.bf16.msra.mxu0 0
      %1027 = vmatprep.subr.bf16.mxu0 0
      %1028 = vmatpush1.bf16.msra.mxu0 0
      %1029 = vmatprep.subr.bf16.mxu0 0
      %1030 = vmatpush1.bf16.msra.mxu0 0
      %1031 = vmatprep.subr.bf16.mxu0 0
      %1032 = vmatpush1.bf16.msra.mxu0 0
      %1033 = vmatprep.mubr.bf16.mxu0 0
      %1034 = vmatmul.mubr.bf16.gmra.mrb[0].mxu0 %v274
      %v1035 = vpop.f32.mrb[0].mxu0
      %v1036 = vadd.f32 %v394, %v1035
      %v1037 = vpop.f32.mrb[0].mxu0
      %v1038 = vadd.f32 %v398, %v1037
      %v1039 = vpop.f32.mrb[0].mxu0
      %v1040 = vadd.f32 %v394, %v1039
      %v1041 = vpop.f32.mrb[0].mxu0
      %v1042 = vadd.f32 %v398, %v1041
      %1043 = vdwg.mxu0
      %1044 = vmatprep.subr.bf16.mxu0 %v730
      %1045 = vmatpush1.bf16.msra.mxu0 %v729
      %1046 = vmatprep.subr.bf16.mxu0 %v742
      %1047 = vmatpush1.bf16.msra.mxu0 %v741
      %1048 = vmatprep.subr.bf16.mxu0 %v754
      %1049 = vmatpush1.bf16.msra.mxu0 %v753
      %1050 = vmatprep.subr.bf16.mxu0 %v766
      %1051 = vmatpush1.bf16.msra.mxu0 %v765
      %1052 = vmatprep.subr.bf16.mxu0 %v778
      %1053 = vmatpush1.bf16.msra.mxu0 %v777
      %1054 = vmatprep.subr.bf16.mxu0 %v790
      %1055 = vmatpush1.bf16.msra.mxu0 %v789
      %1056 = vmatprep.subr.bf16.mxu0 %v802
      %1057 = vmatpush1.bf16.msra.mxu0 %v801
      %1058 = vmatprep.subr.bf16.mxu0 %v814
      %1059 = vmatpush1.bf16.msra.mxu0 %v813
      %1060 = vmatprep.subr.bf16.mxu0 0
      %1061 = vmatpush1.bf16.msra.mxu0 0
      %1062 = vmatprep.subr.bf16.mxu0 0
      %1063 = vmatpush1.bf16.msra.mxu0 0
      %1064 = vmatprep.subr.bf16.mxu0 0
      %1065 = vmatpush1.bf16.msra.mxu0 0
      %1066 = vmatprep.subr.bf16.mxu0 0
      %1067 = vmatpush1.bf16.msra.mxu0 0
      %1068 = vmatprep.subr.bf16.mxu0 0
      %1069 = vmatpush1.bf16.msra.mxu0 0
      %1070 = vmatprep.subr.bf16.mxu0 0
      %1071 = vmatpush1.bf16.msra.mxu0 0
      %1072 = vmatprep.subr.bf16.mxu0 0
      %1073 = vmatpush1.bf16.msra.mxu0 0
      %1074 = vmatprep.subr.bf16.mxu0 0
      %1075 = vmatpush1.bf16.msra.mxu0 0
      %1076 = vmatprep.mubr.bf16.mxu0 0
      %1077 = vmatmul.mubr.bf16.gmra.mrb[0].mxu0 %v274
      %v1078 = vpop.f32.mrb[0].mxu0
      %v1079 = vadd.f32 %v402, %v1078
      %v1080 = vpop.f32.mrb[0].mxu0
      %v1081 = vadd.f32 %v406, %v1080
      %v1082 = vpop.f32.mrb[0].mxu0
      %v1083 = vadd.f32 %v402, %v1082
      %v1084 = vpop.f32.mrb[0].mxu0
      %v1085 = vadd.f32 %v406, %v1084
      %1086 = vdwg.mxu0
      %1087 = vmatprep.subr.bf16.mxu0 %v732
      %1088 = vmatpush1.bf16.msra.mxu0 %v731
      %1089 = vmatprep.subr.bf16.mxu0 %v744
      %1090 = vmatpush1.bf16.msra.mxu0 %v743
      %1091 = vmatprep.subr.bf16.mxu0 %v756
      %1092 = vmatpush1.bf16.msra.mxu0 %v755
      %1093 = vmatprep.subr.bf16.mxu0 %v768
      %1094 = vmatpush1.bf16.msra.mxu0 %v767
      %1095 = vmatprep.subr.bf16.mxu0 %v780
      %1096 = vmatpush1.bf16.msra.mxu0 %v779
      %1097 = vmatprep.subr.bf16.mxu0 %v792
      %1098 = vmatpush1.bf16.msra.mxu0 %v791
      %1099 = vmatprep.subr.bf16.mxu0 %v804
      %1100 = vmatpush1.bf16.msra.mxu0 %v803
      %1101 = vmatprep.subr.bf16.mxu0 %v816
      %1102 = vmatpush1.bf16.msra.mxu0 %v815
      %1103 = vmatprep.subr.bf16.mxu0 0
      %1104 = vmatpush1.bf16.msra.mxu0 0
      %1105 = vmatprep.subr.bf16.mxu0 0
      %1106 = vmatpush1.bf16.msra.mxu0 0
      %1107 = vmatprep.subr.bf16.mxu0 0
      %1108 = vmatpush1.bf16.msra.mxu0 0
      %1109 = vmatprep.subr.bf16.mxu0 0
      %1110 = vmatpush1.bf16.msra.mxu0 0
      %1111 = vmatprep.subr.bf16.mxu0 0
      %1112 = vmatpush1.bf16.msra.mxu0 0
      %1113 = vmatprep.subr.bf16.mxu0 0
      %1114 = vmatpush1.bf16.msra.mxu0 0
      %1115 = vmatprep.subr.bf16.mxu0 0
      %1116 = vmatpush1.bf16.msra.mxu0 0
      %1117 = vmatprep.subr.bf16.mxu0 0
      %1118 = vmatpush1.bf16.msra.mxu0 0
      %1119 = vmatprep.mubr.bf16.mxu0 0
      %1120 = vmatmul.mubr.bf16.gmra.mrb[0].mxu0 %v274
      %v1121 = vpop.f32.mrb[0].mxu0
      %v1122 = vadd.f32 %v410, %v1121
      %v1123 = vpop.f32.mrb[0].mxu0
      %v1124 = vadd.f32 %v414, %v1123
      %v1125 = vpop.f32.mrb[0].mxu0
      %v1126 = vadd.f32 %v410, %v1125
      %v1127 = vpop.f32.mrb[0].mxu0
      %v1128 = vadd.f32 %v414, %v1127
      %1129 = vdwg.mxu0
      %1130 = vmatprep.subr.bf16.mxu0 %v734
      %1131 = vmatpush1.bf16.msra.mxu0 %v733
      %1132 = vmatprep.subr.bf16.mxu0 %v746
      %1133 = vmatpush1.bf16.msra.mxu0 %v745
      %1134 = vmatprep.subr.bf16.mxu0 %v758
      %1135 = vmatpush1.bf16.msra.mxu0 %v757
      %1136 = vmatprep.subr.bf16.mxu0 %v770
      %1137 = vmatpush1.bf16.msra.mxu0 %v769
      %1138 = vmatprep.subr.bf16.mxu0 %v782
      %1139 = vmatpush1.bf16.msra.mxu0 %v781
      %1140 = vmatprep.subr.bf16.mxu0 %v794
      %1141 = vmatpush1.bf16.msra.mxu0 %v793
      %1142 = vmatprep.subr.bf16.mxu0 %v806
      %1143 = vmatpush1.bf16.msra.mxu0 %v805
      %1144 = vmatprep.subr.bf16.mxu0 %v818
      %1145 = vmatpush1.bf16.msra.mxu0 %v817
      %1146 = vmatprep.subr.bf16.mxu0 0
      %1147 = vmatpush1.bf16.msra.mxu0 0
      %1148 = vmatprep.subr.bf16.mxu0 0
      %1149 = vmatpush1.bf16.msra.mxu0 0
      %1150 = vmatprep.subr.bf16.mxu0 0
      %1151 = vmatpush1.bf16.msra.mxu0 0
      %1152 = vmatprep.subr.bf16.mxu0 0
      %1153 = vmatpush1.bf16.msra.mxu0 0
      %1154 = vmatprep.subr.bf16.mxu0 0
      %1155 = vmatpush1.bf16.msra.mxu0 0
      %1156 = vmatprep.subr.bf16.mxu0 0
      %1157 = vmatpush1.bf16.msra.mxu0 0
      %1158 = vmatprep.subr.bf16.mxu0 0
      %1159 = vmatpush1.bf16.msra.mxu0 0
      %1160 = vmatprep.subr.bf16.mxu0 0
      %1161 = vmatpush1.bf16.msra.mxu0 0
      %1162 = vmatprep.mubr.bf16.mxu0 0
      %1163 = vmatmul.mubr.bf16.gmra.mrb[0].mxu0 %v274
      %v1164 = vpop.f32.mrb[0].mxu0
      %v1165 = vadd.f32 %v418, %v1164
      %v1166 = vpop.f32.mrb[0].mxu0
      %v1167 = vadd.f32 %v422, %v1166
      %v1168 = vpop.f32.mrb[0].mxu0
      %v1169 = vadd.f32 %v418, %v1168
      %v1170 = vpop.f32.mrb[0].mxu0
      %v1171 = vadd.f32 %v422, %v1170
      %1172 = vdwg.mxu0
      %v1173 = vpack.c.bf16 %v954, %v950
      %v1174 = vpack.c.bf16 %v956, %v952
      %v1175 = vpack.c.bf16 %v997, %v993
      %v1176 = vpack.c.bf16 %v999, %v995
      %v1177 = vpack.c.bf16 %v1040, %v1036
      %v1178 = vpack.c.bf16 %v1042, %v1038
      %v1179 = vpack.c.bf16 %v1083, %v1079
      %v1180 = vpack.c.bf16 %v1085, %v1081
      %v1181 = vpack.c.bf16 %v1126, %v1122
      %v1182 = vpack.c.bf16 %v1128, %v1124
      %v1183 = vpack.c.bf16 %v1169, %v1165
      %v1184 = vpack.c.bf16 %v1171, %v1167
      %v1197 = vunpack.c.l.b16 %v1173
      %v1198 = vunpack.c.l.b16 %v1174
      %v1199 = vunpack.c.l.b16 %v1175
      %v1200 = vunpack.c.l.b16 %v1176
      %v1201 = vunpack.c.l.b16 %v1177
      %v1202 = vunpack.c.l.b16 %v1178
      %v1203 = vunpack.c.l.b16 %v1179
      %v1204 = vunpack.c.l.b16 %v1180
      %v1205 = vunpack.c.l.b16 %v1181
      %v1206 = vunpack.c.l.b16 %v1182
      %v1207 = vunpack.c.l.b16 %v1183
      %v1208 = vunpack.c.l.b16 %v1184
      %v1209 = vunpack.c.h.b16 %v1173
      %v1210 = vunpack.c.h.b16 %v1174
      %v1211 = vunpack.c.h.b16 %v1175
      %v1212 = vunpack.c.h.b16 %v1176
      %v1213 = vunpack.c.h.b16 %v1177
      %v1214 = vunpack.c.h.b16 %v1178
      %v1215 = vunpack.c.h.b16 %v1179
      %v1216 = vunpack.c.h.b16 %v1180
      %v1217 = vunpack.c.h.b16 %v1181
      %v1218 = vunpack.c.h.b16 %v1182
      %v1219 = vunpack.c.h.b16 %v1183
      %v1220 = vunpack.c.h.b16 %v1184
      %v1221 = vpack.c.b16 %v1198, %v1197
      %v1222 = vpack.c.b16 %v1200, %v1199
      %v1223 = vpack.c.b16 %v1202, %v1201
      %v1224 = vpack.c.b16 %v1204, %v1203
      %v1225 = vpack.c.b16 %v1206, %v1205
      %v1226 = vpack.c.b16 %v1208, %v1207
      %v1227 = vpack.c.b16 %v1210, %v1209
      %v1228 = vpack.c.b16 %v1212, %v1211
      %v1229 = vpack.c.b16 %v1214, %v1213
      %v1230 = vpack.c.b16 %v1216, %v1215
      %v1231 = vpack.c.b16 %v1218, %v1217
      %v1232 = vpack.c.b16 %v1220, %v1219
      %1245 = vst [vmem:[%s228] sm:$0xff] %v1221
      %1246 = vst [vmem:[%s228 + $0x8] sm:$0xff] %v1222
      %1247 = vst [vmem:[%s228 + $0x10] sm:$0xff] %v1223
      %1248 = vst [vmem:[%s228 + $0x18] sm:$0xff] %v1224
      %1249 = vst [vmem:[%s228 + $0x20] sm:$0xff] %v1225
      %1250 = vst [vmem:[%s228 + $0x28] sm:$0xff] %v1226
      %1251 = vst [vmem:[%s228 + $0x30] sm:$0xff] %v1227
      %1252 = vst [vmem:[%s228 + $0x38] sm:$0xff] %v1228
      %1253 = vst [vmem:[%s228 + $0x40] sm:$0xff] %v1229
      %1254 = vst [vmem:[%s228 + $0x48] sm:$0xff] %v1230
      %1255 = vst [vmem:[%s228 + $0x50] sm:$0xff] %v1231
      %1256 = vst [vmem:[%s228 + $0x58] sm:$0xff] %v1232
      %s1257 = smul.u32 2, %s16
      %p1258 = scmp.lt.s32.totalorder %s1257, 5
      %s1259 = scalar_select %p1258, %s1257, 5
      %s1260 = smul.addr %s1259, 12
      %s1261 = smul.addr %s1260, 4
      %s1262 = scalar_lea.vmem %s5, %s1261
      // Predicated region
      $region41: #{_lambda_.11} parent=39 // pred_check
        %p1263 = pneg %p144
      $region42: #{_lambda_.11} parent=39 // pred_check_branch
        %1265 = sbr.rel (%p1263) target = $region44
      $region43: #{_lambda_.11} parent=39 // pred_region
        %s1266 = smul.u32 2, %s16
      $region44: #{_lambda_.11} parent=39 // pred_fallthru
        _
    $region40: #{_lambda_.11} parent=5 // pred_fallthru
      _
    %p1267 = scmp.le.s32.totalorder 2, %s11
    // Predicated region
    $region45: #{_lambda_.11} parent=5 // pred_check
      %p1268 = pneg %p1267
    $region46: #{_lambda_.11} parent=5 // pred_check_branch
      %1270 = sbr.rel (%p1268) target = $region48
    $region47: #{_lambda_.11} parent=5 // pred_region
      %s1271 = ssub.s32 %s11, 2
      // Predicated region
      $region49: #{_lambda_.11} parent=47 // pred_check
        %p1272 = pneg %p150
      $region50: #{_lambda_.11} parent=47 // pred_check_branch
        %1274 = sbr.rel (%p1272) target = $region52
      $region51: #{_lambda_.11} parent=47 // pred_region
        %s1275 = smul.u32 2, %s17
        %p1276 = scmp.lt.s32.totalorder %s1275, 5
        %s1277 = scalar_select %p1276, %s1275, 5
        %s1278 = smul.addr %s1277, 12
        %s1279 = smul.addr %s1278, 4
        %s1280 = scalar_lea.vmem %s5, %s1279
      $region52: #{_lambda_.11} parent=47 // pred_fallthru
        _
    $region48: #{_lambda_.11} parent=5 // pred_fallthru
      _
  $region6: #{_lambda_.11} parent=0 // loop_footer
    %s15 = sadd.s32 1, %s11
  $region7: #{_lambda_.11} parent=0 // loop_footer_branch
    %10 = sbr.rel target = $region3
  $region8: #{_lambda_.11} parent=0 // loop_exit
    _

// kernel: _lambda_.12
$region0: #{_lambda_.12}
  #allocation0 [shape = 'u32[]', space=smem, size = 0x4, offset = 0x4, fixed_abs, tag = 'smem constant byte address 0x4 - core index']
  #allocation1 [shape = 'u32[144,128]{1,0:T(1,128)}', space=vmem, size = 0x12000, scoped, tag = 'internal scratch']
  %s0 = inlined_call_operand.vmem [shape: bf16[2,17,1536], index: 0, kind: input, shape index: {}]
  %s1 = inlined_call_operand.vmem [shape: bf16[2,17,512], index: 1, kind: output, shape index: {}]
  %s2 = sld [smem:[#allocation0]]
  $region100: #{_lambda_.12} parent=0
    _
  %s4 = ssub.s32 1, %s2
  %s5 = scalar_select 0, %s4, %s2
  $region1: #{_lambda_.12} parent=0
    #allocation2 [shape = 'u8[36864]{0}', space=vmem, size = 0x9000, scoped, tag = 'input window, operand 0']
    #allocation3 [shape = 'u8[12288]{0}', space=vmem, size = 0x3000, scoped, tag = 'output window, operand 0']
    loop: start=0, step=1, limit=10
    $region2: #{_lambda_.12} parent=1 // loop_pre_header
      _
    $region3: #{_lambda_.12} parent=1 // loop_header
      %s7 = sphi 0, %s11
      %p8 = scmp.ge.s32.totalorder %s7, 10
      %s14 = sphi 0, %s26
      %s15 = sphi 0, %s22
      %s16 = sphi 0, %s14
      %s17 = sphi 0, %s15
      %s18 = sphi 0, %s16
      %s19 = sphi 0, %s17
      %s31 = sphi 0, %s33
      %s34 = sphi 0, %s31
      %s35 = sphi 0, %s34
      %s51 = sphi 0, %s35
      %s59 = sphi 0, %s61
      %s62 = sphi 0, %s59
      %s63 = sphi 0, %s62
      %s79 = sphi 0, %s63
    $region4: #{_lambda_.12} parent=1 // loop_header_branch
      %10 = sbr.rel (%p8) target = $region8
    $region5: #{_lambda_.12} parent=1 // loop_body
      %s12 = ssub.s32 %s7, 1
      %s13 = ssub.s32 %s7, 2
      %s20 = sadd.s32 1, %s15
      %p21 = scmp.ge.s32.totalorder %s20, 4
      %s22 = scalar_select %p21, 0, %s20
      %s23 = sadd.s32 1, %s14
      %s24 = scalar_select %p21, %s23, %s14
      %p25 = scmp.ge.s32.totalorder %s24, 2
      %s26 = scalar_select %p25, 0, %s24
      %s27 = ssub.s32 %s14, %s26
      %s28 = ssub.s32 %s15, %s22
      %s29 = sor.u32 %s27, %s28
      %p30 = scmp.eq.s32.totalorder %s29, 0
      %s32 = sadd.s32 %s31, 1
      %s33 = scalar_select %p30, %s31, %s32
      %p36 = pneg %p30
      %p37 = scmp.eq.s32.totalorder %s7, 7
      %p38 = por %p36, %p37
      %p39 = scmp.ne.s32.totalorder %s31, %s34
      %p40 = scmp.eq.s32.totalorder %s7, 0
      %p41 = por %p39, %p40
      %p42 = scmp.ne.s32.totalorder %s31, %s34
      %p43 = scmp.eq.s32.totalorder %s12, 7
      %p44 = por %p42, %p43
      %p45 = scmp.ne.s32.totalorder %s34, %s35
      %p46 = scmp.eq.s32.totalorder %s12, 0
      %p47 = por %p45, %p46
      %p48 = scmp.ne.s32.totalorder %s34, %s35
      %p49 = scmp.eq.s32.totalorder %s13, 7
      %p50 = por %p48, %p49
      %p52 = scmp.ne.s32.totalorder %s35, %s51
      %p53 = scmp.eq.s32.totalorder %s13, 0
      %p54 = por %p52, %p53
      %s55 = ssub.s32 %s14, %s26
      %s56 = ssub.s32 %s15, %s22
      %s57 = sor.u32 %s55, %s56
      %p58 = scmp.eq.s32.totalorder %s57, 0
      %s60 = sadd.s32 %s59, 1
      %s61 = scalar_select %p58, %s59, %s60
      %p64 = pneg %p58
      %p65 = scmp.eq.s32.totalorder %s7, 7
      %p66 = por %p64, %p65
      %p67 = scmp.ne.s32.totalorder %s59, %s62
      %p68 = scmp.eq.s32.totalorder %s7, 0
      %p69 = por %p67, %p68
      %p70 = scmp.ne.s32.totalorder %s59, %s62
      %p71 = scmp.eq.s32.totalorder %s12, 7
      %p72 = por %p70, %p71
      %p73 = scmp.ne.s32.totalorder %s62, %s63
      %p74 = scmp.eq.s32.totalorder %s12, 0
      %p75 = por %p73, %p74
      %p76 = scmp.ne.s32.totalorder %s62, %s63
      %p77 = scmp.eq.s32.totalorder %s13, 7
      %p78 = por %p76, %p77
      %p80 = scmp.ne.s32.totalorder %s63, %s79
      %p81 = scmp.eq.s32.totalorder %s13, 0
      %p82 = por %p80, %p81
      %p83 = scmp.le.s32.totalorder 1, %s7
      %p84 = scmp.lt.s32.totalorder %s7, 9
      %p85 = pnand %p83, %p84
      %p86 = pneg %p85
      // Predicated region
      $region9: #{_lambda_.12} parent=5 // pred_check
        _
      $region10: #{_lambda_.12} parent=5 // pred_check_branch
        %88 = sbr.rel (%p85) target = $region12
      $region11: #{_lambda_.12} parent=5 // pred_region
        %s89 = ssub.s32 %s7, 1
      $region12: #{_lambda_.12} parent=5 // pred_fallthru
        _
      %p90 = scmp.lt.s32.totalorder %s7, 8
      // Predicated region
      $region13: #{_lambda_.12} parent=5 // pred_check
        %p91 = pneg %p90
      $region14: #{_lambda_.12} parent=5 // pred_check_branch
        %93 = sbr.rel (%p91) target = $region16
      $region15: #{_lambda_.12} parent=5 // pred_region
        // Predicated region
        $region17: #{_lambda_.12} parent=15 // pred_check
          %p94 = pneg %p41
        $region18: #{_lambda_.12} parent=15 // pred_check_branch
          %96 = sbr.rel (%p94) target = $region20
        $region19: #{_lambda_.12} parent=15 // pred_region
          %s97 = sand.u32 %s31, 1
          %s98 = sand.u32 %s31, 1
          %s99 = smul.addr %s98, 36
          %s100 = scalar_lea.vmem [#allocation2], %s99
          %s101 = smul.u32 3, %s15
          %s102 = smul.addr %s14, 36
          %s103 = sadd.s32 %s101, %s102
          %s104 = smul.addr %s103, 4
          %s105 = scalar_lea.vmem %s0, %s104
          // Predicated region
          $region21: #{_lambda_.12} parent=19 // pred_check
            _
          $region22: #{_lambda_.12} parent=19 // pred_check_branch
            %107 = sbr.rel (0) target = $region24
          $region23: #{_lambda_.12} parent=19 // pred_region
            // Predicated region
            $region25: #{_lambda_.12} parent=23 // pred_check
              _
            $region26: #{_lambda_.12} parent=23 // pred_check_branch
              %109 = sbr.rel (0) target = $region28
            $region27: #{_lambda_.12} parent=23 // pred_region
              %s110 = scalar_lea.vmem %s105, 8
              %s111 = scalar_lea.vmem %s100, 8 [#allocation2]
              loop: start=0, step=1, limit=1
              $region29: #{_lambda_.12} parent=27 // loop_pre_header
                _
              $region30: #{_lambda_.12} parent=27 // loop_header
                %s113 = sphi 0, %s117
                %p114 = scmp.ge.s32.totalorder %s113, 1
                %s118 = sphi %s105, %s105
                %s119 = sphi %s100, %s100
              $region31: #{_lambda_.12} parent=27 // loop_header_branch
                %116 = sbr.rel (%p114) target = $region35
              $region32: #{_lambda_.12} parent=27 // loop_body
                %v120 = vld [vmem:[%s118] sm:$0xff]
                %121 = vst [vmem:[%s119] sm:$0xff] %v120
                %v122 = vld [vmem:[%s118 + $0x30] sm:$0xff]
                %123 = vst [vmem:[%s119 + $0xc] sm:$0xff] %v122
                %v124 = vld [vmem:[%s118 + $0x60] sm:$0xff]
                %125 = vst [vmem:[%s119 + $0x18] sm:$0xff] %v124
              $region33: #{_lambda_.12} parent=27 // loop_footer
                %s117 = sadd.s32 1, %s113
              $region34: #{_lambda_.12} parent=27 // loop_footer_branch
                %112 = sbr.rel target = $region30
              $region35: #{_lambda_.12} parent=27 // loop_exit
                _
              loop: start=0, step=1, limit=1
              $region36: #{_lambda_.12} parent=27 // loop_pre_header
                _
              $region37: #{_lambda_.12} parent=27 // loop_header
                %s128 = sphi 0, %s132
                %p129 = scmp.ge.s32.totalorder %s128, 1
                %s133 = sphi %s110, %s110
                %s134 = sphi %s111, %s111
              $region38: #{_lambda_.12} parent=27 // loop_header_branch
                %131 = sbr.rel (%p129) target = $region42
              $region39: #{_lambda_.12} parent=27 // loop_body
                %v135 = vld [vmem:[%s133] sm:$0xf]
                %136 = vst [vmem:[%s134] sm:$0xf] %v135
                %v137 = vld [vmem:[%s133 + $0x30] sm:$0xf]
                %138 = vst [vmem:[%s134 + $0xc] sm:$0xf] %v137
                %v139 = vld [vmem:[%s133 + $0x60] sm:$0xf]
                %140 = vst [vmem:[%s134 + $0x18] sm:$0xf] %v139
              $region40: #{_lambda_.12} parent=27 // loop_footer
                %s132 = sadd.s32 1, %s128
              $region41: #{_lambda_.12} parent=27 // loop_footer_branch
                %127 = sbr.rel target = $region37
              $region42: #{_lambda_.12} parent=27 // loop_exit
                _
            $region28: #{_lambda_.12} parent=23 // pred_fallthru
              _
          $region24: #{_lambda_.12} parent=19 // pred_fallthru
            _
          %141 = vnop
        $region20: #{_lambda_.12} parent=15 // pred_fallthru
          _
      $region16: #{_lambda_.12} parent=5 // pred_fallthru
        _
      %p142 = scmp.le.s32.totalorder 1, %s7
      %p143 = scmp.lt.s32.totalorder %s7, 9
      %p144 = pnand %p142, %p143
      %p145 = pneg %p144
      // Predicated region
      $region43: #{_lambda_.12} parent=5 // pred_check
        _
      $region44: #{_lambda_.12} parent=5 // pred_check_branch
        %147 = sbr.rel (%p144) target = $region46
      $region45: #{_lambda_.12} parent=5 // pred_region
        %s148 = ssub.s32 %s7, 1
        %s149 = sand.u32 %s34, 1
        %s150 = sand.u32 %s34, 1
        %s151 = smul.addr %s150, 36
        %s152 = scalar_lea.vmem [#allocation2], %s151
        // Predicated region
        $region47: #{_lambda_.12} parent=45 // pred_check
          %p153 = pneg %p47
        $region48: #{_lambda_.12} parent=45 // pred_check_branch
          %155 = sbr.rel (%p153) target = $region50
        $region49: #{_lambda_.12} parent=45 // pred_region
          _
        $region50: #{_lambda_.12} parent=45 // pred_fallthru
          _
        %s156 = sand.u32 %s34, 1
        %s157 = sand.u32 %s34, 1
        %s158 = smul.addr %s157, 36
        %s159 = scalar_lea.vmem [#allocation2], %s158
        %p160 = pneg %p47
        %p161 = pneg %p44
        %p162 = pneg %p75
        %p163 = pneg %p72
        %s164 = sand.u32 %s62, 1
        %s165 = sand.u32 %s62, 1
        %s166 = smul.addr %s165, 12
        %s167 = scalar_lea.vmem [#allocation3], %s166
        %s168 = smul.u32 3, %s17
        %v170 = vld [vmem:[%s152] sm:$0xf]
        %v171 = vld [vmem:[%s152 + $0xc] sm:$0xf]
        %v172 = vld [vmem:[%s152 + $0x18] sm:$0x1]
        %v173 = vld [vmem:[%s152 + $0x4] sm:$0xf]
        %v174 = vld [vmem:[%s152 + $0x10] sm:$0xf]
        %v175 = vld [vmem:[%s152 + $0x1c] sm:$0x1]
        %v176 = vld [vmem:[%s152 + $0x8] sm:$0xf]
        %v177 = vld [vmem:[%s152 + $0x14] sm:$0xf]
        %v178 = vld [vmem:[%s152 + $0x20] sm:$0x1]
        %v182 = vunpack.c.l.b16 %v170
        %v183 = vunpack.c.l.b16 %v171
        %v184 = vunpack.c.l.b16 %v172
        %v185 = vpack.c.b16 %v183, %v182
        %v186 = vpack.c.b16 %v184, %v184
        %v192 = vunpack.c.l.b16 %v173
        %v193 = vunpack.c.l.b16 %v174
        %v194 = vunpack.c.l.b16 %v175
        %v195 = vpack.c.b16 %v193, %v192
        %v196 = vpack.c.b16 %v194, %v194
        %199 = vmatprep.subr.bf16.mxu0 0
        %200 = vmatpush1.bf16.xpose.msra.mxu0 %v195
        %201 = vmatprep.subr.bf16.mxu0 0
        %202 = vmatpush1.bf16.xpose.msra.mxu0 %v196
        %203 = vmatprep.subr.bf16.mxu0 0
        %204 = vmatpush1.bf16.xpose.msra.mxu0 0
        %205 = vmatprep.subr.bf16.mxu0 0
        %206 = vmatpush1.bf16.xpose.msra.mxu0 0
        %207 = vmatprep.subr.bf16.mxu0 0
        %208 = vmatpush1.bf16.xpose.msra.mxu0 0
        %209 = vmatprep.subr.bf16.mxu0 0
        %210 = vmatpush1.bf16.xpose.msra.mxu0 0
        %211 = vmatprep.subr.bf16.mxu0 0
        %212 = vmatpush1.bf16.xpose.msra.mxu0 0
        %213 = vmatprep.subr.bf16.mxu0 0
        %214 = vmatpush1.bf16.xpose.msra.mxu0 0
        %215 = vmatprep.subr.bf16.mxu0 0
        %216 = vmatpush1.bf16.xpose.msra.mxu0 0
        %217 = vmatprep.subr.bf16.mxu0 0
        %218 = vmatpush1.bf16.xpose.msra.mxu0 0
        %219 = vmatprep.subr.bf16.mxu0 0
        %220 = vmatpush1.bf16.xpose.msra.mxu0 0
        %221 = vmatprep.subr.bf16.mxu0 0
        %222 = vmatpush1.bf16.xpose.msra.mxu0 0
        %223 = vmatprep.subr.bf16.mxu0 0
        %224 = vmatpush1.bf16.xpose.msra.mxu0 0
        %225 = vmatprep.subr.bf16.mxu0 0
        %226 = vmatpush1.bf16.xpose.msra.mxu0 0
        %227 = vmatprep.subr.bf16.mxu0 0
        %228 = vmatpush1.bf16.xpose.msra.mxu0 0
        %229 = vmatprep.subr.bf16.mxu0 0
        %230 = vmatpush1.bf16.xpose.msra.mxu0 0
        %231 = vmatprep.mubr.bf16.mxu0 0
        %232 = vmatmul.mubr.bf16.gmra.mrb[0].mxu0 %v185
        %v233 = vpop.f32.mrb[0].mxu0
        %v234 = vadd.f32 0.0, %v233
        %v235 = vpop.f32.mrb[0].mxu0
        %v236 = vpop.f32.mrb[0].mxu0
        %v237 = vadd.f32 0.0, %v236
        %v238 = vpop.f32.mrb[0].mxu0
        %239 = vmatprep.mubr.bf16.mxu0 0
        %240 = vmatmul.mubr.bf16.gmra.mrb[0].mxu0 %v186
        %v241 = vpop.f32.mrb[0].mxu0
        %v242 = vadd.f32 0.0, %v241
        %v243 = vpop.f32.mrb[0].mxu0
        %v244 = vpop.f32.mrb[0].mxu0
        %v245 = vpop.f32.mrb[0].mxu0
        %246 = vdwg.mxu0
        %v247 = vmul.f32 %v234, 0.17677669
        %v248 = vmul.f32 %v237, 0.17677669
        %v249 = vmul.f32 %v242, 0.17677669
        %vm250 = vcmask 138240
        %v251 = vsel %vm250, %v247, -inf
        %252 = vmax.xlane.f32.xlu0 %v251
        %v253 = vpop.xlane.xlu0 %252
        %v254 = vsel %vm250, %v248, -inf
        %255 = vmax.xlane.f32.xlu0 %v254
        %v256 = vpop.xlane.xlu0 %255
        %vm257 = vcmask 131072
        %v258 = vsel %vm257, %v249, -inf
        %259 = vmax.xlane.f32.xlu0 %v258
        %v260 = vpop.xlane.xlu0 %259
        %v261 = vsub.f32 %v247, %v253
        %v262 = vsub.f32 %v248, %v256
        %v263 = vsub.f32 %v249, %v260
        %v264 = vmul.f32 %v261, 1.442695
        %v265 = vpow.pop %v264
        %v266 = vmul.f32 %v262, 1.442695
        %v267 = vpow.pop %v266
        %v268 = vmul.f32 %v263, 1.442695
        %v269 = vpow.pop %v268
        %v270 = vsel %vm250, %v265, 0.0
        %271 = vadd.xlane.f32.xlu0 %v270
        %v272 = vpop.xlane.xlu0 %271
        %v273 = vsel %vm250, %v267, 0.0
        %274 = vadd.xlane.f32.xlu0 %v273
        %v275 = vpop.xlane.xlu0 %274
        %v276 = vsel %vm257, %v269, 0.0
        %277 = vadd.xlane.f32.xlu0 %v276
        %v278 = vpop.xlane.xlu0 %277
        %v279 = vrcp.pop %v272
        %v280 = vmul.f32 %v265, %v279
        %v281 = vrcp.pop %v275
        %v282 = vmul.f32 %v267, %v281
        %v283 = vrcp.pop %v278
        %v284 = vmul.f32 %v269, %v283
        %v285 = vpack.c.bf16 %v282, %v280
        %v286 = vpack.c.bf16 %v284, %v284
        %v290 = vunpack.c.l.b16 %v176
        %v291 = vunpack.c.l.b16 %v177
        %v292 = vunpack.c.l.b16 %v178
        %v293 = vpack.c.b16 %v291, %v290
        %v294 = vpack.c.b16 %v292, %v292
        %v297 = vsel %vm250, %v285, 0
        %v300 = vsel %vm250, %v286, 0
        %vm302 = vcmask 1040384
        %v303 = vsel 0, 4294967295, 65535
        %v304 = vsel %vm302, %v303, 0
        %v306 = vand.u32 %v294, %v304
        %308 = vmatprep.subr.bf16.mxu0 0
        %309 = vmatpush1.bf16.msra.mxu0 %v293
        %310 = vmatprep.subr.bf16.mxu0 0
        %311 = vmatpush1.bf16.msra.mxu0 %v306
        %312 = vmatprep.subr.bf16.mxu0 0
        %313 = vmatpush1.bf16.msra.mxu0 0
        %314 = vmatprep.subr.bf16.mxu0 0
        %315 = vmatpush1.bf16.msra.mxu0 0
        %316 = vmatprep.subr.bf16.mxu0 0
        %317 = vmatpush1.bf16.msra.mxu0 0
        %318 = vmatprep.subr.bf16.mxu0 0
        %319 = vmatpush1.bf16.msra.mxu0 0
        %320 = vmatprep.subr.bf16.mxu0 0
        %321 = vmatpush1.bf16.msra.mxu0 0
        %322 = vmatprep.subr.bf16.mxu0 0
        %323 = vmatpush1.bf16.msra.mxu0 0
        %324 = vmatprep.subr.bf16.mxu0 0
        %325 = vmatpush1.bf16.msra.mxu0 0
        %326 = vmatprep.subr.bf16.mxu0 0
        %327 = vmatpush1.bf16.msra.mxu0 0
        %328 = vmatprep.subr.bf16.mxu0 0
        %329 = vmatpush1.bf16.msra.mxu0 0
        %330 = vmatprep.subr.bf16.mxu0 0
        %331 = vmatpush1.bf16.msra.mxu0 0
        %332 = vmatprep.subr.bf16.mxu0 0
        %333 = vmatpush1.bf16.msra.mxu0 0
        %334 = vmatprep.subr.bf16.mxu0 0
        %335 = vmatpush1.bf16.msra.mxu0 0
        %336 = vmatprep.subr.bf16.mxu0 0
        %337 = vmatpush1.bf16.msra.mxu0 0
        %338 = vmatprep.subr.bf16.mxu0 0
        %339 = vmatpush1.bf16.msra.mxu0 0
        %340 = vmatprep.mubr.bf16.mxu0 0
        %341 = vmatmul.mubr.bf16.gmra.mrb[0].mxu0 %v297
        %v342 = vpop.f32.mrb[0].mxu0
        %v343 = vadd.f32 0.0, %v342
        %v344 = vpop.f32.mrb[0].mxu0
        %v345 = vpop.f32.mrb[0].mxu0
        %v346 = vadd.f32 0.0, %v345
        %v347 = vpop.f32.mrb[0].mxu0
        %348 = vmatprep.mubr.bf16.mxu0 0
        %349 = vmatmul.mubr.bf16.gmra.mrb[0].mxu0 %v300
        %v350 = vpop.f32.mrb[0].mxu0
        %v351 = vadd.f32 0.0, %v350
        %v352 = vpop.f32.mrb[0].mxu0
        %v353 = vpop.f32.mrb[0].mxu0
        %v354 = vpop.f32.mrb[0].mxu0
        %355 = vdwg.mxu0
        %v356 = vpack.c.bf16 %v346, %v343
        %v357 = vpack.c.bf16 %v351, %v351
        %v360 = vunpack.c.l.b16 %v356
        %v361 = vunpack.c.h.b16 %v356
        %v362 = vunpack.c.l.b16 %v357
        %v363 = vpack.c.b16 %v360, %v360
        %v364 = vpack.c.b16 %v361, %v361
        %v365 = vpack.c.b16 %v362, %v362
        %369 = vst [vmem:[%s167] sm:$0xf] %v363
        %370 = vst [vmem:[%s167 + $0x4] sm:$0xf] %v364
        %vm371 = vcmask 1040384
        %vm372 = vsmask.f32 256
        %vm373 = vmand %vm371, %vm372
        %v374 = vld [vmem:[%s167 + $0x8] sm:$0x1]
        %v375 = vsel %vm373, %v365, %v374
        %376 = vst [vmem:[%s167 + $0x8] sm:$0x1] %v375
        %s377 = sand.u32 %s62, 1
        %s378 = sand.u32 %s62, 1
        %s379 = smul.addr %s378, 12
        %s380 = scalar_lea.vmem [#allocation3], %s379
        // Predicated region
        $region51: #{_lambda_.12} parent=45 // pred_check
          %p381 = pneg %p72
        $region52: #{_lambda_.12} parent=45 // pred_check_branch
          %383 = sbr.rel (%p381) target = $region54
        $region53: #{_lambda_.12} parent=45 // pred_region
          %s384 = smul.addr %s16, 12
          %s385 = sadd.s32 %s17, %s384
          %s386 = smul.addr %s385, 4
          %s387 = scalar_lea.vmem %s1, %s386
          // Predicated region
          $region55: #{_lambda_.12} parent=53 // pred_check
            _
          $region56: #{_lambda_.12} parent=53 // pred_check_branch
            %389 = sbr.rel (0) target = $region58
          $region57: #{_lambda_.12} parent=53 // pred_region
            // Predicated region
            $region59: #{_lambda_.12} parent=57 // pred_check
              _
            $region60: #{_lambda_.12} parent=57 // pred_check_branch
              %391 = sbr.rel target = $region62
            $region61: #{_lambda_.12} parent=57 // pred_region
              // Predicated region
              $region74: #{_lambda_.12} parent=61 // pred_check
                _
              $region75: #{_lambda_.12} parent=61 // pred_check_branch
                %410 = sbr.rel (0) target = $region77
              $region76: #{_lambda_.12} parent=61 // pred_region
                loop: start=0, step=1, limit=1
                $region78: #{_lambda_.12} parent=76 // loop_pre_header
                  _
                $region79: #{_lambda_.12} parent=76 // loop_header
                  %s412 = sphi 0, %s416
                  %p413 = scmp.ge.s32.totalorder %s412, 1
                  %s417 = sphi %s380, %s380
                  %s418 = sphi %s387, %s387
                $region80: #{_lambda_.12} parent=76 // loop_header_branch
                  %415 = sbr.rel (%p413) target = $region84
                $region81: #{_lambda_.12} parent=76 // loop_body
                  _
                $region82: #{_lambda_.12} parent=76 // loop_footer
                  %s416 = sadd.s32 1, %s412
                $region83: #{_lambda_.12} parent=76 // loop_footer_branch
                  %411 = sbr.rel target = $region79
                $region84: #{_lambda_.12} parent=76 // loop_exit
                  _
                loop: start=0, step=1, limit=1
                $region85: #{_lambda_.12} parent=76 // loop_pre_header
                  _
                $region86: #{_lambda_.12} parent=76 // loop_header
                  %s421 = sphi 0, %s425
                  %p422 = scmp.ge.s32.totalorder %s421, 1
                  %s426 = sphi %s380, %s380
                  %s427 = sphi %s387, %s387
                $region87: #{_lambda_.12} parent=76 // loop_header_branch
                  %424 = sbr.rel (%p422) target = $region91
                $region88: #{_lambda_.12} parent=76 // loop_body
                  %v428 = vld [vmem:[%s426] sm:$0xf]
                  %429 = vst [vmem:[%s427] sm:$0xf] %v428
                  %v430 = vld [vmem:[%s426 + $0x4] sm:$0xf]
                  %431 = vst [vmem:[%s427 + $0x10] sm:$0xf] %v430
                  %v432 = vld [vmem:[%s426 + $0x8] sm:$0xf]
                  %433 = vst [vmem:[%s427 + $0x20] sm:$0xf] %v432
                $region89: #{_lambda_.12} parent=76 // loop_footer
                  %s425 = sadd.s32 1, %s421
                $region90: #{_lambda_.12} parent=76 // loop_footer_branch
                  %420 = sbr.rel target = $region86
                $region91: #{_lambda_.12} parent=76 // loop_exit
                  _
              $region77: #{_lambda_.12} parent=61 // pred_fallthru
                _
            $region62: #{_lambda_.12} parent=57 // pred_fallthru
              _
            // Predicated region
            $region63: #{_lambda_.12} parent=57 // pred_check
              _
            $region64: #{_lambda_.12} parent=57 // pred_check_branch
              %393 = sbr.rel (0) target = $region66
            $region65: #{_lambda_.12} parent=57 // pred_region
              loop: start=0, step=1, limit=1
              $region67: #{_lambda_.12} parent=65 // loop_pre_header
                _
              $region68: #{_lambda_.12} parent=65 // loop_header
                %s396 = sphi 0, %s400
                %p397 = scmp.ge.s32.totalorder %s396, 1
                %s401 = sphi %s380, %s380
                %s402 = sphi %s387, %s387
              $region69: #{_lambda_.12} parent=65 // loop_header_branch
                %399 = sbr.rel (%p397) target = $region73
              $region70: #{_lambda_.12} parent=65 // loop_body
                %v403 = vld [vmem:[%s401] sm:$0xf]
                %404 = vst [vmem:[%s402] sm:$0xf] %v403
                %v405 = vld [vmem:[%s401 + $0x4] sm:$0xf]
                %406 = vst [vmem:[%s402 + $0x10] sm:$0xf] %v405
                %v407 = vld [vmem:[%s401 + $0x8] sm:$0xf]
                %408 = vst [vmem:[%s402 + $0x20] sm:$0xf] %v407
              $region71: #{_lambda_.12} parent=65 // loop_footer
                %s400 = sadd.s32 1, %s396
              $region72: #{_lambda_.12} parent=65 // loop_footer_branch
                %395 = sbr.rel target = $region68
              $region73: #{_lambda_.12} parent=65 // loop_exit
                _
            $region66: #{_lambda_.12} parent=57 // pred_fallthru
              _
          $region58: #{_lambda_.12} parent=53 // pred_fallthru
            _
          %434 = vnop
        $region54: #{_lambda_.12} parent=45 // pred_fallthru
          _
      $region46: #{_lambda_.12} parent=5 // pred_fallthru
        _
      %p435 = scmp.le.s32.totalorder 2, %s7
      // Predicated region
      $region92: #{_lambda_.12} parent=5 // pred_check
        %p436 = pneg %p435
      $region93: #{_lambda_.12} parent=5 // pred_check_branch
        %438 = sbr.rel (%p436) target = $region95
      $region94: #{_lambda_.12} parent=5 // pred_region
        %s439 = ssub.s32 %s7, 2
        // Predicated region
        $region96: #{_lambda_.12} parent=94 // pred_check
          %p440 = pneg %p78
        $region97: #{_lambda_.12} parent=94 // pred_check_branch
          %442 = sbr.rel (%p440) target = $region99
        $region98: #{_lambda_.12} parent=94 // pred_region
          %s443 = sand.u32 %s63, 1
          %s444 = sand.u32 %s63, 1
          %s445 = smul.addr %s444, 12
          %s446 = scalar_lea.vmem [#allocation3], %s445
        $region99: #{_lambda_.12} parent=94 // pred_fallthru
          _
      $region95: #{_lambda_.12} parent=5 // pred_fallthru
        _
    $region6: #{_lambda_.12} parent=1 // loop_footer
      %s11 = sadd.s32 1, %s7
    $region7: #{_lambda_.12} parent=1 // loop_footer_branch
      %6 = sbr.rel target = $region3
    $region8: #{_lambda_.12} parent=1 // loop_exit
      _

// kernel: _lambda_.13
$region0: #{_lambda_.13}
  #allocation0 [shape = 'u32[]', space=smem, size = 0x4, offset = 0x4, fixed_abs, tag = 'smem constant byte address 0x4 - core index']
  #allocation1 [shape = 'u32[144,128]{1,0:T(1,128)}', space=vmem, size = 0x12000, scoped, tag = 'internal scratch']
  %s0 = inlined_call_operand.vmem [shape: bf16[48,512], index: 0, kind: input, shape index: {}]
  %s1 = inlined_call_operand.vmem [shape: bf16[512,128], index: 1, kind: input, shape index: {}]
  %s2 = inlined_call_operand.vmem [shape: f32[1,128], index: 2, kind: input, shape index: {}]
  %s3 = inlined_call_operand.vmem [shape: f32[48,128], index: 3, kind: input, shape index: {}, may-alias: {3,4}]
  %s4 = inlined_call_operand.vmem [shape: f32[48,128], index: 4, kind: output, shape index: {}, may-alias: {3,4}]
  %s5 = sld [smem:[#allocation0]]
  $region49: #{_lambda_.13} parent=0
    _
  %s7 = ssub.s32 1, %s5
  %s8 = scalar_select 0, %s7, %s5
  loop: start=0, step=1, limit=5
  $region2: #{_lambda_.13} parent=0 // loop_pre_header
    _
  $region3: #{_lambda_.13} parent=0 // loop_header
    %s10 = sphi 0, %s14
    %p11 = scmp.ge.s32.totalorder %s10, 5
    %s20 = sphi 0, %s22
    %s23 = sphi 0, %s20
    %s24 = sphi 0, %s23
    %s40 = sphi 0, %s24
    %s44 = sphi 0, %s44
    %s46 = sphi 0, %s44
    %s47 = sphi 0, %s46
    %s61 = sphi 0, %s47
    %s65 = sphi 0, %s65
    %s67 = sphi 0, %s65
    %s68 = sphi 0, %s67
    %s82 = sphi 0, %s68
    %s88 = sphi 0, %s90
    %s91 = sphi 0, %s88
    %s92 = sphi 0, %s91
    %s108 = sphi 0, %s92
    %s114 = sphi 0, %s116
    %s117 = sphi 0, %s114
    %s118 = sphi 0, %s117
    %s134 = sphi 0, %s118
  $region4: #{_lambda_.13} parent=0 // loop_header_branch
    %13 = sbr.rel (%p11) target = $region8
  $region5: #{_lambda_.13} parent=0 // loop_body
    %s15 = ssub.s32 %s10, 1
    %s16 = ssub.s32 %s10, 2
    %s17 = sadd.s32 %s10, 1
    %s18 = ssub.s32 %s10, %s17
    %p19 = scmp.eq.s32.totalorder %s18, 0
    %s21 = sadd.s32 %s20, 1
    %s22 = scalar_select %p19, %s20, %s21
    %p25 = pneg %p19
    %p26 = scmp.eq.s32.totalorder %s10, 2
    %p27 = por %p25, %p26
    %p28 = scmp.ne.s32.totalorder %s20, %s23
    %p29 = scmp.eq.s32.totalorder %s10, 0
    %p30 = por %p28, %p29
    %p31 = scmp.ne.s32.totalorder %s20, %s23
    %p32 = scmp.eq.s32.totalorder %s15, 2
    %p33 = por %p31, %p32
    %p34 = scmp.ne.s32.totalorder %s23, %s24
    %p35 = scmp.eq.s32.totalorder %s15, 0
    %p36 = por %p34, %p35
    %p37 = scmp.ne.s32.totalorder %s23, %s24
    %p38 = scmp.eq.s32.totalorder %s16, 2
    %p39 = por %p37, %p38
    %p41 = scmp.ne.s32.totalorder %s24, %s40
    %p42 = scmp.eq.s32.totalorder %s16, 0
    %p43 = por %p41, %p42
    %s45 = sadd.s32 %s44, 1
    %p48 = scmp.eq.s32.totalorder %s10, 2
    %p49 = scmp.ne.s32.totalorder %s44, %s46
    %p50 = scmp.eq.s32.totalorder %s10, 0
    %p51 = por %p49, %p50
    %p52 = scmp.ne.s32.totalorder %s44, %s46
    %p53 = scmp.eq.s32.totalorder %s15, 2
    %p54 = por %p52, %p53
    %p55 = scmp.ne.s32.totalorder %s46, %s47
    %p56 = scmp.eq.s32.totalorder %s15, 0
    %p57 = por %p55, %p56
    %p58 = scmp.ne.s32.totalorder %s46, %s47
    %p59 = scmp.eq.s32.totalorder %s16, 2
    %p60 = por %p58, %p59
    %p62 = scmp.ne.s32.totalorder %s47, %s61
    %p63 = scmp.eq.s32.totalorder %s16, 0
    %p64 = por %p62, %p63
    %s66 = sadd.s32 %s65, 1
    %p69 = scmp.eq.s32.totalorder %s10, 2
    %p70 = scmp.ne.s32.totalorder %s65, %s67
    %p71 = scmp.eq.s32.totalorder %s10, 0
    %p72 = por %p70, %p71
    %p73 = scmp.ne.s32.totalorder %s65, %s67
    %p74 = scmp.eq.s32.totalorder %s15, 2
    %p75 = por %p73, %p74
    %p76 = scmp.ne.s32.totalorder %s67, %s68
    %p77 = scmp.eq.s32.totalorder %s15, 0
    %p78 = por %p76, %p77
    %p79 = scmp.ne.s32.totalorder %s67, %s68
    %p80 = scmp.eq.s32.totalorder %s16, 2
    %p81 = por %p79, %p80
    %p83 = scmp.ne.s32.totalorder %s68, %s82
    %p84 = scmp.eq.s32.totalorder %s16, 0
    %p85 = por %p83, %p84
    %s86 = ssub.s32 %s10, %s17
    %p87 = scmp.eq.s32.totalorder %s86, 0
    %s89 = sadd.s32 %s88, 1
    %s90 = scalar_select %p87, %s88, %s89
    %p93 = pneg %p87
    %p94 = scmp.eq.s32.totalorder %s10, 2
    %p95 = por %p93, %p94
    %p96 = scmp.ne.s32.totalorder %s88, %s91
    %p97 = scmp.eq.s32.totalorder %s10, 0
    %p98 = por %p96, %p97
    %p99 = scmp.ne.s32.totalorder %s88, %s91
    %p100 = scmp.eq.s32.totalorder %s15, 2
    %p101 = por %p99, %p100
    %p102 = scmp.ne.s32.totalorder %s91, %s92
    %p103 = scmp.eq.s32.totalorder %s15, 0
    %p104 = por %p102, %p103
    %p105 = scmp.ne.s32.totalorder %s91, %s92
    %p106 = scmp.eq.s32.totalorder %s16, 2
    %p107 = por %p105, %p106
    %p109 = scmp.ne.s32.totalorder %s92, %s108
    %p110 = scmp.eq.s32.totalorder %s16, 0
    %p111 = por %p109, %p110
    %s112 = ssub.s32 %s10, %s17
    %p113 = scmp.eq.s32.totalorder %s112, 0
    %s115 = sadd.s32 %s114, 1
    %s116 = scalar_select %p113, %s114, %s115
    %p119 = pneg %p113
    %p120 = scmp.eq.s32.totalorder %s10, 2
    %p121 = por %p119, %p120
    %p122 = scmp.ne.s32.totalorder %s114, %s117
    %p123 = scmp.eq.s32.totalorder %s10, 0
    %p124 = por %p122, %p123
    %p125 = scmp.ne.s32.totalorder %s114, %s117
    %p126 = scmp.eq.s32.totalorder %s15, 2
    %p127 = por %p125, %p126
    %p128 = scmp.ne.s32.totalorder %s117, %s118
    %p129 = scmp.eq.s32.totalorder %s15, 0
    %p130 = por %p128, %p129
    %p131 = scmp.ne.s32.totalorder %s117, %s118
    %p132 = scmp.eq.s32.totalorder %s16, 2
    %p133 = por %p131, %p132
    %p135 = scmp.ne.s32.totalorder %s118, %s134
    %p136 = scmp.eq.s32.totalorder %s16, 0
    %p137 = por %p135, %p136
    %p138 = scmp.le.s32.totalorder 1, %s10
    %p139 = scmp.lt.s32.totalorder %s10, 4
    %p140 = pnand %p138, %p139
    %p141 = pneg %p140
    // Predicated region
    $region9: #{_lambda_.13} parent=5 // pred_check
      _
    $region10: #{_lambda_.13} parent=5 // pred_check_branch
      %143 = sbr.rel (%p140) target = $region12
    $region11: #{_lambda_.13} parent=5 // pred_region
      %s144 = ssub.s32 %s10, 1
      // Predicated region
      $region13: #{_lambda_.13} parent=11 // pred_check
        %p145 = pneg %p57
      $region14: #{_lambda_.13} parent=11 // pred_check_branch
        %147 = sbr.rel (%p145) target = $region16
      $region15: #{_lambda_.13} parent=11 // pred_region
        _
      $region16: #{_lambda_.13} parent=11 // pred_fallthru
        _
      // Predicated region
      $region17: #{_lambda_.13} parent=11 // pred_check
        %p148 = pneg %p78
      $region18: #{_lambda_.13} parent=11 // pred_check_branch
        %150 = sbr.rel (%p148) target = $region20
      $region19: #{_lambda_.13} parent=11 // pred_region
        _
      $region20: #{_lambda_.13} parent=11 // pred_fallthru
        _
    $region12: #{_lambda_.13} parent=5 // pred_fallthru
      _
    %p151 = scmp.lt.s32.totalorder %s10, 3
    // Predicated region
    $region21: #{_lambda_.13} parent=5 // pred_check
      %p152 = pneg %p151
    $region22: #{_lambda_.13} parent=5 // pred_check_branch
      %154 = sbr.rel (%p152) target = $region24
    $region23: #{_lambda_.13} parent=5 // pred_region
      // Predicated region
      $region25: #{_lambda_.13} parent=23 // pred_check
        %p155 = pneg %p30
      $region26: #{_lambda_.13} parent=23 // pred_check_branch
        %157 = sbr.rel (%p155) target = $region28
      $region27: #{_lambda_.13} parent=23 // pred_region
        %s158 = smul.u32 2, %s10
        %p159 = scmp.lt.s32.totalorder %s158, 5
        %s160 = scalar_select %p159, %s158, 5
        %s161 = smul.addr %s160, 4
        %s162 = smul.addr %s161, 4
        %s163 = scalar_lea.vmem %s0, %s162
        %s164 = smul.u32 2, %s10
      $region28: #{_lambda_.13} parent=23 // pred_fallthru
        _
      // Predicated region
      $region29: #{_lambda_.13} parent=23 // pred_check
        %p165 = pneg %p98
      $region30: #{_lambda_.13} parent=23 // pred_check_branch
        %167 = sbr.rel (%p165) target = $region32
      $region31: #{_lambda_.13} parent=23 // pred_region
        %s168 = smul.u32 2, %s10
        %p169 = scmp.lt.s32.totalorder %s168, 5
        %s170 = scalar_select %p169, %s168, 5
        %s171 = smul.addr %s170, 8
        %s172 = scalar_lea.vmem %s3, %s171
        %s173 = smul.u32 2, %s10
      $region32: #{_lambda_.13} parent=23 // pred_fallthru
        _
    $region24: #{_lambda_.13} parent=5 // pred_fallthru
      _
    %p174 = scmp.le.s32.totalorder 1, %s10
    %p175 = scmp.lt.s32.totalorder %s10, 4
    %p176 = pnand %p174, %p175
    %p177 = pneg %p176
    // Predicated region
    $region33: #{_lambda_.13} parent=5 // pred_check
      _
    $region34: #{_lambda_.13} parent=5 // pred_check_branch
      %179 = sbr.rel (%p176) target = $region36
    $region35: #{_lambda_.13} parent=5 // pred_region
      %s180 = ssub.s32 %s10, 1
      %s181 = smul.u32 2, %s15
      %p182 = scmp.lt.s32.totalorder %s181, 5
      %s183 = scalar_select %p182, %s181, 5
      %s184 = smul.addr %s183, 4
      %s185 = smul.addr %s184, 4
      %s186 = scalar_lea.vmem %s0, %s185
      %p187 = pneg %p36
      %p188 = pneg %p33
      %p189 = pneg %p57
      %p190 = pneg %p54
      %p191 = pneg %p78
      %p192 = pneg %p75
      %s193 = smul.u32 2, %s15
      %p194 = scmp.lt.s32.totalorder %s193, 5
      %s195 = scalar_select %p194, %s193, 5
      %s196 = smul.addr %s195, 8
      %s197 = scalar_lea.vmem %s3, %s196
      %p198 = pneg %p104
      %p199 = pneg %p101
      %p200 = pneg %p130
      %p201 = pneg %p127
      %s202 = smul.u32 2, %s15
      %p203 = scmp.lt.s32.totalorder %s202, 5
      %s204 = scalar_select %p203, %s202, 5
      %s205 = smul.addr %s204, 8
      %s206 = scalar_lea.vmem %s4, %s205
      %s207 = smul.u32 2, %s15
      %p208 = scmp.lt.s32.totalorder %s207, 5
      %s209 = scalar_select %p208, %s207, 5
      %s210 = smul.addr %s209, 4
      %s211 = smul.addr %s210, 4
      %s212 = scalar_lea.vmem %s0, %s211
      %s213 = smul.u32 2, %s15
      %s214 = smul.u32 2, %s15
      %p215 = scmp.lt.s32.totalorder %s214, 5
      %s216 = scalar_select %p215, %s214, 5
      %s217 = smul.addr %s216, 8
      %s218 = scalar_lea.vmem %s3, %s217
      %s219 = smul.u32 2, %s15
      %s220 = smul.u32 2, %s15
      %p221 = scmp.lt.s32.totalorder %s220, 5
      %s222 = scalar_select %p221, %s220, 5
      %s223 = smul.addr %s222, 8
      %s224 = scalar_lea.vmem %s4, %s223
      %s225 = smul.u32 2, %s15
      %v227 = vld [vmem:[%s212] sm:$0xff]
      %v228 = vld [vmem:[%s212 + $0x8] sm:$0xff]
      %v229 = vld [vmem:[%s212 + $0x10] sm:$0xff]
      %v230 = vld [vmem:[%s212 + $0x18] sm:$0xff]
      %v231 = vld [vmem:[%s1] sm:$0xf]
      %v232 = vld [vmem:[%s1 + $0x4] sm:$0xf]
      %v233 = vld [vmem:[%s1 + $0x8] sm:$0xf]
      %v234 = vld [vmem:[%s1 + $0xc] sm:$0xf]
      %v235 = vld [vmem:[%s1 + $0x10] sm:$0xf]
      %v236 = vld [vmem:[%s1 + $0x14] sm:$0xf]
      %v237 = vld [vmem:[%s1 + $0x18] sm:$0xf]
      %v238 = vld [vmem:[%s1 + $0x1c] sm:$0xf]
      %v239 = vld [vmem:[%s1 + $0x20] sm:$0xf]
      %v240 = vld [vmem:[%s1 + $0x24] sm:$0xf]
      %v241 = vld [vmem:[%s1 + $0x28] sm:$0xf]
      %v242 = vld [vmem:[%s1 + $0x2c] sm:$0xf]
      %v243 = vld [vmem:[%s1 + $0x30] sm:$0xf]
      %v244 = vld [vmem:[%s1 + $0x34] sm:$0xf]
      %v245 = vld [vmem:[%s1 + $0x38] sm:$0xf]
      %v246 = vld [vmem:[%s1 + $0x3c] sm:$0xf]
      %v247 = vld [vmem:[%s1 + $0x40] sm:$0xf]
      %v248 = vld [vmem:[%s1 + $0x44] sm:$0xf]
      %v249 = vld [vmem:[%s1 + $0x48] sm:$0xf]
      %v250 = vld [vmem:[%s1 + $0x4c] sm:$0xf]
      %v251 = vld [vmem:[%s1 + $0x50] sm:$0xf]
      %v252 = vld [vmem:[%s1 + $0x54] sm:$0xf]
      %v253 = vld [vmem:[%s1 + $0x58] sm:$0xf]
      %v254 = vld [vmem:[%s1 + $0x5c] sm:$0xf]
      %v255 = vld [vmem:[%s1 + $0x60] sm:$0xf]
      %v256 = vld [vmem:[%s1 + $0x64] sm:$0xf]
      %v257 = vld [vmem:[%s1 + $0x68] sm:$0xf]
      %v258 = vld [vmem:[%s1 + $0x6c] sm:$0xf]
      %v259 = vld [vmem:[%s1 + $0x70] sm:$0xf]
      %v260 = vld [vmem:[%s1 + $0x74] sm:$0xf]
      %v261 = vld [vmem:[%s1 + $0x78] sm:$0xf]
      %v262 = vld [vmem:[%s1 + $0x7c] sm:$0xf]
      %v263 = vld [vmem:[%s1 + $0x80] sm:$0xf]
      %v264 = vld [vmem:[%s1 + $0x84] sm:$0xf]
      %v265 = vld [vmem:[%s1 + $0x88] sm:$0xf]
      %v266 = vld [vmem:[%s1 + $0x8c] sm:$0xf]
      %v267 = vld [vmem:[%s1 + $0x90] sm:$0xf]
      %v268 = vld [vmem:[%s1 + $0x94] sm:$0xf]
      %v269 = vld [vmem:[%s1 + $0x98] sm:$0xf]
      %v270 = vld [vmem:[%s1 + $0x9c] sm:$0xf]
      %v271 = vld [vmem:[%s1 + $0xa0] sm:$0xf]
      %v272 = vld [vmem:[%s1 + $0xa4] sm:$0xf]
      %v273 = vld [vmem:[%s1 + $0xa8] sm:$0xf]
      %v274 = vld [vmem:[%s1 + $0xac] sm:$0xf]
      %v275 = vld [vmem:[%s1 + $0xb0] sm:$0xf]
      %v276 = vld [vmem:[%s1 + $0xb4] sm:$0xf]
      %v277 = vld [vmem:[%s1 + $0xb8] sm:$0xf]
      %v278 = vld [vmem:[%s1 + $0xbc] sm:$0xf]
      %v279 = vld [vmem:[%s1 + $0xc0] sm:$0xf]
      %v280 = vld [vmem:[%s1 + $0xc4] sm:$0xf]
      %v281 = vld [vmem:[%s1 + $0xc8] sm:$0xf]
      %v282 = vld [vmem:[%s1 + $0xcc] sm:$0xf]
      %v283 = vld [vmem:[%s1 + $0xd0] sm:$0xf]
      %v284 = vld [vmem:[%s1 + $0xd4] sm:$0xf]
      %v285 = vld [vmem:[%s1 + $0xd8] sm:$0xf]
      %v286 = vld [vmem:[%s1 + $0xdc] sm:$0xf]
      %v287 = vld [vmem:[%s1 + $0xe0] sm:$0xf]
      %v288 = vld [vmem:[%s1 + $0xe4] sm:$0xf]
      %v289 = vld [vmem:[%s1 + $0xe8] sm:$0xf]
      %v290 = vld [vmem:[%s1 + $0xec] sm:$0xf]
      %v291 = vld [vmem:[%s1 + $0xf0] sm:$0xf]
      %v292 = vld [vmem:[%s1 + $0xf4] sm:$0xf]
      %v293 = vld [vmem:[%s1 + $0xf8] sm:$0xf]
      %v294 = vld [vmem:[%s1 + $0xfc] sm:$0xf]
      %v295 = vld [vmem:[%s2] sm:$0x1]
      %v297 = vlaneseq
      %v298 = vshrl.u32 %v297, 7
      %v299 = vsub.s32 0, %v298
      %v300 = vrot.slane %v295, %v299
      %v306 = vunpack.c.l.b16 %v227
      %v307 = vunpack.c.h.b16 %v227
      %v308 = vunpack.c.l.b16 %v228
      %v309 = vunpack.c.h.b16 %v228
      %v310 = vunpack.c.l.b16 %v229
      %v311 = vunpack.c.h.b16 %v229
      %v312 = vunpack.c.l.b16 %v230
      %v313 = vunpack.c.h.b16 %v230
      %v314 = vpack.c.b16 %v310, %v306
      %v315 = vpack.c.b16 %v311, %v307
      %v316 = vpack.c.b16 %v312, %v308
      %v317 = vpack.c.b16 %v313, %v309
      %v386 = vunpack.c.l.b16 %v231
      %v387 = vunpack.c.l.b16 %v232
      %v388 = vunpack.c.l.b16 %v233
      %v389 = vunpack.c.l.b16 %v234
      %v390 = vunpack.c.l.b16 %v235
      %v391 = vunpack.c.l.b16 %v236
      %v392 = vunpack.c.l.b16 %v237
      %v393 = vunpack.c.l.b16 %v238
      %v394 = vunpack.c.l.b16 %v239
      %v395 = vunpack.c.l.b16 %v240
      %v396 = vunpack.c.l.b16 %v241
      %v397 = vunpack.c.l.b16 %v242
      %v398 = vunpack.c.l.b16 %v243
      %v399 = vunpack.c.l.b16 %v244
      %v400 = vunpack.c.l.b16 %v245
      %v401 = vunpack.c.l.b16 %v246
      %v402 = vunpack.c.l.b16 %v247
      %v403 = vunpack.c.l.b16 %v248
      %v404 = vunpack.c.l.b16 %v249
      %v405 = vunpack.c.l.b16 %v250
      %v406 = vunpack.c.l.b16 %v251
      %v407 = vunpack.c.l.b16 %v252
      %v408 = vunpack.c.l.b16 %v253
      %v409 = vunpack.c.l.b16 %v254
      %v410 = vunpack.c.l.b16 %v255
      %v411 = vunpack.c.l.b16 %v256
      %v412 = vunpack.c.l.b16 %v257
      %v413 = vunpack.c.l.b16 %v258
      %v414 = vunpack.c.l.b16 %v259
      %v415 = vunpack.c.l.b16 %v260
      %v416 = vunpack.c.l.b16 %v261
      %v417 = vunpack.c.l.b16 %v262
      %v418 = vunpack.c.l.b16 %v263
      %v419 = vunpack.c.l.b16 %v264
      %v420 = vunpack.c.l.b16 %v265
      %v421 = vunpack.c.l.b16 %v266
      %v422 = vunpack.c.l.b16 %v267
      %v423 = vunpack.c.l.b16 %v268
      %v424 = vunpack.c.l.b16 %v269
      %v425 = vunpack.c.l.b16 %v270
      %v426 = vunpack.c.l.b16 %v271
      %v427 = vunpack.c.l.b16 %v272
      %v428 = vunpack.c.l.b16 %v273
      %v429 = vunpack.c.l.b16 %v274
      %v430 = vunpack.c.l.b16 %v275
      %v431 = vunpack.c.l.b16 %v276
      %v432 = vunpack.c.l.b16 %v277
      %v433 = vunpack.c.l.b16 %v278
      %v434 = vunpack.c.l.b16 %v279
      %v435 = vunpack.c.l.b16 %v280
      %v436 = vunpack.c.l.b16 %v281
      %v437 = vunpack.c.l.b16 %v282
      %v438 = vunpack.c.l.b16 %v283
      %v439 = vunpack.c.l.b16 %v284
      %v440 = vunpack.c.l.b16 %v285
      %v441 = vunpack.c.l.b16 %v286
      %v442 = vunpack.c.l.b16 %v287
      %v443 = vunpack.c.l.b16 %v288
      %v444 = vunpack.c.l.b16 %v289
      %v445 = vunpack.c.l.b16 %v290
      %v446 = vunpack.c.l.b16 %v291
      %v447 = vunpack.c.l.b16 %v292
      %v448 = vunpack.c.l.b16 %v293
      %v449 = vunpack.c.l.b16 %v294
      %v450 = vpack.c.b16 %v387, %v386
      %v451 = vpack.c.b16 %v389, %v388
      %v452 = vpack.c.b16 %v391, %v390
      %v453 = vpack.c.b16 %v393, %v392
      %v454 = vpack.c.b16 %v395, %v394
      %v455 = vpack.c.b16 %v397, %v396
      %v456 = vpack.c.b16 %v399, %v398
      %v457 = vpack.c.b16 %v401, %v400
      %v458 = vpack.c.b16 %v403, %v402
      %v459 = vpack.c.b16 %v405, %v404
      %v460 = vpack.c.b16 %v407, %v406
      %v461 = vpack.c.b16 %v409, %v408
      %v462 = vpack.c.b16 %v411, %v410
      %v463 = vpack.c.b16 %v413, %v412
      %v464 = vpack.c.b16 %v415, %v414
      %v465 = vpack.c.b16 %v417, %v416
      %v466 = vpack.c.b16 %v419, %v418
      %v467 = vpack.c.b16 %v421, %v420
      %v468 = vpack.c.b16 %v423, %v422
      %v469 = vpack.c.b16 %v425, %v424
      %v470 = vpack.c.b16 %v427, %v426
      %v471 = vpack.c.b16 %v429, %v428
      %v472 = vpack.c.b16 %v431, %v430
      %v473 = vpack.c.b16 %v433, %v432
      %v474 = vpack.c.b16 %v435, %v434
      %v475 = vpack.c.b16 %v437, %v436
      %v476 = vpack.c.b16 %v439, %v438
      %v477 = vpack.c.b16 %v441, %v440
      %v478 = vpack.c.b16 %v443, %v442
      %v479 = vpack.c.b16 %v445, %v444
      %v480 = vpack.c.b16 %v447, %v446
      %v481 = vpack.c.b16 %v449, %v448
      %514 = vmatprep.subr.bf16.mxu0 0
      %515 = vmatpush1.bf16.msra.mxu0 %v450
      %516 = vmatprep.subr.bf16.mxu0 0
      %517 = vmatpush1.bf16.msra.mxu0 %v451
      %518 = vmatprep.subr.bf16.mxu0 0
      %519 = vmatpush1.bf16.msra.mxu0 %v452
      %520 = vmatprep.subr.bf16.mxu0 0
      %521 = vmatpush1.bf16.msra.mxu0 %v453
      %522 = vmatprep.subr.bf16.mxu0 0
      %523 = vmatpush1.bf16.msra.mxu0 %v454
      %524 = vmatprep.subr.bf16.mxu0 0
      %525 = vmatpush1.bf16.msra.mxu0 %v455
      %526 = vmatprep.subr.bf16.mxu0 0
      %527 = vmatpush1.bf16.msra.mxu0 %v456
      %528 = vmatprep.subr.bf16.mxu0 0
      %529 = vmatpush1.bf16.msra.mxu0 %v457
      %530 = vmatprep.subr.bf16.mxu0 0
      %531 = vmatpush1.bf16.msra.mxu0 %v458
      %532 = vmatprep.subr.bf16.mxu0 0
      %533 = vmatpush1.bf16.msra.mxu0 %v459
      %534 = vmatprep.subr.bf16.mxu0 0
      %535 = vmatpush1.bf16.msra.mxu0 %v460
      %536 = vmatprep.subr.bf16.mxu0 0
      %537 = vmatpush1.bf16.msra.mxu0 %v461
      %538 = vmatprep.subr.bf16.mxu0 0
      %539 = vmatpush1.bf16.msra.mxu0 %v462
      %540 = vmatprep.subr.bf16.mxu0 0
      %541 = vmatpush1.bf16.msra.mxu0 %v463
      %542 = vmatprep.subr.bf16.mxu0 0
      %543 = vmatpush1.bf16.msra.mxu0 %v464
      %544 = vmatprep.subr.bf16.mxu0 0
      %545 = vmatpush1.bf16.msra.mxu0 %v465
      %546 = vmatprep.mubr.bf16.mxu0 %v315
      %547 = vmatmul.mubr.bf16.gmra.mrb[0].mxu0 %v314
      %v548 = vpop.f32.mrb[0].mxu0
      %v549 = vadd.f32 %v300, %v548
      %v550 = vpop.f32.mrb[0].mxu0
      %v551 = vpop.f32.mrb[0].mxu0
      %v552 = vadd.f32 %v300, %v551
      %v553 = vpop.f32.mrb[0].mxu0
      %554 = vdwg.mxu0
      %555 = vmatprep.subr.bf16.mxu0 0
      %556 = vmatpush1.bf16.msra.mxu0 %v466
      %557 = vmatprep.subr.bf16.mxu0 0
      %558 = vmatpush1.bf16.msra.mxu0 %v467
      %559 = vmatprep.subr.bf16.mxu0 0
      %560 = vmatpush1.bf16.msra.mxu0 %v468
      %561 = vmatprep.subr.bf16.mxu0 0
      %562 = vmatpush1.bf16.msra.mxu0 %v469
      %563 = vmatprep.subr.bf16.mxu0 0
      %564 = vmatpush1.bf16.msra.mxu0 %v470
      %565 = vmatprep.subr.bf16.mxu0 0
      %566 = vmatpush1.bf16.msra.mxu0 %v471
      %567 = vmatprep.subr.bf16.mxu0 0
      %568 = vmatpush1.bf16.msra.mxu0 %v472
      %569 = vmatprep.subr.bf16.mxu0 0
      %570 = vmatpush1.bf16.msra.mxu0 %v473
      %571 = vmatprep.subr.bf16.mxu0 0
      %572 = vmatpush1.bf16.msra.mxu0 %v474
      %573 = vmatprep.subr.bf16.mxu0 0
      %574 = vmatpush1.bf16.msra.mxu0 %v475
      %575 = vmatprep.subr.bf16.mxu0 0
      %576 = vmatpush1.bf16.msra.mxu0 %v476
      %577 = vmatprep.subr.bf16.mxu0 0
      %578 = vmatpush1.bf16.msra.mxu0 %v477
      %579 = vmatprep.subr.bf16.mxu0 0
      %580 = vmatpush1.bf16.msra.mxu0 %v478
      %581 = vmatprep.subr.bf16.mxu0 0
      %582 = vmatpush1.bf16.msra.mxu0 %v479
      %583 = vmatprep.subr.bf16.mxu0 0
      %584 = vmatpush1.bf16.msra.mxu0 %v480
      %585 = vmatprep.subr.bf16.mxu0 0
      %586 = vmatpush1.bf16.msra.mxu0 %v481
      %587 = vmatprep.mubr.bf16.mxu0 %v317
      %588 = vmatmul.mubr.bf16.gmra.mrb[0].mxu0 %v316
      %v589 = vpop.f32.mrb[0].mxu0
      %v590 = vadd.f32 %v549, %v589
      %v591 = vpop.f32.mrb[0].mxu0
      %v592 = vpop.f32.mrb[0].mxu0
      %v593 = vadd.f32 %v552, %v592
      %v594 = vpop.f32.mrb[0].mxu0
      %595 = vdwg.mxu0
      %v596 = vld [vmem:[%s218] sm:$0xff]
      %v597 = vld [vmem:[%s218 + $0x8] sm:$0xff]
      %v598 = vadd.f32 %v590, %v596
      %v599 = vadd.f32 %v593, %v597
      %600 = vst [vmem:[%s224] sm:$0xff] %v598
      %601 = vst [vmem:[%s224 + $0x8] sm:$0xff] %v599
      %s602 = smul.u32 2, %s15
      %p603 = scmp.lt.s32.totalorder %s602, 5
      %s604 = scalar_select %p603, %s602, 5
      %s605 = smul.addr %s604, 8
      %s606 = scalar_lea.vmem %s4, %s605
      // Predicated region
      $region37: #{_lambda_.13} parent=35 // pred_check
        %p607 = pneg %p127
      $region38: #{_lambda_.13} parent=35 // pred_check_branch
        %609 = sbr.rel (%p607) target = $region40
      $region39: #{_lambda_.13} parent=35 // pred_region
        %s610 = smul.u32 2, %s15
      $region40: #{_lambda_.13} parent=35 // pred_fallthru
        _
    $region36: #{_lambda_.13} parent=5 // pred_fallthru
      _
    %p611 = scmp.le.s32.totalorder 2, %s10
    // Predicated region
    $region41: #{_lambda_.13} parent=5 // pred_check
      %p612 = pneg %p611
    $region42: #{_lambda_.13} parent=5 // pred_check_branch
      %614 = sbr.rel (%p612) target = $region44
    $region43: #{_lambda_.13} parent=5 // pred_region
      %s615 = ssub.s32 %s10, 2
      // Predicated region
      $region45: #{_lambda_.13} parent=43 // pred_check
        %p616 = pneg %p133
      $region46: #{_lambda_.13} parent=43 // pred_check_branch
        %618 = sbr.rel (%p616) target = $region48
      $region47: #{_lambda_.13} parent=43 // pred_region
        %s619 = smul.u32 2, %s16
        %p620 = scmp.lt.s32.totalorder %s619, 5
        %s621 = scalar_select %p620, %s619, 5
        %s622 = smul.addr %s621, 8
        %s623 = scalar_lea.vmem %s4, %s622
      $region48: #{_lambda_.13} parent=43 // pred_fallthru
        _
    $region44: #{_lambda_.13} parent=5 // pred_fallthru
      _
  $region6: #{_lambda_.13} parent=0 // loop_footer
    %s14 = sadd.s32 1, %s10
  $region7: #{_lambda_.13} parent=0 // loop_footer_branch
    %9 = sbr.rel target = $region3
  $region8: #{_lambda_.13} parent=0 // loop_exit
    _

// kernel: _lambda_.14
$region0: #{_lambda_.14}
  #allocation0 [shape = 'u32[]', space=smem, size = 0x4, offset = 0x4, fixed_abs, tag = 'smem constant byte address 0x4 - core index']
  #allocation1 [shape = 'u32[144,128]{1,0:T(1,128)}', space=vmem, size = 0x12000, scoped, tag = 'internal scratch']
  %s0 = inlined_call_operand.vmem [shape: f32[48,128], index: 0, kind: input, shape index: {}]
  %s1 = inlined_call_operand.vmem [shape: f32[1,128], index: 1, kind: input, shape index: {}]
  %s2 = inlined_call_operand.vmem [shape: f32[1,128], index: 2, kind: input, shape index: {}]
  %s3 = inlined_call_operand.vmem [shape: bf16[128,256], index: 3, kind: input, shape index: {}]
  %s4 = inlined_call_operand.vmem [shape: f32[1,256], index: 4, kind: input, shape index: {}]
  %s5 = inlined_call_operand.vmem [shape: bf16[256,128], index: 5, kind: input, shape index: {}]
  %s6 = inlined_call_operand.vmem [shape: f32[1,128], index: 6, kind: input, shape index: {}]
  %s7 = inlined_call_operand.vmem [shape: f32[48,128], index: 7, kind: output, shape index: {}]
  %s8 = sld [smem:[#allocation0]]
  $region61: #{_lambda_.14} parent=0
    _
  %s10 = ssub.s32 1, %s8
  %s11 = scalar_select 0, %s10, %s8
  loop: start=0, step=1, limit=5
  $region2: #{_lambda_.14} parent=0 // loop_pre_header
    _
  $region3: #{_lambda_.14} parent=0 // loop_header
    %s13 = sphi 0, %s17
    %p14 = scmp.ge.s32.totalorder %s13, 5
    %s23 = sphi 0, %s25
    %s26 = sphi 0, %s23
    %s27 = sphi 0, %s26
    %s43 = sphi 0, %s27
    %s47 = sphi 0, %s47
    %s49 = sphi 0, %s47
    %s50 = sphi 0, %s49
    %s64 = sphi 0, %s50
    %s68 = sphi 0, %s68
    %s70 = sphi 0, %s68
    %s71 = sphi 0, %s70
    %s85 = sphi 0, %s71
    %s89 = sphi 0, %s89
    %s91 = sphi 0, %s89
    %s92 = sphi 0, %s91
    %s106 = sphi 0, %s92
    %s110 = sphi 0, %s110
    %s112 = sphi 0, %s110
    %s113 = sphi 0, %s112
    %s127 = sphi 0, %s113
    %s131 = sphi 0, %s131
    %s133 = sphi 0, %s131
    %s134 = sphi 0, %s133
    %s148 = sphi 0, %s134
    %s152 = sphi 0, %s152
    %s154 = sphi 0, %s152
    %s155 = sphi 0, %s154
    %s169 = sphi 0, %s155
    %s175 = sphi 0, %s177
    %s178 = sphi 0, %s175
    %s179 = sphi 0, %s178
    %s195 = sphi 0, %s179
  $region4: #{_lambda_.14} parent=0 // loop_header_branch
    %16 = sbr.rel (%p14) target = $region8
  $region5: #{_lambda_.14} parent=0 // loop_body
    %s18 = ssub.s32 %s13, 1
    %s19 = ssub.s32 %s13, 2
    %s20 = sadd.s32 %s13, 1
    %s21 = ssub.s32 %s13, %s20
    %p22 = scmp.eq.s32.totalorder %s21, 0
    %s24 = sadd.s32 %s23, 1
    %s25 = scalar_select %p22, %s23, %s24
    %p28 = pneg %p22
    %p29 = scmp.eq.s32.totalorder %s13, 2
    %p30 = por %p28, %p29
    %p31 = scmp.ne.s32.totalorder %s23, %s26
    %p32 = scmp.eq.s32.totalorder %s13, 0
    %p33 = por %p31, %p32
    %p34 = scmp.ne.s32.totalorder %s23, %s26
    %p35 = scmp.eq.s32.totalorder %s18, 2
    %p36 = por %p34, %p35
    %p37 = scmp.ne.s32.totalorder %s26, %s27
    %p38 = scmp.eq.s32.totalorder %s18, 0
    %p39 = por %p37, %p38
    %p40 = scmp.ne.s32.totalorder %s26, %s27
    %p41 = scmp.eq.s32.totalorder %s19, 2
    %p42 = por %p40, %p41
    %p44 = scmp.ne.s32.totalorder %s27, %s43
    %p45 = scmp.eq.s32.totalorder %s19, 0
    %p46 = por %p44, %p45
    %s48 = sadd.s32 %s47, 1
    %p51 = scmp.eq.s32.totalorder %s13, 2
    %p52 = scmp.ne.s32.totalorder %s47, %s49
    %p53 = scmp.eq.s32.totalorder %s13, 0
    %p54 = por %p52, %p53
    %p55 = scmp.ne.s32.totalorder %s47, %s49
    %p56 = scmp.eq.s32.totalorder %s18, 2
    %p57 = por %p55, %p56
    %p58 = scmp.ne.s32.totalorder %s49, %s50
    %p59 = scmp.eq.s32.totalorder %s18, 0
    %p60 = por %p58, %p59
    %p61 = scmp.ne.s32.totalorder %s49, %s50
    %p62 = scmp.eq.s32.totalorder %s19, 2
    %p63 = por %p61, %p62
    %p65 = scmp.ne.s32.totalorder %s50, %s64
    %p66 = scmp.eq.s32.totalorder %s19, 0
    %p67 = por %p65, %p66
    %s69 = sadd.s32 %s68, 1
    %p72 = scmp.eq.s32.totalorder %s13, 2
    %p73 = scmp.ne.s32.totalorder %s68, %s70
    %p74 = scmp.eq.s32.totalorder %s13, 0
    %p75 = por %p73, %p74
    %p76 = scmp.ne.s32.totalorder %s68, %s70
    %p77 = scmp.eq.s32.totalorder %s18, 2
    %p78 = por %p76, %p77
    %p79 = scmp.ne.s32.totalorder %s70, %s71
    %p80 = scmp.eq.s32.totalorder %s18, 0
    %p81 = por %p79, %p80
    %p82 = scmp.ne.s32.totalorder %s70, %s71
    %p83 = scmp.eq.s32.totalorder %s19, 2
    %p84 = por %p82, %p83
    %p86 = scmp.ne.s32.totalorder %s71, %s85
    %p87 = scmp.eq.s32.totalorder %s19, 0
    %p88 = por %p86, %p87
    %s90 = sadd.s32 %s89, 1
    %p93 = scmp.eq.s32.totalorder %s13, 2
    %p94 = scmp.ne.s32.totalorder %s89, %s91
    %p95 = scmp.eq.s32.totalorder %s13, 0
    %p96 = por %p94, %p95
    %p97 = scmp.ne.s32.totalorder %s89, %s91
    %p98 = scmp.eq.s32.totalorder %s18, 2
    %p99 = por %p97, %p98
    %p100 = scmp.ne.s32.totalorder %s91, %s92
    %p101 = scmp.eq.s32.totalorder %s18, 0
    %p102 = por %p100, %p101
    %p103 = scmp.ne.s32.totalorder %s91, %s92
    %p104 = scmp.eq.s32.totalorder %s19, 2
    %p105 = por %p103, %p104
    %p107 = scmp.ne.s32.totalorder %s92, %s106
    %p108 = scmp.eq.s32.totalorder %s19, 0
    %p109 = por %p107, %p108
    %s111 = sadd.s32 %s110, 1
    %p114 = scmp.eq.s32.totalorder %s13, 2
    %p115 = scmp.ne.s32.totalorder %s110, %s112
    %p116 = scmp.eq.s32.totalorder %s13, 0
    %p117 = por %p115, %p116
    %p118 = scmp.ne.s32.totalorder %s110, %s112
    %p119 = scmp.eq.s32.totalorder %s18, 2
    %p120 = por %p118, %p119
    %p121 = scmp.ne.s32.totalorder %s112, %s113
    %p122 = scmp.eq.s32.totalorder %s18, 0
    %p123 = por %p121, %p122
    %p124 = scmp.ne.s32.totalorder %s112, %s113
    %p125 = scmp.eq.s32.totalorder %s19, 2
    %p126 = por %p124, %p125
    %p128 = scmp.ne.s32.totalorder %s113, %s127
    %p129 = scmp.eq.s32.totalorder %s19, 0
    %p130 = por %p128, %p129
    %s132 = sadd.s32 %s131, 1
    %p135 = scmp.eq.s32.totalorder %s13, 2
    %p136 = scmp.ne.s32.totalorder %s131, %s133
    %p137 = scmp.eq.s32.totalorder %s13, 0
    %p138 = por %p136, %p137
    %p139 = scmp.ne.s32.totalorder %s131, %s133
    %p140 = scmp.eq.s32.totalorder %s18, 2
    %p141 = por %p139, %p140
    %p142 = scmp.ne.s32.totalorder %s133, %s134
    %p143 = scmp.eq.s32.totalorder %s18, 0
    %p144 = por %p142, %p143
    %p145 = scmp.ne.s32.totalorder %s133, %s134
    %p146 = scmp.eq.s32.totalorder %s19, 2
    %p147 = por %p145, %p146
    %p149 = scmp.ne.s32.totalorder %s134, %s148
    %p150 = scmp.eq.s32.totalorder %s19, 0
    %p151 = por %p149, %p150
    %s153 = sadd.s32 %s152, 1
    %p156 = scmp.eq.s32.totalorder %s13, 2
    %p157 = scmp.ne.s32.totalorder %s152, %s154
    %p158 = scmp.eq.s32.totalorder %s13, 0
    %p159 = por %p157, %p158
    %p160 = scmp.ne.s32.totalorder %s152, %s154
    %p161 = scmp.eq.s32.totalorder %s18, 2
    %p162 = por %p160, %p161
    %p163 = scmp.ne.s32.totalorder %s154, %s155
    %p164 = scmp.eq.s32.totalorder %s18, 0
    %p165 = por %p163, %p164
    %p166 = scmp.ne.s32.totalorder %s154, %s155
    %p167 = scmp.eq.s32.totalorder %s19, 2
    %p168 = por %p166, %p167
    %p170 = scmp.ne.s32.totalorder %s155, %s169
    %p171 = scmp.eq.s32.totalorder %s19, 0
    %p172 = por %p170, %p171
    %s173 = ssub.s32 %s13, %s20
    %p174 = scmp.eq.s32.totalorder %s173, 0
    %s176 = sadd.s32 %s175, 1
    %s177 = scalar_select %p174, %s175, %s176
    %p180 = pneg %p174
    %p181 = scmp.eq.s32.totalorder %s13, 2
    %p182 = por %p180, %p181
    %p183 = scmp.ne.s32.totalorder %s175, %s178
    %p184 = scmp.eq.s32.totalorder %s13, 0
    %p185 = por %p183, %p184
    %p186 = scmp.ne.s32.totalorder %s175, %s178
    %p187 = scmp.eq.s32.totalorder %s18, 2
    %p188 = por %p186, %p187
    %p189 = scmp.ne.s32.totalorder %s178, %s179
    %p190 = scmp.eq.s32.totalorder %s18, 0
    %p191 = por %p189, %p190
    %p192 = scmp.ne.s32.totalorder %s178, %s179
    %p193 = scmp.eq.s32.totalorder %s19, 2
    %p194 = por %p192, %p193
    %p196 = scmp.ne.s32.totalorder %s179, %s195
    %p197 = scmp.eq.s32.totalorder %s19, 0
    %p198 = por %p196, %p197
    %p199 = scmp.le.s32.totalorder 1, %s13
    %p200 = scmp.lt.s32.totalorder %s13, 4
    %p201 = pnand %p199, %p200
    %p202 = pneg %p201
    // Predicated region
    $region9: #{_lambda_.14} parent=5 // pred_check
      _
    $region10: #{_lambda_.14} parent=5 // pred_check_branch
      %204 = sbr.rel (%p201) target = $region12
    $region11: #{_lambda_.14} parent=5 // pred_region
      %s205 = ssub.s32 %s13, 1
      // Predicated region
      $region13: #{_lambda_.14} parent=11 // pred_check
        %p206 = pneg %p60
      $region14: #{_lambda_.14} parent=11 // pred_check_branch
        %208 = sbr.rel (%p206) target = $region16
      $region15: #{_lambda_.14} parent=11 // pred_region
        _
      $region16: #{_lambda_.14} parent=11 // pred_fallthru
        _
      // Predicated region
      $region17: #{_lambda_.14} parent=11 // pred_check
        %p209 = pneg %p81
      $region18: #{_lambda_.14} parent=11 // pred_check_branch
        %211 = sbr.rel (%p209) target = $region20
      $region19: #{_lambda_.14} parent=11 // pred_region
        _
      $region20: #{_lambda_.14} parent=11 // pred_fallthru
        _
      // Predicated region
      $region21: #{_lambda_.14} parent=11 // pred_check
        %p212 = pneg %p102
      $region22: #{_lambda_.14} parent=11 // pred_check_branch
        %214 = sbr.rel (%p212) target = $region24
      $region23: #{_lambda_.14} parent=11 // pred_region
        _
      $region24: #{_lambda_.14} parent=11 // pred_fallthru
        _
      // Predicated region
      $region25: #{_lambda_.14} parent=11 // pred_check
        %p215 = pneg %p123
      $region26: #{_lambda_.14} parent=11 // pred_check_branch
        %217 = sbr.rel (%p215) target = $region28
      $region27: #{_lambda_.14} parent=11 // pred_region
        _
      $region28: #{_lambda_.14} parent=11 // pred_fallthru
        _
      // Predicated region
      $region29: #{_lambda_.14} parent=11 // pred_check
        %p218 = pneg %p144
      $region30: #{_lambda_.14} parent=11 // pred_check_branch
        %220 = sbr.rel (%p218) target = $region32
      $region31: #{_lambda_.14} parent=11 // pred_region
        _
      $region32: #{_lambda_.14} parent=11 // pred_fallthru
        _
      // Predicated region
      $region33: #{_lambda_.14} parent=11 // pred_check
        %p221 = pneg %p165
      $region34: #{_lambda_.14} parent=11 // pred_check_branch
        %223 = sbr.rel (%p221) target = $region36
      $region35: #{_lambda_.14} parent=11 // pred_region
        _
      $region36: #{_lambda_.14} parent=11 // pred_fallthru
        _
    $region12: #{_lambda_.14} parent=5 // pred_fallthru
      _
    %p224 = scmp.lt.s32.totalorder %s13, 3
    // Predicated region
    $region37: #{_lambda_.14} parent=5 // pred_check
      %p225 = pneg %p224
    $region38: #{_lambda_.14} parent=5 // pred_check_branch
      %227 = sbr.rel (%p225) target = $region40
    $region39: #{_lambda_.14} parent=5 // pred_region
      // Predicated region
      $region41: #{_lambda_.14} parent=39 // pred_check
        %p228 = pneg %p33
      $region42: #{_lambda_.14} parent=39 // pred_check_branch
        %230 = sbr.rel (%p228) target = $region44
      $region43: #{_lambda_.14} parent=39 // pred_region
        %s231 = smul.u32 2, %s13
        %p232 = scmp.lt.s32.totalorder %s231, 5
        %s233 = scalar_select %p232, %s231, 5
        %s234 = smul.addr %s233, 8
        %s235 = scalar_lea.vmem %s0, %s234
        %s236 = smul.u32 2, %s13
      $region44: #{_lambda_.14} parent=39 // pred_fallthru
        _
    $region40: #{_lambda_.14} parent=5 // pred_fallthru
      _
    %p237 = scmp.le.s32.totalorder 1, %s13
    %p238 = scmp.lt.s32.totalorder %s13, 4
    %p239 = pnand %p237, %p238
    %p240 = pneg %p239
    // Predicated region
    $region45: #{_lambda_.14} parent=5 // pred_check
      _
    $region46: #{_lambda_.14} parent=5 // pred_check_branch
      %242 = sbr.rel (%p239) target = $region48
    $region47: #{_lambda_.14} parent=5 // pred_region
      %s243 = ssub.s32 %s13, 1
      %s244 = smul.u32 2, %s18
      %p245 = scmp.lt.s32.totalorder %s244, 5
      %s246 = scalar_select %p245, %s244, 5
      %s247 = smul.addr %s246, 8
      %s248 = scalar_lea.vmem %s0, %s247
      %p249 = pneg %p39
      %p250 = pneg %p36
      %p251 = pneg %p60
      %p252 = pneg %p57
      %p253 = pneg %p81
      %p254 = pneg %p78
      %p255 = pneg %p102
      %p256 = pneg %p99
      %p257 = pneg %p123
      %p258 = pneg %p120
      %p259 = pneg %p144
      %p260 = pneg %p141
      %p261 = pneg %p165
      %p262 = pneg %p162
      %p263 = pneg %p191
      %p264 = pneg %p188
      %s265 = smul.u32 2, %s18
      %p266 = scmp.lt.s32.totalorder %s265, 5
      %s267 = scalar_select %p266, %s265, 5
      %s268 = smul.addr %s267, 8
      %s269 = scalar_lea.vmem %s7, %s268
      %s270 = smul.u32 2, %s18
      %p271 = scmp.lt.s32.totalorder %s270, 5
      %s272 = scalar_select %p271, %s270, 5
      %s273 = smul.addr %s272, 8
      %s274 = scalar_lea.vmem %s0, %s273
      %s275 = smul.u32 2, %s18
      %s276 = smul.u32 2, %s18
      %p277 = scmp.lt.s32.totalorder %s276, 5
      %s278 = scalar_select %p277, %s276, 5
      %s279 = smul.addr %s278, 8
      %s280 = scalar_lea.vmem %s7, %s279
      %s281 = smul.u32 2, %s18
      %v283 = vld [vmem:[%s274] sm:$0xff]
      %v284 = vld [vmem:[%s274 + $0x8] sm:$0xff]
      %285 = vadd.xlane.f32.xlu0 %v283
      %v286 = vpop.xlane.xlu0 %285
      %287 = vadd.xlane.f32.xlu0 %v284
      %v288 = vpop.xlane.xlu0 %287
      %v289 = vrcp.pop 128.0
      %v290 = vmul.f32 %v286, %v289
      %v291 = vmul.f32 %v288, %v289
      %v292 = vsub.f32 %v283, %v290
      %v293 = vsub.f32 %v284, %v291
      %v294 = vmul.f32 %v292, %v292
      %v295 = vmul.f32 %v293, %v293
      %296 = vadd.xlane.f32.xlu0 %v294
      %v297 = vpop.xlane.xlu0 %296
      %298 = vadd.xlane.f32.xlu0 %v295
      %v299 = vpop.xlane.xlu0 %298
      %v300 = vmul.f32 %v297, %v289
      %v301 = vmul.f32 %v299, %v289
      %v302 = vadd.f32 %v300, 1e-12
      %v303 = vadd.f32 %v301, 1e-12
      %v304 = vrsqrt.pop %v302
      %v305 = vrsqrt.pop %v303
      %v306 = vmul.f32 %v292, %v304
      %v307 = vmul.f32 %v293, %v305
      %v308 = vld [vmem:[%s1] sm:$0x1]
      %v310 = vlaneseq
      %v311 = vshrl.u32 %v310, 7
      %v312 = vsub.s32 0, %v311
      %v313 = vrot.slane %v308, %v312
      %v315 = vmul.f32 %v306, %v313
      %v316 = vmul.f32 %v307, %v313
      %v317 = vld [vmem:[%s2] sm:$0x1]
      %v319 = vlaneseq
      %v320 = vshrl.u32 %v319, 7
      %v321 = vsub.s32 0, %v320
      %v322 = vrot.slane %v317, %v321
      %v324 = vadd.f32 %v315, %v322
      %v325 = vadd.f32 %v316, %v322
      %v326 = vpack.c.bf16 %v325, %v324
      %v327 = vld [vmem:[%s3] sm:$0xff]
      %v328 = vld [vmem:[%s3 + $0x8] sm:$0xff]
      %v329 = vld [vmem:[%s3 + $0x10] sm:$0xff]
      %v330 = vld [vmem:[%s3 + $0x18] sm:$0xff]
      %v331 = vld [vmem:[%s3 + $0x20] sm:$0xff]
      %v332 = vld [vmem:[%s3 + $0x28] sm:$0xff]
      %v333 = vld [vmem:[%s3 + $0x30] sm:$0xff]
      %v334 = vld [vmem:[%s3 + $0x38] sm:$0xff]
      %v335 = vld [vmem:[%s3 + $0x40] sm:$0xff]
      %v336 = vld [vmem:[%s3 + $0x48] sm:$0xff]
      %v337 = vld [vmem:[%s3 + $0x50] sm:$0xff]
      %v338 = vld [vmem:[%s3 + $0x58] sm:$0xff]
      %v339 = vld [vmem:[%s3 + $0x60] sm:$0xff]
      %v340 = vld [vmem:[%s3 + $0x68] sm:$0xff]
      %v341 = vld [vmem:[%s3 + $0x70] sm:$0xff]
      %v342 = vld [vmem:[%s3 + $0x78] sm:$0xff]
      %v343 = vld [vmem:[%s4] sm:$0x3]
      %v345 = vlaneseq
      %v346 = vshrl.u32 %v345, 7
      %v347 = vsub.s32 0, %v346
      %v348 = vrot.slane %v343, %v347
      %v349 = vlaneseq
      %v350 = vshrl.u32 %v349, 7
      %v351 = vsub.s32 1, %v350
      %v352 = vrot.slane %v343, %v351
      %v371 = vunpack.c.l.b16 %v327
      %v372 = vunpack.c.h.b16 %v327
      %v373 = vunpack.c.l.b16 %v328
      %v374 = vunpack.c.h.b16 %v328
      %v375 = vunpack.c.l.b16 %v329
      %v376 = vunpack.c.h.b16 %v329
      %v377 = vunpack.c.l.b16 %v330
      %v378 = vunpack.c.h.b16 %v330
      %v379 = vunpack.c.l.b16 %v331
      %v380 = vunpack.c.h.b16 %v331
      %v381 = vunpack.c.l.b16 %v332
      %v382 = vunpack.c.h.b16 %v332
      %v383 = vunpack.c.l.b16 %v333
      %v384 = vunpack.c.h.b16 %v333
      %v385 = vunpack.c.l.b16 %v334
      %v386 = vunpack.c.h.b16 %v334
      %v387 = vunpack.c.l.b16 %v335
      %v388 = vunpack.c.h.b16 %v335
      %v389 = vunpack.c.l.b16 %v336
      %v390 = vunpack.c.h.b16 %v336
      %v391 = vunpack.c.l.b16 %v337
      %v392 = vunpack.c.h.b16 %v337
      %v393 = vunpack.c.l.b16 %v338
      %v394 = vunpack.c.h.b16 %v338
      %v395 = vunpack.c.l.b16 %v339
      %v396 = vunpack.c.h.b16 %v339
      %v397 = vunpack.c.l.b16 %v340
      %v398 = vunpack.c.h.b16 %v340
      %v399 = vunpack.c.l.b16 %v341
      %v400 = vunpack.c.h.b16 %v341
      %v401 = vunpack.c.l.b16 %v342
      %v402 = vunpack.c.h.b16 %v342
      %v403 = vpack.c.b16 %v373, %v371
      %v404 = vpack.c.b16 %v374, %v372
      %v405 = vpack.c.b16 %v377, %v375
      %v406 = vpack.c.b16 %v378, %v376
      %v407 = vpack.c.b16 %v381, %v379
      %v408 = vpack.c.b16 %v382, %v380
      %v409 = vpack.c.b16 %v385, %v383
      %v410 = vpack.c.b16 %v386, %v384
      %v411 = vpack.c.b16 %v389, %v387
      %v412 = vpack.c.b16 %v390, %v388
      %v413 = vpack.c.b16 %v393, %v391
      %v414 = vpack.c.b16 %v394, %v392
      %v415 = vpack.c.b16 %v397, %v395
      %v416 = vpack.c.b16 %v398, %v396
      %v417 = vpack.c.b16 %v401, %v399
      %v418 = vpack.c.b16 %v402, %v400
      %435 = vmatprep.subr.bf16.mxu0 %v404
      %436 = vmatpush1.bf16.msra.mxu0 %v403
      %437 = vmatprep.subr.bf16.mxu0 %v406
      %438 = vmatpush1.bf16.msra.mxu0 %v405
      %439 = vmatprep.subr.bf16.mxu0 %v408
      %440 = vmatpush1.bf16.msra.mxu0 %v407
      %441 = vmatprep.subr.bf16.mxu0 %v410
      %442 = vmatpush1.bf16.msra.mxu0 %v409
      %443 = vmatprep.subr.bf16.mxu0 %v412
      %444 = vmatpush1.bf16.msra.mxu0 %v411
      %445 = vmatprep.subr.bf16.mxu0 %v414
      %446 = vmatpush1.bf16.msra.mxu0 %v413
      %447 = vmatprep.subr.bf16.mxu0 %v416
      %448 = vmatpush1.bf16.msra.mxu0 %v415
      %449 = vmatprep.subr.bf16.mxu0 %v418
      %450 = vmatpush1.bf16.msra.mxu0 %v417
      %451 = vmatprep.subr.bf16.mxu0 0
      %452 = vmatpush1.bf16.msra.mxu0 0
      %453 = vmatprep.subr.bf16.mxu0 0
      %454 = vmatpush1.bf16.msra.mxu0 0
      %455 = vmatprep.subr.bf16.mxu0 0
      %456 = vmatpush1.bf16.msra.mxu0 0
      %457 = vmatprep.subr.bf16.mxu0 0
      %458 = vmatpush1.bf16.msra.mxu0 0
      %459 = vmatprep.subr.bf16.mxu0 0
      %460 = vmatpush1.bf16.msra.mxu0 0
      %461 = vmatprep.subr.bf16.mxu0 0
      %462 = vmatpush1.bf16.msra.mxu0 0
      %463 = vmatprep.subr.bf16.mxu0 0
      %464 = vmatpush1.bf16.msra.mxu0 0
      %465 = vmatprep.subr.bf16.mxu0 0
      %466 = vmatpush1.bf16.msra.mxu0 0
      %467 = vmatprep.mubr.bf16.mxu0 0
      %468 = vmatmul.mubr.bf16.gmra.mrb[0].mxu0 %v326
      %v469 = vpop.f32.mrb[0].mxu0
      %v470 = vadd.f32 %v348, %v469
      %v471 = vpop.f32.mrb[0].mxu0
      %v472 = vadd.f32 %v352, %v471
      %v473 = vpop.f32.mrb[0].mxu0
      %v474 = vadd.f32 %v348, %v473
      %v475 = vpop.f32.mrb[0].mxu0
      %v476 = vadd.f32 %v352, %v475
      %477 = vdwg.mxu0
      %v478 = vmul.f32 %v470, %v470
      %v479 = vmul.f32 %v472, %v472
      %v480 = vmul.f32 %v474, %v474
      %v481 = vmul.f32 %v476, %v476
      %v482 = vmul.f32 %v470, %v478
      %v483 = vmul.f32 %v472, %v479
      %v484 = vmul.f32 %v474, %v480
      %v485 = vmul.f32 %v476, %v481
      %v486 = vmul.f32 %v482, 0.044715
      %v487 = vmul.f32 %v483, 0.044715
      %v488 = vmul.f32 %v484, 0.044715
      %v489 = vmul.f32 %v485, 0.044715
      %v490 = vadd.f32 %v470, %v486
      %v491 = vadd.f32 %v472, %v487
      %v492 = vadd.f32 %v474, %v488
      %v493 = vadd.f32 %v476, %v489
      %v494 = vmul.f32 %v490, 0.7978846
      %v495 = vmul.f32 %v491, 0.7978846
      %v496 = vmul.f32 %v492, 0.7978846
      %v497 = vmul.f32 %v493, 0.7978846
      %v498 = vtanh.pop %v494
      %v499 = vtanh.pop %v495
      %v500 = vtanh.pop %v496
      %v501 = vtanh.pop %v497
      %v502 = vadd.f32 %v498, 1.0
      %v503 = vadd.f32 %v499, 1.0
      %v504 = vadd.f32 %v500, 1.0
      %v505 = vadd.f32 %v501, 1.0
      %v506 = vmul.f32 %v502, 0.5
      %v507 = vmul.f32 %v503, 0.5
      %v508 = vmul.f32 %v504, 0.5
      %v509 = vmul.f32 %v505, 0.5
      %v510 = vmul.f32 %v470, %v506
      %v511 = vmul.f32 %v472, %v507
      %v512 = vmul.f32 %v474, %v508
      %v513 = vmul.f32 %v476, %v509
      %v514 = vpack.c.bf16 %v512, %v510
      %v515 = vpack.c.bf16 %v513, %v511
      %v516 = vld [vmem:[%s5] sm:$0xf]
      %v517 = vld [vmem:[%s5 + $0x4] sm:$0xf]
      %v518 = vld [vmem:[%s5 + $0x8] sm:$0xf]
      %v519 = vld [vmem:[%s5 + $0xc] sm:$0xf]
      %v520 = vld [vmem:[%s5 + $0x10] sm:$0xf]
      %v521 = vld [vmem:[%s5 + $0x14] sm:$0xf]
      %v522 = vld [vmem:[%s5 + $0x18] sm:$0xf]
      %v523 = vld [vmem:[%s5 + $0x1c] sm:$0xf]
      %v524 = vld [vmem:[%s5 + $0x20] sm:$0xf]
      %v525 = vld [vmem:[%s5 + $0x24] sm:$0xf]
      %v526 = vld [vmem:[%s5 + $0x28] sm:$0xf]
      %v527 = vld [vmem:[%s5 + $0x2c] sm:$0xf]
      %v528 = vld [vmem:[%s5 + $0x30] sm:$0xf]
      %v529 = vld [vmem:[%s5 + $0x34] sm:$0xf]
      %v530 = vld [vmem:[%s5 + $0x38] sm:$0xf]
      %v531 = vld [vmem:[%s5 + $0x3c] sm:$0xf]
      %v532 = vld [vmem:[%s5 + $0x40] sm:$0xf]
      %v533 = vld [vmem:[%s5 + $0x44] sm:$0xf]
      %v534 = vld [vmem:[%s5 + $0x48] sm:$0xf]
      %v535 = vld [vmem:[%s5 + $0x4c] sm:$0xf]
      %v536 = vld [vmem:[%s5 + $0x50] sm:$0xf]
      %v537 = vld [vmem:[%s5 + $0x54] sm:$0xf]
      %v538 = vld [vmem:[%s5 + $0x58] sm:$0xf]
      %v539 = vld [vmem:[%s5 + $0x5c] sm:$0xf]
      %v540 = vld [vmem:[%s5 + $0x60] sm:$0xf]
      %v541 = vld [vmem:[%s5 + $0x64] sm:$0xf]
      %v542 = vld [vmem:[%s5 + $0x68] sm:$0xf]
      %v543 = vld [vmem:[%s5 + $0x6c] sm:$0xf]
      %v544 = vld [vmem:[%s5 + $0x70] sm:$0xf]
      %v545 = vld [vmem:[%s5 + $0x74] sm:$0xf]
      %v546 = vld [vmem:[%s5 + $0x78] sm:$0xf]
      %v547 = vld [vmem:[%s5 + $0x7c] sm:$0xf]
      %v548 = vld [vmem:[%s6] sm:$0x1]
      %v550 = vlaneseq
      %v551 = vshrl.u32 %v550, 7
      %v552 = vsub.s32 0, %v551
      %v553 = vrot.slane %v548, %v552
      %v587 = vunpack.c.l.b16 %v516
      %v588 = vunpack.c.l.b16 %v517
      %v589 = vunpack.c.l.b16 %v518
      %v590 = vunpack.c.l.b16 %v519
      %v591 = vunpack.c.l.b16 %v520
      %v592 = vunpack.c.l.b16 %v521
      %v593 = vunpack.c.l.b16 %v522
      %v594 = vunpack.c.l.b16 %v523
      %v595 = vunpack.c.l.b16 %v524
      %v596 = vunpack.c.l.b16 %v525
      %v597 = vunpack.c.l.b16 %v526
      %v598 = vunpack.c.l.b16 %v527
      %v599 = vunpack.c.l.b16 %v528
      %v600 = vunpack.c.l.b16 %v529
      %v601 = vunpack.c.l.b16 %v530
      %v602 = vunpack.c.l.b16 %v531
      %v603 = vunpack.c.l.b16 %v532
      %v604 = vunpack.c.l.b16 %v533
      %v605 = vunpack.c.l.b16 %v534
      %v606 = vunpack.c.l.b16 %v535
      %v607 = vunpack.c.l.b16 %v536
      %v608 = vunpack.c.l.b16 %v537
      %v609 = vunpack.c.l.b16 %v538
      %v610 = vunpack.c.l.b16 %v539
      %v611 = vunpack.c.l.b16 %v540
      %v612 = vunpack.c.l.b16 %v541
      %v613 = vunpack.c.l.b16 %v542
      %v614 = vunpack.c.l.b16 %v543
      %v615 = vunpack.c.l.b16 %v544
      %v616 = vunpack.c.l.b16 %v545
      %v617 = vunpack.c.l.b16 %v546
      %v618 = vunpack.c.l.b16 %v547
      %v619 = vpack.c.b16 %v588, %v587
      %v620 = vpack.c.b16 %v590, %v589
      %v621 = vpack.c.b16 %v592, %v591
      %v622 = vpack.c.b16 %v594, %v593
      %v623 = vpack.c.b16 %v596, %v595
      %v624 = vpack.c.b16 %v598, %v597
      %v625 = vpack.c.b16 %v600, %v599
      %v626 = vpack.c.b16 %v602, %v601
      %v627 = vpack.c.b16 %v604, %v603
      %v628 = vpack.c.b16 %v606, %v605
      %v629 = vpack.c.b16 %v608, %v607
      %v630 = vpack.c.b16 %v610, %v609
      %v631 = vpack.c.b16 %v612, %v611
      %v632 = vpack.c.b16 %v614, %v613
      %v633 = vpack.c.b16 %v616, %v615
      %v634 = vpack.c.b16 %v618, %v617
      %651 = vmatprep.subr.bf16.mxu0 0
      %652 = vmatpush1.bf16.msra.mxu0 %v619
      %653 = vmatprep.subr.bf16.mxu0 0
      %654 = vmatpush1.bf16.msra.mxu0 %v620
      %655 = vmatprep.subr.bf16.mxu0 0
      %656 = vmatpush1.bf16.msra.mxu0 %v621
      %657 = vmatprep.subr.bf16.mxu0 0
      %658 = vmatpush1.bf16.msra.mxu0 %v622
      %659 = vmatprep.subr.bf16.mxu0 0
      %660 = vmatpush1.bf16.msra.mxu0 %v623
      %661 = vmatprep.subr.bf16.mxu0 0
      %662 = vmatpush1.bf16.msra.mxu0 %v624
      %663 = vmatprep.subr.bf16.mxu0 0
      %664 = vmatpush1.bf16.msra.mxu0 %v625
      %665 = vmatprep.subr.bf16.mxu0 0
      %666 = vmatpush1.bf16.msra.mxu0 %v626
      %667 = vmatprep.subr.bf16.mxu0 0
      %668 = vmatpush1.bf16.msra.mxu0 %v627
      %669 = vmatprep.subr.bf16.mxu0 0
      %670 = vmatpush1.bf16.msra.mxu0 %v628
      %671 = vmatprep.subr.bf16.mxu0 0
      %672 = vmatpush1.bf16.msra.mxu0 %v629
      %673 = vmatprep.subr.bf16.mxu0 0
      %674 = vmatpush1.bf16.msra.mxu0 %v630
      %675 = vmatprep.subr.bf16.mxu0 0
      %676 = vmatpush1.bf16.msra.mxu0 %v631
      %677 = vmatprep.subr.bf16.mxu0 0
      %678 = vmatpush1.bf16.msra.mxu0 %v632
      %679 = vmatprep.subr.bf16.mxu0 0
      %680 = vmatpush1.bf16.msra.mxu0 %v633
      %681 = vmatprep.subr.bf16.mxu0 0
      %682 = vmatpush1.bf16.msra.mxu0 %v634
      %683 = vmatprep.mubr.bf16.mxu0 %v515
      %684 = vmatmul.mubr.bf16.gmra.mrb[0].mxu0 %v514
      %v685 = vpop.f32.mrb[0].mxu0
      %v686 = vadd.f32 %v553, %v685
      %v687 = vpop.f32.mrb[0].mxu0
      %v688 = vpop.f32.mrb[0].mxu0
      %v689 = vadd.f32 %v553, %v688
      %v690 = vpop.f32.mrb[0].mxu0
      %691 = vdwg.mxu0
      %v692 = vadd.f32 %v283, %v686
      %v693 = vadd.f32 %v284, %v689
      %694 = vst [vmem:[%s280] sm:$0xff] %v692
      %695 = vst [vmem:[%s280 + $0x8] sm:$0xff] %v693
      %s696 = smul.u32 2, %s18
      %p697 = scmp.lt.s32.totalorder %s696, 5
      %s698 = scalar_select %p697, %s696, 5
      %s699 = smul.addr %s698, 8
      %s700 = scalar_lea.vmem %s7, %s699
      // Predicated region
      $region49: #{_lambda_.14} parent=47 // pred_check
        %p701 = pneg %p188
      $region50: #{_lambda_.14} parent=47 // pred_check_branch
        %703 = sbr.rel (%p701) target = $region52
      $region51: #{_lambda_.14} parent=47 // pred_region
        %s704 = smul.u32 2, %s18
      $region52: #{_lambda_.14} parent=47 // pred_fallthru
        _
    $region48: #{_lambda_.14} parent=5 // pred_fallthru
      _
    %p705 = scmp.le.s32.totalorder 2, %s13
    // Predicated region
    $region53: #{_lambda_.14} parent=5 // pred_check
      %p706 = pneg %p705
    $region54: #{_lambda_.14} parent=5 // pred_check_branch
      %708 = sbr.rel (%p706) target = $region56
    $region55: #{_lambda_.14} parent=5 // pred_region
      %s709 = ssub.s32 %s13, 2
      // Predicated region
      $region57: #{_lambda_.14} parent=55 // pred_check
        %p710 = pneg %p194
      $region58: #{_lambda_.14} parent=55 // pred_check_branch
        %712 = sbr.rel (%p710) target = $region60
      $region59: #{_lambda_.14} parent=55 // pred_region
        %s713 = smul.u32 2, %s19
        %p714 = scmp.lt.s32.totalorder %s713, 5
        %s715 = scalar_select %p714, %s713, 5
        %s716 = smul.addr %s715, 8
        %s717 = scalar_lea.vmem %s7, %s716
      $region60: #{_lambda_.14} parent=55 // pred_fallthru
        _
    $region56: #{_lambda_.14} parent=5 // pred_fallthru
      _
  $region6: #{_lambda_.14} parent=0 // loop_footer
    %s17 = sadd.s32 1, %s13
  $region7: #{_lambda_.14} parent=0 // loop_footer_branch
    %12 = sbr.rel target = $region3
  $region8: #{_lambda_.14} parent=0 // loop_exit
    _

// kernel: _lambda_.19
$region0: #{_lambda_.19}
  #allocation0 [shape = 'u32[]', space=smem, size = 0x4, offset = 0x4, fixed_abs, tag = 'smem constant byte address 0x4 - core index']
  #allocation1 [shape = 'u32[144,128]{1,0:T(1,128)}', space=vmem, size = 0x12000, scoped, tag = 'internal scratch']
  %s0 = inlined_call_operand.vmem [shape: f32[8,128], index: 0, kind: input, shape index: {}]
  %s1 = inlined_call_operand.vmem [shape: f32[1,128], index: 1, kind: input, shape index: {}]
  %s2 = inlined_call_operand.vmem [shape: f32[1,128], index: 2, kind: input, shape index: {}]
  %s3 = inlined_call_operand.vmem [shape: bf16[128,10], index: 3, kind: input, shape index: {}]
  %s4 = inlined_call_operand.vmem [shape: f32[1,10], index: 4, kind: input, shape index: {}]
  %s5 = inlined_call_operand.vmem [shape: f32[8,10], index: 5, kind: output, shape index: {}]
  %s6 = sld [smem:[#allocation0]]
  $region30: #{_lambda_.19} parent=0
    _
  %s8 = ssub.s32 1, %s6
  %s9 = scalar_select 0, %s8, %s6
  // Predicated region
  $region2: #{_lambda_.19} parent=0 // pred_check
    _
  $region3: #{_lambda_.19} parent=0 // pred_check_branch
    %11 = sbr.rel (0) target = $region5
  $region4: #{_lambda_.19} parent=0 // pred_region
    _
  $region5: #{_lambda_.19} parent=0 // pred_fallthru
    _
  // Predicated region
  $region6: #{_lambda_.19} parent=0 // pred_check
    _
  $region7: #{_lambda_.19} parent=0 // pred_check_branch
    %13 = sbr.rel (0) target = $region9
  $region8: #{_lambda_.19} parent=0 // pred_region
    _
  $region9: #{_lambda_.19} parent=0 // pred_fallthru
    _
  // Predicated region
  $region10: #{_lambda_.19} parent=0 // pred_check
    _
  $region11: #{_lambda_.19} parent=0 // pred_check_branch
    %15 = sbr.rel (0) target = $region13
  $region12: #{_lambda_.19} parent=0 // pred_region
    _
  $region13: #{_lambda_.19} parent=0 // pred_fallthru
    _
  // Predicated region
  $region14: #{_lambda_.19} parent=0 // pred_check
    _
  $region15: #{_lambda_.19} parent=0 // pred_check_branch
    %17 = sbr.rel (0) target = $region17
  $region16: #{_lambda_.19} parent=0 // pred_region
    _
  $region17: #{_lambda_.19} parent=0 // pred_fallthru
    _
  // Predicated region
  $region18: #{_lambda_.19} parent=0 // pred_check
    _
  $region19: #{_lambda_.19} parent=0 // pred_check_branch
    %19 = sbr.rel (0) target = $region21
  $region20: #{_lambda_.19} parent=0 // pred_region
    _
  $region21: #{_lambda_.19} parent=0 // pred_fallthru
    _
  %v21 = vld [vmem:[%s0] sm:$0xff]
  %22 = vadd.xlane.f32.xlu0 %v21
  %v23 = vpop.xlane.xlu0 %22
  %v24 = vrcp.pop 128.0
  %v25 = vmul.f32 %v23, %v24
  %v26 = vsub.f32 %v21, %v25
  %v27 = vmul.f32 %v26, %v26
  %28 = vadd.xlane.f32.xlu0 %v27
  %v29 = vpop.xlane.xlu0 %28
  %v30 = vmul.f32 %v29, %v24
  %v31 = vadd.f32 %v30, 1e-12
  %v32 = vrsqrt.pop %v31
  %v33 = vmul.f32 %v26, %v32
  %v34 = vld [vmem:[%s1] sm:$0x1]
  %v36 = vlaneseq
  %v37 = vshrl.u32 %v36, 7
  %v38 = vsub.s32 0, %v37
  %v39 = vrot.slane %v34, %v38
  %v41 = vmul.f32 %v33, %v39
  %v42 = vld [vmem:[%s2] sm:$0x1]
  %v44 = vlaneseq
  %v45 = vshrl.u32 %v44, 7
  %v46 = vsub.s32 0, %v45
  %v47 = vrot.slane %v42, %v46
  %v49 = vadd.f32 %v41, %v47
  %v50 = vpack.c.bf16 %v49, %v49
  %v51 = vld [vmem:[%s3] sm:$0xf]
  %v52 = vld [vmem:[%s3 + $0x4] sm:$0xf]
  %v53 = vld [vmem:[%s3 + $0x8] sm:$0xf]
  %v54 = vld [vmem:[%s3 + $0xc] sm:$0xf]
  %v55 = vld [vmem:[%s3 + $0x10] sm:$0xf]
  %v56 = vld [vmem:[%s3 + $0x14] sm:$0xf]
  %v57 = vld [vmem:[%s3 + $0x18] sm:$0xf]
  %v58 = vld [vmem:[%s3 + $0x1c] sm:$0xf]
  %v59 = vld [vmem:[%s3 + $0x20] sm:$0xf]
  %v60 = vld [vmem:[%s3 + $0x24] sm:$0xf]
  %v61 = vld [vmem:[%s3 + $0x28] sm:$0xf]
  %v62 = vld [vmem:[%s3 + $0x2c] sm:$0xf]
  %v63 = vld [vmem:[%s3 + $0x30] sm:$0xf]
  %v64 = vld [vmem:[%s3 + $0x34] sm:$0xf]
  %v65 = vld [vmem:[%s3 + $0x38] sm:$0xf]
  %v66 = vld [vmem:[%s3 + $0x3c] sm:$0xf]
  %v67 = vld [vmem:[%s4] sm:$0x1]
  %v69 = vlaneseq
  %v70 = vshrl.u32 %v69, 7
  %v71 = vsub.s32 0, %v70
  %v72 = vrot.slane %v67, %v71
  %v90 = vunpack.c.l.b16 %v51
  %v91 = vunpack.c.l.b16 %v52
  %v92 = vunpack.c.l.b16 %v53
  %v93 = vunpack.c.l.b16 %v54
  %v94 = vunpack.c.l.b16 %v55
  %v95 = vunpack.c.l.b16 %v56
  %v96 = vunpack.c.l.b16 %v57
  %v97 = vunpack.c.l.b16 %v58
  %v98 = vunpack.c.l.b16 %v59
  %v99 = vunpack.c.l.b16 %v60
  %v100 = vunpack.c.l.b16 %v61
  %v101 = vunpack.c.l.b16 %v62
  %v102 = vunpack.c.l.b16 %v63
  %v103 = vunpack.c.l.b16 %v64
  %v104 = vunpack.c.l.b16 %v65
  %v105 = vunpack.c.l.b16 %v66
  %v106 = vpack.c.b16 %v91, %v90
  %v107 = vpack.c.b16 %v93, %v92
  %v108 = vpack.c.b16 %v95, %v94
  %v109 = vpack.c.b16 %v97, %v96
  %v110 = vpack.c.b16 %v99, %v98
  %v111 = vpack.c.b16 %v101, %v100
  %v112 = vpack.c.b16 %v103, %v102
  %v113 = vpack.c.b16 %v105, %v104
  %122 = vmatprep.subr.bf16.mxu0 0
  %123 = vmatpush1.bf16.msra.mxu0 %v106
  %124 = vmatprep.subr.bf16.mxu0 0
  %125 = vmatpush1.bf16.msra.mxu0 %v107
  %126 = vmatprep.subr.bf16.mxu0 0
  %127 = vmatpush1.bf16.msra.mxu0 %v108
  %128 = vmatprep.subr.bf16.mxu0 0
  %129 = vmatpush1.bf16.msra.mxu0 %v109
  %130 = vmatprep.subr.bf16.mxu0 0
  %131 = vmatpush1.bf16.msra.mxu0 %v110
  %132 = vmatprep.subr.bf16.mxu0 0
  %133 = vmatpush1.bf16.msra.mxu0 %v111
  %134 = vmatprep.subr.bf16.mxu0 0
  %135 = vmatpush1.bf16.msra.mxu0 %v112
  %136 = vmatprep.subr.bf16.mxu0 0
  %137 = vmatpush1.bf16.msra.mxu0 %v113
  %138 = vmatprep.subr.bf16.mxu0 0
  %139 = vmatpush1.bf16.msra.mxu0 0
  %140 = vmatprep.subr.bf16.mxu0 0
  %141 = vmatpush1.bf16.msra.mxu0 0
  %142 = vmatprep.subr.bf16.mxu0 0
  %143 = vmatpush1.bf16.msra.mxu0 0
  %144 = vmatprep.subr.bf16.mxu0 0
  %145 = vmatpush1.bf16.msra.mxu0 0
  %146 = vmatprep.subr.bf16.mxu0 0
  %147 = vmatpush1.bf16.msra.mxu0 0
  %148 = vmatprep.subr.bf16.mxu0 0
  %149 = vmatpush1.bf16.msra.mxu0 0
  %150 = vmatprep.subr.bf16.mxu0 0
  %151 = vmatpush1.bf16.msra.mxu0 0
  %152 = vmatprep.subr.bf16.mxu0 0
  %153 = vmatpush1.bf16.msra.mxu0 0
  %154 = vmatprep.mubr.bf16.mxu0 0
  %155 = vmatmul.mubr.bf16.gmra.mrb[0].mxu0 %v50
  %v156 = vpop.f32.mrb[0].mxu0
  %v157 = vadd.f32 %v72, %v156
  %v158 = vpop.f32.mrb[0].mxu0
  %v159 = vpop.f32.mrb[0].mxu0
  %v160 = vpop.f32.mrb[0].mxu0
  %161 = vdwg.mxu0
  %vm162 = vcmask 80896
  %163 = vst.msk [vmem:[%s5] sm:$0xff] %vm162, %v157
  // Predicated region
  $region22: #{_lambda_.19} parent=0 // pred_check
    _
  $region23: #{_lambda_.19} parent=0 // pred_check_branch
    %165 = sbr.rel (0) target = $region25
  $region24: #{_lambda_.19} parent=0 // pred_region
    _
  $region25: #{_lambda_.19} parent=0 // pred_fallthru
    _
  // Predicated region
  $region26: #{_lambda_.19} parent=0 // pred_check
    _
  $region27: #{_lambda_.19} parent=0 // pred_check_branch
    %167 = sbr.rel (0) target = $region29
  $region28: #{_lambda_.19} parent=0 // pred_region
    _
  $region29: #{_lambda_.19} parent=0 // pred_fallthru
    _

</llo_original>
